<compile_context>
chip_gen: v5e
topology: v5e:2x2
jax: 0.10.0
libtpu: 0.0.40
codegen_flags: <defaults>
</compile_context>

<pallas_src>
import functools

import jax
import jax.numpy as jnp
from jax import lax
from jax.experimental import pallas as pl
from jax.experimental.pallas import tpu as pltpu

EPS = 1e-6


def _vmem_limit_bytes():
    # ~3/4 of physical VMEM, capped at 96 MiB (v5e/v6e: 128 MiB physical,
    # v7x: 64 MiB physical -> ~48 MiB).
    try:
        cap = int(pltpu.get_tpu_info().vmem_capacity_bytes)
    except Exception:
        cap = 64 * 1024 * 1024
    return int(min(cap * 3 // 4, 96 * 1024 * 1024))


def _erf(x):
    # Abramowitz & Stegun 7.1.26 rational erf (max abs err ~1.5e-7); the divide
    # goes to the EUP via approx reciprocal (free slot vs. the VALU).
    # TODO(synk): replace with lax.erf once a Mosaic lowering is guaranteed.
    a1, a2, a3, a4, a5 = 0.254829592, -0.284496736, 1.421413741, -1.453152027, 1.061405429
    p = 0.3275911
    ax = jnp.abs(x)
    t = pl.reciprocal(1.0 + p * ax, approx=True)
    poly = ((((a5 * t + a4) * t + a3) * t + a2) * t + a1) * t
    y = 1.0 - poly * jnp.exp(-ax * ax)
    return jnp.where(x >= 0, y, -y)


def _layernorm(x, w, b):
    mean = jnp.mean(x, axis=-1, keepdims=True)
    xc = x - mean
    var = jnp.mean(xc * xc, axis=-1, keepdims=True)
    return xc * lax.rsqrt(var + EPS) * w + b


def _pick_group_heads(num_heads, head_dim):
    """Smallest head-group size whose lane width (g*head_dim) is 128-aligned."""
    for g in range(1, num_heads + 1):
        if num_heads % g == 0 and (g * head_dim) % 128 == 0:
            return g
    return num_heads  # tiny dims: one group spanning the full C width


# ---------------------------------------------------------------------------
# Fused kernel (grid = (B,)):
#   z = y + FC2(GELU(FC1(LN2(y)))),  y = x + Proj(MHSA(LN1(x))) + b_proj
# ---------------------------------------------------------------------------
def _block_kernel(x_ref, ln1_w_ref, ln1_b_ref, wqkv_ref, wo_ref, bo_ref,
                  ln2_w_ref, ln2_b_ref, w1_ref, b1_ref, w2_ref, b2_ref,
                  z_ref, acc_ref, *, num_heads, scale, group_heads):
    xb = x_ref[0].astype(jnp.float32)                                # (N, C)
    N, C = xb.shape
    hd = C // num_heads
    gw = group_heads * hd
    n_groups = num_heads // group_heads

    # ---- LayerNorm1 (computed once) ----------------------------------------
    ln1 = _layernorm(xb, ln1_w_ref[0].astype(jnp.float32),
                     ln1_b_ref[0].astype(jnp.float32))
    ln1_bf = ln1.astype(jnp.bfloat16)

    # residual + projection bias folded into the accumulator init
    acc_ref[...] = xb + bo_ref[0].astype(jnp.float32)

    # ---- attention, one 128-lane-aligned head group per loop step ----------
    # TODO(synk): for N >= ~512 tokens switch to an online-softmax (flash) KV
    # loop and add a query-tile grid axis (also improves v7x 2-TC utilisation).
    @pl.loop(0, n_groups)
    def _(g):
        # (N, 3*gw) = [Q_g | K_g | V_g] for this head group (bf16 MXU matmul)
        qkv_g = jnp.dot(ln1_bf, wqkv_ref[g], preferred_element_type=jnp.float32)
        qkv_bf = qkv_g.astype(jnp.bfloat16)
        outs = []
        for j in range(group_heads):                  # tiny static inner loop
            q = qkv_bf[:, j * hd:(j + 1) * hd]
            k = qkv_bf[:, gw + j * hd: gw + (j + 1) * hd]
            v = qkv_bf[:, 2 * gw + j * hd: 2 * gw + (j + 1) * hd]
            s = lax.dot_general(q, k, (((1,), (1,)), ((), ())),
                                preferred_element_type=jnp.float32) * scale
            s = s - jnp.max(s, axis=-1, keepdims=True)
            p = jnp.exp(s)
            p = p * pl.reciprocal(jnp.sum(p, axis=-1, keepdims=True), approx=True)
            outs.append(jnp.dot(p.astype(jnp.bfloat16), v,
                                preferred_element_type=jnp.float32))  # (N, hd)
        og = (outs[0] if group_heads == 1
              else jnp.concatenate(outs, axis=-1)).astype(jnp.bfloat16)  # (N, gw)
        # group-wise output projection, accumulated into VMEM scratch
        acc_ref[...] += jnp.dot(og, wo_ref[g], preferred_element_type=jnp.float32)

    y = acc_ref[...]                                                  # (N, C) f32

    # ---- LayerNorm2 + MLP + residual (y never leaves VMEM) -----------------
    ln2 = _layernorm(y, ln2_w_ref[0].astype(jnp.float32),
                     ln2_b_ref[0].astype(jnp.float32))
    hid = jnp.dot(ln2.astype(jnp.bfloat16), w1_ref[...],
                  preferred_element_type=jnp.float32) + b1_ref[0].astype(jnp.float32)
    hid = 0.5 * hid * (1.0 + _erf(hid * 0.7071067811865476))          # exact-erf GELU
    out = jnp.dot(hid.astype(jnp.bfloat16), w2_ref[...],
                  preferred_element_type=jnp.float32) + b2_ref[0].astype(jnp.float32)
    z_ref[0] = (y + out).astype(z_ref.dtype)


# ---------------------------------------------------------------------------
# Wrapper
# ---------------------------------------------------------------------------
def block_forward(x, params, *, num_heads):
    B, N, C = x.shape
    hd = C // num_heads
    scale = hd ** -0.5
    Hdim = params["w1"].shape[1]
    group_heads = _pick_group_heads(num_heads, hd)
    gw = group_heads * hd
    n_groups = num_heads // group_heads

    # bf16 matmul weights; QKV / proj weights regrouped head-group-major on the
    # host so every in-kernel access is a leading-axis index (lane-aligned).
    wqkv_g = (params["wqkv"].reshape(C, 3, n_groups, gw)
              .transpose(2, 0, 1, 3).reshape(n_groups, C, 3 * gw)
              .astype(jnp.bfloat16))
    wo_g = params["wo"].reshape(n_groups, gw, C).astype(jnp.bfloat16)
    w1 = params["w1"].astype(jnp.bfloat16)
    w2 = params["w2"].astype(jnp.bfloat16)

    flops = 2 * B * N * (3 * C * C + 2 * N * C + C * C + 2 * C * Hdim)
    transcendentals = B * N * (num_heads * N + Hdim)
    bytes_accessed = (2 * x.size * x.dtype.itemsize
                      + 2 * (wqkv_g.size + wo_g.size + w1.size + w2.size)
                      + 4 * (4 * C + Hdim + C))
    cost = pl.CostEstimate(flops=flops, transcendentals=transcendentals,
                           bytes_accessed=bytes_accessed)

    kernel = functools.partial(_block_kernel, num_heads=num_heads, scale=scale,
                               group_heads=group_heads)

    def build(single_buffer_weights):
        wmode = pl.Buffered(1) if single_buffer_weights else None

        def wspec(shape):
            zeros = (0,) * len(shape)
            return pl.BlockSpec(shape, lambda b: zeros, pipeline_mode=wmode)

        return pl.pallas_call(
            kernel,
            out_shape=jax.ShapeDtypeStruct((B, N, C), x.dtype),
            grid_spec=pltpu.PrefetchScalarGridSpec(
                num_scalar_prefetch=0,
                grid=(B,),
                in_specs=[
                    pl.BlockSpec((1, N, C), lambda b: (b, 0, 0)),   # x (any float dtype)
                    wspec((1, C)),                                  # ln1 weight
                    wspec((1, C)),                                  # ln1 bias
                    wspec((n_groups, C, 3 * gw)),                   # grouped Wqkv (bf16)
                    wspec((n_groups, gw, C)),                       # grouped Wproj (bf16)
                    wspec((1, C)),                                  # proj bias
                    wspec((1, C)),                                  # ln2 weight
                    wspec((1, C)),                                  # ln2 bias
                    wspec((C, Hdim)),                               # fc1 weight (bf16)
                    wspec((1, Hdim)),                               # fc1 bias
                    wspec((Hdim, C)),                               # fc2 weight (bf16)
                    wspec((1, C)),                                  # fc2 bias
                ],
                out_specs=pl.BlockSpec((1, N, C), lambda b: (b, 0, 0)),
                scratch_shapes=[pltpu.VMEM((N, C), jnp.float32)],   # proj accumulator
            ),
            compiler_params=pltpu.CompilerParams(
                dimension_semantics=("parallel",),
                vmem_limit_bytes=_vmem_limit_bytes()),
            cost_estimate=cost,
        )

    args = (x, params["ln1_w"], params["ln1_b"], wqkv_g, wo_g, params["bo"],
            params["ln2_w"], params["ln2_b"], w1, params["b1"], w2, params["b2"])
    try:
        # Single-buffer the grid-invariant weights (halves weight VMEM residency).
        return build(True)(*args)
    except Exception:
        # TODO(synk): drop this fallback once pl.Buffered(1) for grid-invariant
        # inputs is guaranteed on all deployed jax versions.
        return build(False)(*args)


# ---------------------------------------------------------------------------
# Pure-JAX reference (f32)
# ---------------------------------------------------------------------------
def block_reference(x, params, *, num_heads):
    B, N, C = x.shape
    hd = C // num_heads
    scale = hd ** -0.5

    ln1 = _layernorm(x, params["ln1_w"][0], params["ln1_b"][0])
    qkv = ln1 @ params["wqkv"]                       # (B, N, 3C)
    qkv = qkv.reshape(B, N, 3, num_heads, hd)
    q = qkv[:, :, 0].transpose(0, 2, 1, 3)           # (B, H, N, hd)
    k = qkv[:, :, 1].transpose(0, 2, 1, 3)
    v = qkv[:, :, 2].transpose(0, 2, 1, 3)
    s = jnp.einsum("bhqd,bhkd->bhqk", q, k) * scale
    p = jax.nn.softmax(s, axis=-1)
    o = jnp.einsum("bhqk,bhkd->bhqd", p, v)
    o = o.transpose(0, 2, 1, 3).reshape(B, N, C)
    attn_out = o @ params["wo"] + params["bo"][0]
    y = x + attn_out

    ln2 = _layernorm(y, params["ln2_w"][0], params["ln2_b"][0])
    hid = ln2 @ params["w1"] + params["b1"][0]
    hid = jax.nn.gelu(hid, approximate=False)
    z = y + (hid @ params["w2"] + params["b2"][0])
    return z


def make_params(key, dim, num_heads, hidden_dim):
    ks = jax.random.split(key, 12)
    n = lambda k, s, sc=0.02: jax.random.normal(k, s, jnp.float32) * sc
    return {
        "ln1_w": 1.0 + n(ks[0], (1, dim)),
        "ln1_b": n(ks[1], (1, dim)),
        # fused QKV laid out for x @ W: columns = [Q_allheads | K_allheads | V_allheads],
        # each head occupying hd consecutive columns (matches PyTorch reshape order).
        "wqkv": n(ks[2], (dim, 3 * dim)),
        "wo": n(ks[3], (dim, dim)),                  # (C_in ordered (H, hd), C_out)
        "bo": n(ks[4], (1, dim)),
        "ln2_w": 1.0 + n(ks[5], (1, dim)),
        "ln2_b": n(ks[6], (1, dim)),
        "w1": n(ks[7], (dim, hidden_dim)),
        "b1": n(ks[8], (1, hidden_dim)),
        "w2": n(ks[9], (hidden_dim, dim)),
        "b2": n(ks[10], (1, dim)),
    }


if __name__ == "__main__":
    B, N, DIM, HEADS, MLP_RATIO = 2, 8, 32, 8, 4.0
    HIDDEN = int(DIM * MLP_RATIO)

    key = jax.random.PRNGKey(0)
    kx, kp = jax.random.split(key)
    x = jax.random.normal(kx, (B, N, DIM), jnp.float32)
    params = make_params(kp, DIM, HEADS, HIDDEN)

    out = block_forward(x, params, num_heads=HEADS)
    out = jax.block_until_ready(out)

    ref = block_reference(x, params, num_heads=HEADS)
    assert out.shape == (B, N, DIM)
    # bf16 matmul operands (f32 accumulation) + approx reciprocal / erf.
    assert jnp.allclose(out, ref, rtol=5e-3, atol=5e-3), "mismatch vs reference"

    print("KERNEL_OK")
</pallas_src>

<mosaic_0001>
module attributes {stable_mosaic.version = 11 : i64} {
  func.func @_block_kernel(%arg0: i32, %arg1: memref<1x8x32xf32, #tpu.memory_space<vmem>>, %arg2: memref<1x32xf32, #tpu.memory_space<vmem>>, %arg3: memref<1x32xf32, #tpu.memory_space<vmem>>, %arg4: memref<1x32x96xbf16, #tpu.memory_space<vmem>>, %arg5: memref<1x32x32xbf16, #tpu.memory_space<vmem>>, %arg6: memref<1x32xf32, #tpu.memory_space<vmem>>, %arg7: memref<1x32xf32, #tpu.memory_space<vmem>>, %arg8: memref<1x32xf32, #tpu.memory_space<vmem>>, %arg9: memref<32x128xbf16, #tpu.memory_space<vmem>>, %arg10: memref<1x128xf32, #tpu.memory_space<vmem>>, %arg11: memref<128x32xbf16, #tpu.memory_space<vmem>>, %arg12: memref<1x32xf32, #tpu.memory_space<vmem>>, %arg13: memref<1x8x32xf32, #tpu.memory_space<vmem>>, %arg14: memref<8x32xf32, #tpu.memory_space<vmem>>) attributes {dimension_semantics = [#tpu.dimension_semantics<parallel>], iteration_bounds = array<i64: 2>, scalar_prefetch = 0 : i64, scratch_operands = 1 : i64, tpu.core_type = #tpu.core_type<tc>, window_params = [{transform_indices = @transform_0, window_bounds = array<i64: 1, 8, 32>}, {pipeline_mode = #tpu.pipeline_mode<synchronous>, transform_indices = @transform_1, window_bounds = array<i64: 1, 32>}, {pipeline_mode = #tpu.pipeline_mode<synchronous>, transform_indices = @transform_2, window_bounds = array<i64: 1, 32>}, {pipeline_mode = #tpu.pipeline_mode<synchronous>, transform_indices = @transform_3, window_bounds = array<i64: 1, 32, 96>}, {pipeline_mode = #tpu.pipeline_mode<synchronous>, transform_indices = @transform_4, window_bounds = array<i64: 1, 32, 32>}, {pipeline_mode = #tpu.pipeline_mode<synchronous>, transform_indices = @transform_5, window_bounds = array<i64: 1, 32>}, {pipeline_mode = #tpu.pipeline_mode<synchronous>, transform_indices = @transform_6, window_bounds = array<i64: 1, 32>}, {pipeline_mode = #tpu.pipeline_mode<synchronous>, transform_indices = @transform_7, window_bounds = array<i64: 1, 32>}, {pipeline_mode = #tpu.pipeline_mode<synchronous>, transform_indices = @transform_8, window_bounds = array<i64: 32, 128>}, {pipeline_mode = #tpu.pipeline_mode<synchronous>, transform_indices = @transform_9, window_bounds = array<i64: 1, 128>}, {pipeline_mode = #tpu.pipeline_mode<synchronous>, transform_indices = @transform_10, window_bounds = array<i64: 128, 32>}, {pipeline_mode = #tpu.pipeline_mode<synchronous>, transform_indices = @transform_11, window_bounds = array<i64: 1, 32>}, {transform_indices = @transform_12, window_bounds = array<i64: 1, 8, 32>}]} {
    %c0 = arith.constant 0 : index
    %c0_0 = arith.constant 0 : index
    %c0_1 = arith.constant 0 : index
    %0 = vector.load %arg1[%c0, %c0_0, %c0_1] : memref<1x8x32xf32, #tpu.memory_space<vmem>>, vector<1x8x32xf32>
    %1 = vector.shape_cast %0 : vector<1x8x32xf32> to vector<8x32xf32>
    %c0_2 = arith.constant 0 : index
    %c0_3 = arith.constant 0 : index
    %2 = vector.load %arg2[%c0_2, %c0_3] : memref<1x32xf32, #tpu.memory_space<vmem>>, vector<1x32xf32>
    %3 = vector.shape_cast %2 : vector<1x32xf32> to vector<32xf32>
    %c0_4 = arith.constant 0 : index
    %c0_5 = arith.constant 0 : index
    %4 = vector.load %arg3[%c0_4, %c0_5] : memref<1x32xf32, #tpu.memory_space<vmem>>, vector<1x32xf32>
    %5 = vector.shape_cast %4 : vector<1x32xf32> to vector<32xf32>
    %cst = arith.constant dense<0.000000e+00> : vector<8xf32>
    %6 = vector.multi_reduction <add>, %1, %cst [1] : vector<8x32xf32> to vector<8xf32>
    %7 = vector.shape_cast %6 : vector<8xf32> to vector<8x1xf32>
    %cst_6 = arith.constant 3.200000e+01 : f32
    %8 = vector.broadcast %cst_6 : f32 to vector<8x1xf32>
    %9 = arith.divf %7, %8 : vector<8x1xf32>
    %10 = vector.broadcast %9 : vector<8x1xf32> to vector<8x32xf32>
    %11 = arith.subf %1, %10 : vector<8x32xf32>
    %12 = arith.mulf %11, %11 : vector<8x32xf32>
    %cst_7 = arith.constant dense<0.000000e+00> : vector<8xf32>
    %13 = vector.multi_reduction <add>, %12, %cst_7 [1] : vector<8x32xf32> to vector<8xf32>
    %14 = vector.shape_cast %13 : vector<8xf32> to vector<8x1xf32>
    %cst_8 = arith.constant 3.200000e+01 : f32
    %15 = vector.broadcast %cst_8 : f32 to vector<8x1xf32>
    %16 = arith.divf %14, %15 : vector<8x1xf32>
    %cst_9 = arith.constant 9.99999997E-7 : f32
    %17 = vector.broadcast %cst_9 : f32 to vector<8x1xf32>
    %18 = arith.addf %16, %17 : vector<8x1xf32>
    %19 = math.rsqrt %18 : vector<8x1xf32>
    %20 = vector.broadcast %19 : vector<8x1xf32> to vector<8x32xf32>
    %21 = arith.mulf %11, %20 : vector<8x32xf32>
    %22 = vector.shape_cast %3 : vector<32xf32> to vector<1x32xf32>
    %23 = vector.broadcast %22 : vector<1x32xf32> to vector<8x32xf32>
    %24 = arith.mulf %21, %23 : vector<8x32xf32>
    %25 = vector.shape_cast %5 : vector<32xf32> to vector<1x32xf32>
    %26 = vector.broadcast %25 : vector<1x32xf32> to vector<8x32xf32>
    %27 = arith.addf %24, %26 : vector<8x32xf32>
    %28 = arith.truncf %27 : vector<8x32xf32> to vector<8x32xbf16>
    %c0_10 = arith.constant 0 : index
    %c0_11 = arith.constant 0 : index
    %29 = vector.load %arg6[%c0_10, %c0_11] : memref<1x32xf32, #tpu.memory_space<vmem>>, vector<1x32xf32>
    %30 = vector.shape_cast %29 : vector<1x32xf32> to vector<32xf32>
    %31 = vector.shape_cast %30 : vector<32xf32> to vector<1x32xf32>
    %32 = vector.broadcast %31 : vector<1x32xf32> to vector<8x32xf32>
    %33 = arith.addf %1, %32 : vector<8x32xf32>
    %c0_12 = arith.constant 0 : index
    %c0_13 = arith.constant 0 : index
    %34 = vector.load %arg14[%c0_12, %c0_13] : memref<8x32xf32, #tpu.memory_space<vmem>>, vector<8x32xf32>
    tpu.vector_store %arg14[%c0_12, %c0_13], %33 {strides = array<i32>} : memref<8x32xf32, #tpu.memory_space<vmem>>, vector<8x32xf32>,
    %c0_i32 = arith.constant 0 : i32
    %c1_i32 = arith.constant 1 : i32
    %35 = arith.muli %c0_i32, %c1_i32 : i32
    %c0_i32_14 = arith.constant 0 : i32
    %36 = arith.addi %c0_i32_14, %35 : i32
    %37 = arith.index_cast %36 : i32 to index
    %c0_15 = arith.constant 0 : index
    %c0_16 = arith.constant 0 : index
    %38 = vector.load %arg4[%37, %c0_15, %c0_16] : memref<1x32x96xbf16, #tpu.memory_space<vmem>>, vector<1x32x96xbf16>
    %39 = vector.shape_cast %38 : vector<1x32x96xbf16> to vector<32x96xbf16>
    %cst_17 = arith.constant dense<0.000000e+00> : vector<8x96xf32>
    %40 = tpu.matmul %28, %39, %cst_17 {dimension_numbers = #tpu.dot_dimension_numbers<[1], [0], [0], [1], [0, 0, 1, 1], [], []>} : vector<8x32xbf16>, vector<32x96xbf16>, vector<8x96xf32> -> vector<8x96xf32>
    %41 = arith.truncf %40 : vector<8x96xf32> to vector<8x96xbf16>
    %42 = vector.extract_strided_slice %41 {offsets = [0, 0], sizes = [8, 4], strides = [1, 1]} : vector<8x96xbf16> to vector<8x4xbf16>
    %43 = vector.extract_strided_slice %41 {offsets = [0, 32], sizes = [8, 4], strides = [1, 1]} : vector<8x96xbf16> to vector<8x4xbf16>
    %44 = vector.extract_strided_slice %41 {offsets = [0, 64], sizes = [8, 4], strides = [1, 1]} : vector<8x96xbf16> to vector<8x4xbf16>
    %cst_18 = arith.constant dense<0.000000e+00> : vector<8x8xf32>
    %45 = tpu.matmul %42, %43, %cst_18 {dimension_numbers = #tpu.dot_dimension_numbers<[1], [1], [0], [0], [0, 0, 1, 0], [], []>} : vector<8x4xbf16>, vector<8x4xbf16>, vector<8x8xf32> -> vector<8x8xf32>
    %cst_19 = arith.constant 5.000000e-01 : f32
    %46 = vector.broadcast %cst_19 : f32 to vector<8x8xf32>
    %47 = arith.mulf %45, %46 : vector<8x8xf32>
    %cst_20 = arith.constant dense<0xFF800000> : vector<8xf32>
    %48 = vector.multi_reduction <maximumf>, %47, %cst_20 [1] : vector<8x8xf32> to vector<8xf32>
    %49 = vector.shape_cast %48 : vector<8xf32> to vector<8x1xf32>
    %50 = vector.broadcast %49 : vector<8x1xf32> to vector<8x8xf32>
    %51 = arith.subf %47, %50 : vector<8x8xf32>
    %52 = math.exp %51 : vector<8x8xf32>
    %cst_21 = arith.constant dense<0.000000e+00> : vector<8xf32>
    %53 = vector.multi_reduction <add>, %52, %cst_21 [1] : vector<8x8xf32> to vector<8xf32>
    %54 = vector.shape_cast %53 : vector<8xf32> to vector<8x1xf32>
    %55 = tpu.reciprocal %54 {approx = true} : vector<8x1xf32> -> vector<8x1xf32>
    %56 = vector.broadcast %55 : vector<8x1xf32> to vector<8x8xf32>
    %57 = arith.mulf %52, %56 : vector<8x8xf32>
    %58 = arith.truncf %57 : vector<8x8xf32> to vector<8x8xbf16>
    %cst_22 = arith.constant dense<0.000000e+00> : vector<8x4xf32>
    %59 = tpu.matmul %58, %44, %cst_22 {dimension_numbers = #tpu.dot_dimension_numbers<[1], [0], [0], [1], [0, 0, 1, 1], [], []>} : vector<8x8xbf16>, vector<8x4xbf16>, vector<8x4xf32> -> vector<8x4xf32>
    %60 = vector.extract_strided_slice %41 {offsets = [0, 4], sizes = [8, 4], strides = [1, 1]} : vector<8x96xbf16> to vector<8x4xbf16>
    %61 = vector.extract_strided_slice %41 {offsets = [0, 36], sizes = [8, 4], strides = [1, 1]} : vector<8x96xbf16> to vector<8x4xbf16>
    %62 = vector.extract_strided_slice %41 {offsets = [0, 68], sizes = [8, 4], strides = [1, 1]} : vector<8x96xbf16> to vector<8x4xbf16>
    %cst_23 = arith.constant dense<0.000000e+00> : vector<8x8xf32>
    %63 = tpu.matmul %60, %61, %cst_23 {dimension_numbers = #tpu.dot_dimension_numbers<[1], [1], [0], [0], [0, 0, 1, 0], [], []>} : vector<8x4xbf16>, vector<8x4xbf16>, vector<8x8xf32> -> vector<8x8xf32>
    %cst_24 = arith.constant 5.000000e-01 : f32
    %64 = vector.broadcast %cst_24 : f32 to vector<8x8xf32>
    %65 = arith.mulf %63, %64 : vector<8x8xf32>
    %cst_25 = arith.constant dense<0xFF800000> : vector<8xf32>
    %66 = vector.multi_reduction <maximumf>, %65, %cst_25 [1] : vector<8x8xf32> to vector<8xf32>
    %67 = vector.shape_cast %66 : vector<8xf32> to vector<8x1xf32>
    %68 = vector.broadcast %67 : vector<8x1xf32> to vector<8x8xf32>
    %69 = arith.subf %65, %68 : vector<8x8xf32>
    %70 = math.exp %69 : vector<8x8xf32>
    %cst_26 = arith.constant dense<0.000000e+00> : vector<8xf32>
    %71 = vector.multi_reduction <add>, %70, %cst_26 [1] : vector<8x8xf32> to vector<8xf32>
    %72 = vector.shape_cast %71 : vector<8xf32> to vector<8x1xf32>
    %73 = tpu.reciprocal %72 {approx = true} : vector<8x1xf32> -> vector<8x1xf32>
    %74 = vector.broadcast %73 : vector<8x1xf32> to vector<8x8xf32>
    %75 = arith.mulf %70, %74 : vector<8x8xf32>
    %76 = arith.truncf %75 : vector<8x8xf32> to vector<8x8xbf16>
    %cst_27 = arith.constant dense<0.000000e+00> : vector<8x4xf32>
    %77 = tpu.matmul %76, %62, %cst_27 {dimension_numbers = #tpu.dot_dimension_numbers<[1], [0], [0], [1], [0, 0, 1, 1], [], []>} : vector<8x8xbf16>, vector<8x4xbf16>, vector<8x4xf32> -> vector<8x4xf32>
    %78 = vector.extract_strided_slice %41 {offsets = [0, 8], sizes = [8, 4], strides = [1, 1]} : vector<8x96xbf16> to vector<8x4xbf16>
    %79 = vector.extract_strided_slice %41 {offsets = [0, 40], sizes = [8, 4], strides = [1, 1]} : vector<8x96xbf16> to vector<8x4xbf16>
    %80 = vector.extract_strided_slice %41 {offsets = [0, 72], sizes = [8, 4], strides = [1, 1]} : vector<8x96xbf16> to vector<8x4xbf16>
    %cst_28 = arith.constant dense<0.000000e+00> : vector<8x8xf32>
    %81 = tpu.matmul %78, %79, %cst_28 {dimension_numbers = #tpu.dot_dimension_numbers<[1], [1], [0], [0], [0, 0, 1, 0], [], []>} : vector<8x4xbf16>, vector<8x4xbf16>, vector<8x8xf32> -> vector<8x8xf32>
    %cst_29 = arith.constant 5.000000e-01 : f32
    %82 = vector.broadcast %cst_29 : f32 to vector<8x8xf32>
    %83 = arith.mulf %81, %82 : vector<8x8xf32>
    %cst_30 = arith.constant dense<0xFF800000> : vector<8xf32>
    %84 = vector.multi_reduction <maximumf>, %83, %cst_30 [1] : vector<8x8xf32> to vector<8xf32>
    %85 = vector.shape_cast %84 : vector<8xf32> to vector<8x1xf32>
    %86 = vector.broadcast %85 : vector<8x1xf32> to vector<8x8xf32>
    %87 = arith.subf %83, %86 : vector<8x8xf32>
    %88 = math.exp %87 : vector<8x8xf32>
    %cst_31 = arith.constant dense<0.000000e+00> : vector<8xf32>
    %89 = vector.multi_reduction <add>, %88, %cst_31 [1] : vector<8x8xf32> to vector<8xf32>
    %90 = vector.shape_cast %89 : vector<8xf32> to vector<8x1xf32>
    %91 = tpu.reciprocal %90 {approx = true} : vector<8x1xf32> -> vector<8x1xf32>
    %92 = vector.broadcast %91 : vector<8x1xf32> to vector<8x8xf32>
    %93 = arith.mulf %88, %92 : vector<8x8xf32>
    %94 = arith.truncf %93 : vector<8x8xf32> to vector<8x8xbf16>
    %cst_32 = arith.constant dense<0.000000e+00> : vector<8x4xf32>
    %95 = tpu.matmul %94, %80, %cst_32 {dimension_numbers = #tpu.dot_dimension_numbers<[1], [0], [0], [1], [0, 0, 1, 1], [], []>} : vector<8x8xbf16>, vector<8x4xbf16>, vector<8x4xf32> -> vector<8x4xf32>
    %96 = vector.extract_strided_slice %41 {offsets = [0, 12], sizes = [8, 4], strides = [1, 1]} : vector<8x96xbf16> to vector<8x4xbf16>
    %97 = vector.extract_strided_slice %41 {offsets = [0, 44], sizes = [8, 4], strides = [1, 1]} : vector<8x96xbf16> to vector<8x4xbf16>
    %98 = vector.extract_strided_slice %41 {offsets = [0, 76], sizes = [8, 4], strides = [1, 1]} : vector<8x96xbf16> to vector<8x4xbf16>
    %cst_33 = arith.constant dense<0.000000e+00> : vector<8x8xf32>
    %99 = tpu.matmul %96, %97, %cst_33 {dimension_numbers = #tpu.dot_dimension_numbers<[1], [1], [0], [0], [0, 0, 1, 0], [], []>} : vector<8x4xbf16>, vector<8x4xbf16>, vector<8x8xf32> -> vector<8x8xf32>
    %cst_34 = arith.constant 5.000000e-01 : f32
    %100 = vector.broadcast %cst_34 : f32 to vector<8x8xf32>
    %101 = arith.mulf %99, %100 : vector<8x8xf32>
    %cst_35 = arith.constant dense<0xFF800000> : vector<8xf32>
    %102 = vector.multi_reduction <maximumf>, %101, %cst_35 [1] : vector<8x8xf32> to vector<8xf32>
    %103 = vector.shape_cast %102 : vector<8xf32> to vector<8x1xf32>
    %104 = vector.broadcast %103 : vector<8x1xf32> to vector<8x8xf32>
    %105 = arith.subf %101, %104 : vector<8x8xf32>
    %106 = math.exp %105 : vector<8x8xf32>
    %cst_36 = arith.constant dense<0.000000e+00> : vector<8xf32>
    %107 = vector.multi_reduction <add>, %106, %cst_36 [1] : vector<8x8xf32> to vector<8xf32>
    %108 = vector.shape_cast %107 : vector<8xf32> to vector<8x1xf32>
    %109 = tpu.reciprocal %108 {approx = true} : vector<8x1xf32> -> vector<8x1xf32>
    %110 = vector.broadcast %109 : vector<8x1xf32> to vector<8x8xf32>
    %111 = arith.mulf %106, %110 : vector<8x8xf32>
    %112 = arith.truncf %111 : vector<8x8xf32> to vector<8x8xbf16>
    %cst_37 = arith.constant dense<0.000000e+00> : vector<8x4xf32>
    %113 = tpu.matmul %112, %98, %cst_37 {dimension_numbers = #tpu.dot_dimension_numbers<[1], [0], [0], [1], [0, 0, 1, 1], [], []>} : vector<8x8xbf16>, vector<8x4xbf16>, vector<8x4xf32> -> vector<8x4xf32>
    %114 = vector.extract_strided_slice %41 {offsets = [0, 16], sizes = [8, 4], strides = [1, 1]} : vector<8x96xbf16> to vector<8x4xbf16>
    %115 = vector.extract_strided_slice %41 {offsets = [0, 48], sizes = [8, 4], strides = [1, 1]} : vector<8x96xbf16> to vector<8x4xbf16>
    %116 = vector.extract_strided_slice %41 {offsets = [0, 80], sizes = [8, 4], strides = [1, 1]} : vector<8x96xbf16> to vector<8x4xbf16>
    %cst_38 = arith.constant dense<0.000000e+00> : vector<8x8xf32>
    %117 = tpu.matmul %114, %115, %cst_38 {dimension_numbers = #tpu.dot_dimension_numbers<[1], [1], [0], [0], [0, 0, 1, 0], [], []>} : vector<8x4xbf16>, vector<8x4xbf16>, vector<8x8xf32> -> vector<8x8xf32>
    %cst_39 = arith.constant 5.000000e-01 : f32
    %118 = vector.broadcast %cst_39 : f32 to vector<8x8xf32>
    %119 = arith.mulf %117, %118 : vector<8x8xf32>
    %cst_40 = arith.constant dense<0xFF800000> : vector<8xf32>
    %120 = vector.multi_reduction <maximumf>, %119, %cst_40 [1] : vector<8x8xf32> to vector<8xf32>
    %121 = vector.shape_cast %120 : vector<8xf32> to vector<8x1xf32>
    %122 = vector.broadcast %121 : vector<8x1xf32> to vector<8x8xf32>
    %123 = arith.subf %119, %122 : vector<8x8xf32>
    %124 = math.exp %123 : vector<8x8xf32>
    %cst_41 = arith.constant dense<0.000000e+00> : vector<8xf32>
    %125 = vector.multi_reduction <add>, %124, %cst_41 [1] : vector<8x8xf32> to vector<8xf32>
    %126 = vector.shape_cast %125 : vector<8xf32> to vector<8x1xf32>
    %127 = tpu.reciprocal %126 {approx = true} : vector<8x1xf32> -> vector<8x1xf32>
    %128 = vector.broadcast %127 : vector<8x1xf32> to vector<8x8xf32>
    %129 = arith.mulf %124, %128 : vector<8x8xf32>
    %130 = arith.truncf %129 : vector<8x8xf32> to vector<8x8xbf16>
    %cst_42 = arith.constant dense<0.000000e+00> : vector<8x4xf32>
    %131 = tpu.matmul %130, %116, %cst_42 {dimension_numbers = #tpu.dot_dimension_numbers<[1], [0], [0], [1], [0, 0, 1, 1], [], []>} : vector<8x8xbf16>, vector<8x4xbf16>, vector<8x4xf32> -> vector<8x4xf32>
    %132 = vector.extract_strided_slice %41 {offsets = [0, 20], sizes = [8, 4], strides = [1, 1]} : vector<8x96xbf16> to vector<8x4xbf16>
    %133 = vector.extract_strided_slice %41 {offsets = [0, 52], sizes = [8, 4], strides = [1, 1]} : vector<8x96xbf16> to vector<8x4xbf16>
    %134 = vector.extract_strided_slice %41 {offsets = [0, 84], sizes = [8, 4], strides = [1, 1]} : vector<8x96xbf16> to vector<8x4xbf16>
    %cst_43 = arith.constant dense<0.000000e+00> : vector<8x8xf32>
    %135 = tpu.matmul %132, %133, %cst_43 {dimension_numbers = #tpu.dot_dimension_numbers<[1], [1], [0], [0], [0, 0, 1, 0], [], []>} : vector<8x4xbf16>, vector<8x4xbf16>, vector<8x8xf32> -> vector<8x8xf32>
    %cst_44 = arith.constant 5.000000e-01 : f32
    %136 = vector.broadcast %cst_44 : f32 to vector<8x8xf32>
    %137 = arith.mulf %135, %136 : vector<8x8xf32>
    %cst_45 = arith.constant dense<0xFF800000> : vector<8xf32>
    %138 = vector.multi_reduction <maximumf>, %137, %cst_45 [1] : vector<8x8xf32> to vector<8xf32>
    %139 = vector.shape_cast %138 : vector<8xf32> to vector<8x1xf32>
    %140 = vector.broadcast %139 : vector<8x1xf32> to vector<8x8xf32>
    %141 = arith.subf %137, %140 : vector<8x8xf32>
    %142 = math.exp %141 : vector<8x8xf32>
    %cst_46 = arith.constant dense<0.000000e+00> : vector<8xf32>
    %143 = vector.multi_reduction <add>, %142, %cst_46 [1] : vector<8x8xf32> to vector<8xf32>
    %144 = vector.shape_cast %143 : vector<8xf32> to vector<8x1xf32>
    %145 = tpu.reciprocal %144 {approx = true} : vector<8x1xf32> -> vector<8x1xf32>
    %146 = vector.broadcast %145 : vector<8x1xf32> to vector<8x8xf32>
    %147 = arith.mulf %142, %146 : vector<8x8xf32>
    %148 = arith.truncf %147 : vector<8x8xf32> to vector<8x8xbf16>
    %cst_47 = arith.constant dense<0.000000e+00> : vector<8x4xf32>
    %149 = tpu.matmul %148, %134, %cst_47 {dimension_numbers = #tpu.dot_dimension_numbers<[1], [0], [0], [1], [0, 0, 1, 1], [], []>} : vector<8x8xbf16>, vector<8x4xbf16>, vector<8x4xf32> -> vector<8x4xf32>
    %150 = vector.extract_strided_slice %41 {offsets = [0, 24], sizes = [8, 4], strides = [1, 1]} : vector<8x96xbf16> to vector<8x4xbf16>
    %151 = vector.extract_strided_slice %41 {offsets = [0, 56], sizes = [8, 4], strides = [1, 1]} : vector<8x96xbf16> to vector<8x4xbf16>
    %152 = vector.extract_strided_slice %41 {offsets = [0, 88], sizes = [8, 4], strides = [1, 1]} : vector<8x96xbf16> to vector<8x4xbf16>
    %cst_48 = arith.constant dense<0.000000e+00> : vector<8x8xf32>
    %153 = tpu.matmul %150, %151, %cst_48 {dimension_numbers = #tpu.dot_dimension_numbers<[1], [1], [0], [0], [0, 0, 1, 0], [], []>} : vector<8x4xbf16>, vector<8x4xbf16>, vector<8x8xf32> -> vector<8x8xf32>
    %cst_49 = arith.constant 5.000000e-01 : f32
    %154 = vector.broadcast %cst_49 : f32 to vector<8x8xf32>
    %155 = arith.mulf %153, %154 : vector<8x8xf32>
    %cst_50 = arith.constant dense<0xFF800000> : vector<8xf32>
    %156 = vector.multi_reduction <maximumf>, %155, %cst_50 [1] : vector<8x8xf32> to vector<8xf32>
    %157 = vector.shape_cast %156 : vector<8xf32> to vector<8x1xf32>
    %158 = vector.broadcast %157 : vector<8x1xf32> to vector<8x8xf32>
    %159 = arith.subf %155, %158 : vector<8x8xf32>
    %160 = math.exp %159 : vector<8x8xf32>
    %cst_51 = arith.constant dense<0.000000e+00> : vector<8xf32>
    %161 = vector.multi_reduction <add>, %160, %cst_51 [1] : vector<8x8xf32> to vector<8xf32>
    %162 = vector.shape_cast %161 : vector<8xf32> to vector<8x1xf32>
    %163 = tpu.reciprocal %162 {approx = true} : vector<8x1xf32> -> vector<8x1xf32>
    %164 = vector.broadcast %163 : vector<8x1xf32> to vector<8x8xf32>
    %165 = arith.mulf %160, %164 : vector<8x8xf32>
    %166 = arith.truncf %165 : vector<8x8xf32> to vector<8x8xbf16>
    %cst_52 = arith.constant dense<0.000000e+00> : vector<8x4xf32>
    %167 = tpu.matmul %166, %152, %cst_52 {dimension_numbers = #tpu.dot_dimension_numbers<[1], [0], [0], [1], [0, 0, 1, 1], [], []>} : vector<8x8xbf16>, vector<8x4xbf16>, vector<8x4xf32> -> vector<8x4xf32>
    %168 = vector.extract_strided_slice %41 {offsets = [0, 28], sizes = [8, 4], strides = [1, 1]} : vector<8x96xbf16> to vector<8x4xbf16>
    %169 = vector.extract_strided_slice %41 {offsets = [0, 60], sizes = [8, 4], strides = [1, 1]} : vector<8x96xbf16> to vector<8x4xbf16>
    %170 = vector.extract_strided_slice %41 {offsets = [0, 92], sizes = [8, 4], strides = [1, 1]} : vector<8x96xbf16> to vector<8x4xbf16>
    %cst_53 = arith.constant dense<0.000000e+00> : vector<8x8xf32>
    %171 = tpu.matmul %168, %169, %cst_53 {dimension_numbers = #tpu.dot_dimension_numbers<[1], [1], [0], [0], [0, 0, 1, 0], [], []>} : vector<8x4xbf16>, vector<8x4xbf16>, vector<8x8xf32> -> vector<8x8xf32>
    %cst_54 = arith.constant 5.000000e-01 : f32
    %172 = vector.broadcast %cst_54 : f32 to vector<8x8xf32>
    %173 = arith.mulf %171, %172 : vector<8x8xf32>
    %cst_55 = arith.constant dense<0xFF800000> : vector<8xf32>
    %174 = vector.multi_reduction <maximumf>, %173, %cst_55 [1] : vector<8x8xf32> to vector<8xf32>
    %175 = vector.shape_cast %174 : vector<8xf32> to vector<8x1xf32>
    %176 = vector.broadcast %175 : vector<8x1xf32> to vector<8x8xf32>
    %177 = arith.subf %173, %176 : vector<8x8xf32>
    %178 = math.exp %177 : vector<8x8xf32>
    %cst_56 = arith.constant dense<0.000000e+00> : vector<8xf32>
    %179 = vector.multi_reduction <add>, %178, %cst_56 [1] : vector<8x8xf32> to vector<8xf32>
    %180 = vector.shape_cast %179 : vector<8xf32> to vector<8x1xf32>
    %181 = tpu.reciprocal %180 {approx = true} : vector<8x1xf32> -> vector<8x1xf32>
    %182 = vector.broadcast %181 : vector<8x1xf32> to vector<8x8xf32>
    %183 = arith.mulf %178, %182 : vector<8x8xf32>
    %184 = arith.truncf %183 : vector<8x8xf32> to vector<8x8xbf16>
    %cst_57 = arith.constant dense<0.000000e+00> : vector<8x4xf32>
    %185 = tpu.matmul %184, %170, %cst_57 {dimension_numbers = #tpu.dot_dimension_numbers<[1], [0], [0], [1], [0, 0, 1, 1], [], []>} : vector<8x8xbf16>, vector<8x4xbf16>, vector<8x4xf32> -> vector<8x4xf32>
    %186 = tpu.concatenate %59, %77, %95, %113, %131, %149, %167, %185 in 1 : vector<8x4xf32>, vector<8x4xf32>, vector<8x4xf32>, vector<8x4xf32>, vector<8x4xf32>, vector<8x4xf32>, vector<8x4xf32>, vector<8x4xf32> -> vector<8x32xf32>
    %187 = arith.truncf %186 : vector<8x32xf32> to vector<8x32xbf16>
    %c0_58 = arith.constant 0 : index
    %c0_59 = arith.constant 0 : index
    %188 = vector.load %arg14[%c0_58, %c0_59] : memref<8x32xf32, #tpu.memory_space<vmem>>, vector<8x32xf32>
    %189 = arith.index_cast %36 : i32 to index
    %c0_60 = arith.constant 0 : index
    %c0_61 = arith.constant 0 : index
    %190 = vector.load %arg5[%189, %c0_60, %c0_61] : memref<1x32x32xbf16, #tpu.memory_space<vmem>>, vector<1x32x32xbf16>
    %191 = vector.shape_cast %190 : vector<1x32x32xbf16> to vector<32x32xbf16>
    %cst_62 = arith.constant dense<0.000000e+00> : vector<8x32xf32>
    %192 = tpu.matmul %187, %191, %cst_62 {dimension_numbers = #tpu.dot_dimension_numbers<[1], [0], [0], [1], [0, 0, 1, 1], [], []>} : vector<8x32xbf16>, vector<32x32xbf16>, vector<8x32xf32> -> vector<8x32xf32>
    %193 = arith.addf %188, %192 : vector<8x32xf32>
    %c0_63 = arith.constant 0 : index
    %c0_64 = arith.constant 0 : index
    %194 = vector.load %arg14[%c0_63, %c0_64] : memref<8x32xf32, #tpu.memory_space<vmem>>, vector<8x32xf32>
    tpu.vector_store %arg14[%c0_63, %c0_64], %193 {strides = array<i32>} : memref<8x32xf32, #tpu.memory_space<vmem>>, vector<8x32xf32>,
    %c1_i32_65 = arith.constant 1 : i32
    %c0_66 = arith.constant 0 : index
    %c0_67 = arith.constant 0 : index
    %195 = vector.load %arg14[%c0_66, %c0_67] : memref<8x32xf32, #tpu.memory_space<vmem>>, vector<8x32xf32>
    %c0_68 = arith.constant 0 : index
    %c0_69 = arith.constant 0 : index
    %196 = vector.load %arg7[%c0_68, %c0_69] : memref<1x32xf32, #tpu.memory_space<vmem>>, vector<1x32xf32>
    %197 = vector.shape_cast %196 : vector<1x32xf32> to vector<32xf32>
    %c0_70 = arith.constant 0 : index
    %c0_71 = arith.constant 0 : index
    %198 = vector.load %arg8[%c0_70, %c0_71] : memref<1x32xf32, #tpu.memory_space<vmem>>, vector<1x32xf32>
    %199 = vector.shape_cast %198 : vector<1x32xf32> to vector<32xf32>
    %cst_72 = arith.constant dense<0.000000e+00> : vector<8xf32>
    %200 = vector.multi_reduction <add>, %195, %cst_72 [1] : vector<8x32xf32> to vector<8xf32>
    %201 = vector.shape_cast %200 : vector<8xf32> to vector<8x1xf32>
    %cst_73 = arith.constant 3.200000e+01 : f32
    %202 = vector.broadcast %cst_73 : f32 to vector<8x1xf32>
    %203 = arith.divf %201, %202 : vector<8x1xf32>
    %204 = vector.broadcast %203 : vector<8x1xf32> to vector<8x32xf32>
    %205 = arith.subf %195, %204 : vector<8x32xf32>
    %206 = arith.mulf %205, %205 : vector<8x32xf32>
    %cst_74 = arith.constant dense<0.000000e+00> : vector<8xf32>
    %207 = vector.multi_reduction <add>, %206, %cst_74 [1] : vector<8x32xf32> to vector<8xf32>
    %208 = vector.shape_cast %207 : vector<8xf32> to vector<8x1xf32>
    %cst_75 = arith.constant 3.200000e+01 : f32
    %209 = vector.broadcast %cst_75 : f32 to vector<8x1xf32>
    %210 = arith.divf %208, %209 : vector<8x1xf32>
    %cst_76 = arith.constant 9.99999997E-7 : f32
    %211 = vector.broadcast %cst_76 : f32 to vector<8x1xf32>
    %212 = arith.addf %210, %211 : vector<8x1xf32>
    %213 = math.rsqrt %212 : vector<8x1xf32>
    %214 = vector.broadcast %213 : vector<8x1xf32> to vector<8x32xf32>
    %215 = arith.mulf %205, %214 : vector<8x32xf32>
    %216 = vector.shape_cast %197 : vector<32xf32> to vector<1x32xf32>
    %217 = vector.broadcast %216 : vector<1x32xf32> to vector<8x32xf32>
    %218 = arith.mulf %215, %217 : vector<8x32xf32>
    %219 = vector.shape_cast %199 : vector<32xf32> to vector<1x32xf32>
    %220 = vector.broadcast %219 : vector<1x32xf32> to vector<8x32xf32>
    %221 = arith.addf %218, %220 : vector<8x32xf32>
    %222 = arith.truncf %221 : vector<8x32xf32> to vector<8x32xbf16>
    %c0_77 = arith.constant 0 : index
    %c0_78 = arith.constant 0 : index
    %223 = vector.load %arg9[%c0_77, %c0_78] : memref<32x128xbf16, #tpu.memory_space<vmem>>, vector<32x128xbf16>
    %cst_79 = arith.constant dense<0.000000e+00> : vector<8x128xf32>
    %224 = tpu.matmul %222, %223, %cst_79 {dimension_numbers = #tpu.dot_dimension_numbers<[1], [0], [0], [1], [0, 0, 1, 1], [], []>} : vector<8x32xbf16>, vector<32x128xbf16>, vector<8x128xf32> -> vector<8x128xf32>
    %c0_80 = arith.constant 0 : index
    %c0_81 = arith.constant 0 : index
    %225 = vector.load %arg10[%c0_80, %c0_81] : memref<1x128xf32, #tpu.memory_space<vmem>>, vector<1x128xf32>
    %226 = vector.shape_cast %225 : vector<1x128xf32> to vector<128xf32>
    %227 = vector.shape_cast %226 : vector<128xf32> to vector<1x128xf32>
    %228 = vector.broadcast %227 : vector<1x128xf32> to vector<8x128xf32>
    %229 = arith.addf %224, %228 : vector<8x128xf32>
    %cst_82 = arith.constant 5.000000e-01 : f32
    %230 = vector.broadcast %cst_82 : f32 to vector<8x128xf32>
    %231 = arith.mulf %230, %229 : vector<8x128xf32>
    %cst_83 = arith.constant 0.707106769 : f32
    %232 = vector.broadcast %cst_83 : f32 to vector<8x128xf32>
    %233 = arith.mulf %229, %232 : vector<8x128xf32>
    %234 = math.absf %233 : vector<8x128xf32>
    %cst_84 = arith.constant 0.327591091 : f32
    %235 = vector.broadcast %cst_84 : f32 to vector<8x128xf32>
    %236 = arith.mulf %235, %234 : vector<8x128xf32>
    %cst_85 = arith.constant 1.000000e+00 : f32
    %237 = vector.broadcast %cst_85 : f32 to vector<8x128xf32>
    %238 = arith.addf %237, %236 : vector<8x128xf32>
    %239 = tpu.reciprocal %238 {approx = true} : vector<8x128xf32> -> vector<8x128xf32>
    %cst_86 = arith.constant 1.06140542 : f32
    %240 = vector.broadcast %cst_86 : f32 to vector<8x128xf32>
    %241 = arith.mulf %240, %239 : vector<8x128xf32>
    %cst_87 = arith.constant -1.45315206 : f32
    %242 = vector.broadcast %cst_87 : f32 to vector<8x128xf32>
    %243 = arith.addf %241, %242 : vector<8x128xf32>
    %244 = arith.mulf %243, %239 : vector<8x128xf32>
    %cst_88 = arith.constant 1.42141378 : f32
    %245 = vector.broadcast %cst_88 : f32 to vector<8x128xf32>
    %246 = arith.addf %244, %245 : vector<8x128xf32>
    %247 = arith.mulf %246, %239 : vector<8x128xf32>
    %cst_89 = arith.constant -0.284496725 : f32
    %248 = vector.broadcast %cst_89 : f32 to vector<8x128xf32>
    %249 = arith.addf %247, %248 : vector<8x128xf32>
    %250 = arith.mulf %249, %239 : vector<8x128xf32>
    %cst_90 = arith.constant 0.254829586 : f32
    %251 = vector.broadcast %cst_90 : f32 to vector<8x128xf32>
    %252 = arith.addf %250, %251 : vector<8x128xf32>
    %253 = arith.mulf %252, %239 : vector<8x128xf32>
    %cst_91 = arith.constant 0.000000e+00 : f32
    %254 = vector.broadcast %cst_91 : f32 to vector<8x128xf32>
    %255 = arith.subf %254, %234 : vector<8x128xf32>
    %256 = arith.mulf %255, %234 : vector<8x128xf32>
    %257 = math.exp %256 : vector<8x128xf32>
    %258 = arith.mulf %253, %257 : vector<8x128xf32>
    %cst_92 = arith.constant 1.000000e+00 : f32
    %259 = vector.broadcast %cst_92 : f32 to vector<8x128xf32>
    %260 = arith.subf %259, %258 : vector<8x128xf32>
    %cst_93 = arith.constant 0.000000e+00 : f32
    %261 = vector.broadcast %cst_93 : f32 to vector<8x128xf32>
    %262 = arith.cmpf oge, %233, %261 : vector<8x128xf32>
    %cst_94 = arith.constant 0.000000e+00 : f32
    %263 = vector.broadcast %cst_94 : f32 to vector<8x128xf32>
    %264 = arith.subf %263, %260 : vector<8x128xf32>
    %265 = arith.select %262, %260, %264 : vector<8x128xi1>, vector<8x128xf32>
    %cst_95 = arith.constant 1.000000e+00 : f32
    %266 = vector.broadcast %cst_95 : f32 to vector<8x128xf32>
    %267 = arith.addf %266, %265 : vector<8x128xf32>
    %268 = arith.mulf %231, %267 : vector<8x128xf32>
    %269 = arith.truncf %268 : vector<8x128xf32> to vector<8x128xbf16>
    %c0_96 = arith.constant 0 : index
    %c0_97 = arith.constant 0 : index
    %270 = vector.load %arg11[%c0_96, %c0_97] : memref<128x32xbf16, #tpu.memory_space<vmem>>, vector<128x32xbf16>
    %cst_98 = arith.constant dense<0.000000e+00> : vector<8x32xf32>
    %271 = tpu.matmul %269, %270, %cst_98 {dimension_numbers = #tpu.dot_dimension_numbers<[1], [0], [0], [1], [0, 0, 1, 1], [], []>} : vector<8x128xbf16>, vector<128x32xbf16>, vector<8x32xf32> -> vector<8x32xf32>
    %c0_99 = arith.constant 0 : index
    %c0_100 = arith.constant 0 : index
    %272 = vector.load %arg12[%c0_99, %c0_100] : memref<1x32xf32, #tpu.memory_space<vmem>>, vector<1x32xf32>
    %273 = vector.shape_cast %272 : vector<1x32xf32> to vector<32xf32>
    %274 = vector.shape_cast %273 : vector<32xf32> to vector<1x32xf32>
    %275 = vector.broadcast %274 : vector<1x32xf32> to vector<8x32xf32>
    %276 = arith.addf %271, %275 : vector<8x32xf32>
    %277 = arith.addf %195, %276 : vector<8x32xf32>
    %c0_101 = arith.constant 0 : index
    %c0_102 = arith.constant 0 : index
    %c0_103 = arith.constant 0 : index
    %278 = vector.load %arg13[%c0_101, %c0_102, %c0_103] : memref<1x8x32xf32, #tpu.memory_space<vmem>>, vector<1x8x32xf32>
    %279 = vector.shape_cast %278 : vector<1x8x32xf32> to vector<8x32xf32>
    %280 = vector.shape_cast %277 : vector<8x32xf32> to vector<1x8x32xf32>
    tpu.vector_store %arg13[%c0_101, %c0_102, %c0_103], %280 {strides = array<i32>} : memref<1x8x32xf32, #tpu.memory_space<vmem>>, vector<1x8x32xf32>,
    return
  }
  func.func @transform_0(%arg0: i32) -> (i32, i32, i32) {
    %c0_i32 = arith.constant 0 : i32
    %c0_i32_0 = arith.constant 0 : i32
    %c0_i32_1 = arith.constant 0 : i32
    return %arg0, %c0_i32, %c0_i32_0 : i32, i32, i32
  }
  func.func @transform_1(%arg0: i32) -> (i32, i32) {
    %c0_i32 = arith.constant 0 : i32
    %c0_i32_0 = arith.constant 0 : i32
    %c0_i32_1 = arith.constant 0 : i32
    return %c0_i32, %c0_i32_0 : i32, i32
  }
  func.func @transform_2(%arg0: i32) -> (i32, i32) {
    %c0_i32 = arith.constant 0 : i32
    %c0_i32_0 = arith.constant 0 : i32
    %c0_i32_1 = arith.constant 0 : i32
    return %c0_i32, %c0_i32_0 : i32, i32
  }
  func.func @transform_3(%arg0: i32) -> (i32, i32, i32) {
    %c0_i32 = arith.constant 0 : i32
    %c0_i32_0 = arith.constant 0 : i32
    %c0_i32_1 = arith.constant 0 : i32
    %c0_i32_2 = arith.constant 0 : i32
    return %c0_i32, %c0_i32_0, %c0_i32_1 : i32, i32, i32
  }
  func.func @transform_4(%arg0: i32) -> (i32, i32, i32) {
    %c0_i32 = arith.constant 0 : i32
    %c0_i32_0 = arith.constant 0 : i32
    %c0_i32_1 = arith.constant 0 : i32
    %c0_i32_2 = arith.constant 0 : i32
    return %c0_i32, %c0_i32_0, %c0_i32_1 : i32, i32, i32
  }
  func.func @transform_5(%arg0: i32) -> (i32, i32) {
    %c0_i32 = arith.constant 0 : i32
    %c0_i32_0 = arith.constant 0 : i32
    %c0_i32_1 = arith.constant 0 : i32
    return %c0_i32, %c0_i32_0 : i32, i32
  }
  func.func @transform_6(%arg0: i32) -> (i32, i32) {
    %c0_i32 = arith.constant 0 : i32
    %c0_i32_0 = arith.constant 0 : i32
    %c0_i32_1 = arith.constant 0 : i32
    return %c0_i32, %c0_i32_0 : i32, i32
  }
  func.func @transform_7(%arg0: i32) -> (i32, i32) {
    %c0_i32 = arith.constant 0 : i32
    %c0_i32_0 = arith.constant 0 : i32
    %c0_i32_1 = arith.constant 0 : i32
    return %c0_i32, %c0_i32_0 : i32, i32
  }
  func.func @transform_8(%arg0: i32) -> (i32, i32) {
    %c0_i32 = arith.constant 0 : i32
    %c0_i32_0 = arith.constant 0 : i32
    %c0_i32_1 = arith.constant 0 : i32
    return %c0_i32, %c0_i32_0 : i32, i32
  }
  func.func @transform_9(%arg0: i32) -> (i32, i32) {
    %c0_i32 = arith.constant 0 : i32
    %c0_i32_0 = arith.constant 0 : i32
    %c0_i32_1 = arith.constant 0 : i32
    return %c0_i32, %c0_i32_0 : i32, i32
  }
  func.func @transform_10(%arg0: i32) -> (i32, i32) {
    %c0_i32 = arith.constant 0 : i32
    %c0_i32_0 = arith.constant 0 : i32
    %c0_i32_1 = arith.constant 0 : i32
    return %c0_i32, %c0_i32_0 : i32, i32
  }
  func.func @transform_11(%arg0: i32) -> (i32, i32) {
    %c0_i32 = arith.constant 0 : i32
    %c0_i32_0 = arith.constant 0 : i32
    %c0_i32_1 = arith.constant 0 : i32
    return %c0_i32, %c0_i32_0 : i32, i32
  }
  func.func @transform_12(%arg0: i32) -> (i32, i32, i32) {
    %c0_i32 = arith.constant 0 : i32
    %c0_i32_0 = arith.constant 0 : i32
    %c0_i32_1 = arith.constant 0 : i32
    return %arg0, %c0_i32, %c0_i32_0 : i32, i32, i32
  }
}

module attributes {stable_mosaic.version = 11 : i64} {
  func.func @_block_kernel(%arg0: i32, %arg1: memref<1x8x32xf32, #tpu.memory_space<vmem>>, %arg2: memref<1x32xf32, #tpu.memory_space<vmem>>, %arg3: memref<1x32xf32, #tpu.memory_space<vmem>>, %arg4: memref<1x32x96xbf16, #tpu.memory_space<vmem>>, %arg5: memref<1x32x32xbf16, #tpu.memory_space<vmem>>, %arg6: memref<1x32xf32, #tpu.memory_space<vmem>>, %arg7: memref<1x32xf32, #tpu.memory_space<vmem>>, %arg8: memref<1x32xf32, #tpu.memory_space<vmem>>, %arg9: memref<32x128xbf16, #tpu.memory_space<vmem>>, %arg10: memref<1x128xf32, #tpu.memory_space<vmem>>, %arg11: memref<128x32xbf16, #tpu.memory_space<vmem>>, %arg12: memref<1x32xf32, #tpu.memory_space<vmem>>, %arg13: memref<1x8x32xf32, #tpu.memory_space<vmem>>, %arg14: memref<8x32xf32, #tpu.memory_space<vmem>>) attributes {dimension_semantics = [#tpu.dimension_semantics<parallel>], iteration_bounds = array<i64: 2>, scalar_prefetch = 0 : i64, scratch_operands = 1 : i64, tpu.core_type = #tpu.core_type<tc>, window_params = [{transform_indices = @transform_0, window_bounds = array<i64: 1, 8, 32>}, {pipeline_mode = #tpu.pipeline_mode<synchronous>, transform_indices = @transform_1, window_bounds = array<i64: 1, 32>}, {pipeline_mode = #tpu.pipeline_mode<synchronous>, transform_indices = @transform_2, window_bounds = array<i64: 1, 32>}, {pipeline_mode = #tpu.pipeline_mode<synchronous>, transform_indices = @transform_3, window_bounds = array<i64: 1, 32, 96>}, {pipeline_mode = #tpu.pipeline_mode<synchronous>, transform_indices = @transform_4, window_bounds = array<i64: 1, 32, 32>}, {pipeline_mode = #tpu.pipeline_mode<synchronous>, transform_indices = @transform_5, window_bounds = array<i64: 1, 32>}, {pipeline_mode = #tpu.pipeline_mode<synchronous>, transform_indices = @transform_6, window_bounds = array<i64: 1, 32>}, {pipeline_mode = #tpu.pipeline_mode<synchronous>, transform_indices = @transform_7, window_bounds = array<i64: 1, 32>}, {pipeline_mode = #tpu.pipeline_mode<synchronous>, transform_indices = @transform_8, window_bounds = array<i64: 32, 128>}, {pipeline_mode = #tpu.pipeline_mode<synchronous>, transform_indices = @transform_9, window_bounds = array<i64: 1, 128>}, {pipeline_mode = #tpu.pipeline_mode<synchronous>, transform_indices = @transform_10, window_bounds = array<i64: 128, 32>}, {pipeline_mode = #tpu.pipeline_mode<synchronous>, transform_indices = @transform_11, window_bounds = array<i64: 1, 32>}, {transform_indices = @transform_12, window_bounds = array<i64: 1, 8, 32>}]} {
    %c0 = arith.constant 0 : index
    %c0_0 = arith.constant 0 : index
    %c0_1 = arith.constant 0 : index
    %0 = vector.load %arg1[%c0, %c0_0, %c0_1] : memref<1x8x32xf32, #tpu.memory_space<vmem>>, vector<1x8x32xf32>
    %1 = vector.shape_cast %0 : vector<1x8x32xf32> to vector<8x32xf32>
    %c0_2 = arith.constant 0 : index
    %c0_3 = arith.constant 0 : index
    %2 = vector.load %arg2[%c0_2, %c0_3] : memref<1x32xf32, #tpu.memory_space<vmem>>, vector<1x32xf32>
    %3 = vector.shape_cast %2 : vector<1x32xf32> to vector<32xf32>
    %c0_4 = arith.constant 0 : index
    %c0_5 = arith.constant 0 : index
    %4 = vector.load %arg3[%c0_4, %c0_5] : memref<1x32xf32, #tpu.memory_space<vmem>>, vector<1x32xf32>
    %5 = vector.shape_cast %4 : vector<1x32xf32> to vector<32xf32>
    %cst = arith.constant dense<0.000000e+00> : vector<8xf32>
    %6 = vector.multi_reduction <add>, %1, %cst [1] : vector<8x32xf32> to vector<8xf32>
    %7 = vector.shape_cast %6 : vector<8xf32> to vector<8x1xf32>
    %cst_6 = arith.constant 3.200000e+01 : f32
    %8 = vector.broadcast %cst_6 : f32 to vector<8x1xf32>
    %9 = arith.divf %7, %8 : vector<8x1xf32>
    %10 = vector.broadcast %9 : vector<8x1xf32> to vector<8x32xf32>
    %11 = arith.subf %1, %10 : vector<8x32xf32>
    %12 = arith.mulf %11, %11 : vector<8x32xf32>
    %cst_7 = arith.constant dense<0.000000e+00> : vector<8xf32>
    %13 = vector.multi_reduction <add>, %12, %cst_7 [1] : vector<8x32xf32> to vector<8xf32>
    %14 = vector.shape_cast %13 : vector<8xf32> to vector<8x1xf32>
    %cst_8 = arith.constant 3.200000e+01 : f32
    %15 = vector.broadcast %cst_8 : f32 to vector<8x1xf32>
    %16 = arith.divf %14, %15 : vector<8x1xf32>
    %cst_9 = arith.constant 9.99999997E-7 : f32
    %17 = vector.broadcast %cst_9 : f32 to vector<8x1xf32>
    %18 = arith.addf %16, %17 : vector<8x1xf32>
    %19 = math.rsqrt %18 : vector<8x1xf32>
    %20 = vector.broadcast %19 : vector<8x1xf32> to vector<8x32xf32>
    %21 = arith.mulf %11, %20 : vector<8x32xf32>
    %22 = vector.shape_cast %3 : vector<32xf32> to vector<1x32xf32>
    %23 = vector.broadcast %22 : vector<1x32xf32> to vector<8x32xf32>
    %24 = arith.mulf %21, %23 : vector<8x32xf32>
    %25 = vector.shape_cast %5 : vector<32xf32> to vector<1x32xf32>
    %26 = vector.broadcast %25 : vector<1x32xf32> to vector<8x32xf32>
    %27 = arith.addf %24, %26 : vector<8x32xf32>
    %28 = arith.truncf %27 : vector<8x32xf32> to vector<8x32xbf16>
    %c0_10 = arith.constant 0 : index
    %c0_11 = arith.constant 0 : index
    %29 = vector.load %arg6[%c0_10, %c0_11] : memref<1x32xf32, #tpu.memory_space<vmem>>, vector<1x32xf32>
    %30 = vector.shape_cast %29 : vector<1x32xf32> to vector<32xf32>
    %31 = vector.shape_cast %30 : vector<32xf32> to vector<1x32xf32>
    %32 = vector.broadcast %31 : vector<1x32xf32> to vector<8x32xf32>
    %33 = arith.addf %1, %32 : vector<8x32xf32>
    %c0_12 = arith.constant 0 : index
    %c0_13 = arith.constant 0 : index
    %34 = vector.load %arg14[%c0_12, %c0_13] : memref<8x32xf32, #tpu.memory_space<vmem>>, vector<8x32xf32>
    tpu.vector_store %arg14[%c0_12, %c0_13], %33 {strides = array<i32>} : memref<8x32xf32, #tpu.memory_space<vmem>>, vector<8x32xf32>,
    %c0_i32 = arith.constant 0 : i32
    %c1_i32 = arith.constant 1 : i32
    %35 = arith.muli %c0_i32, %c1_i32 : i32
    %c0_i32_14 = arith.constant 0 : i32
    %36 = arith.addi %c0_i32_14, %35 : i32
    %37 = arith.index_cast %36 : i32 to index
    %c0_15 = arith.constant 0 : index
    %c0_16 = arith.constant 0 : index
    %38 = vector.load %arg4[%37, %c0_15, %c0_16] : memref<1x32x96xbf16, #tpu.memory_space<vmem>>, vector<1x32x96xbf16>
    %39 = vector.shape_cast %38 : vector<1x32x96xbf16> to vector<32x96xbf16>
    %cst_17 = arith.constant dense<0.000000e+00> : vector<8x96xf32>
    %40 = tpu.matmul %28, %39, %cst_17 {dimension_numbers = #tpu.dot_dimension_numbers<[1], [0], [0], [1], [0, 0, 1, 1], [], []>} : vector<8x32xbf16>, vector<32x96xbf16>, vector<8x96xf32> -> vector<8x96xf32>
    %41 = arith.truncf %40 : vector<8x96xf32> to vector<8x96xbf16>
    %42 = vector.extract_strided_slice %41 {offsets = [0, 0], sizes = [8, 4], strides = [1, 1]} : vector<8x96xbf16> to vector<8x4xbf16>
    %43 = vector.extract_strided_slice %41 {offsets = [0, 32], sizes = [8, 4], strides = [1, 1]} : vector<8x96xbf16> to vector<8x4xbf16>
    %44 = vector.extract_strided_slice %41 {offsets = [0, 64], sizes = [8, 4], strides = [1, 1]} : vector<8x96xbf16> to vector<8x4xbf16>
    %cst_18 = arith.constant dense<0.000000e+00> : vector<8x8xf32>
    %45 = tpu.matmul %42, %43, %cst_18 {dimension_numbers = #tpu.dot_dimension_numbers<[1], [1], [0], [0], [0, 0, 1, 0], [], []>} : vector<8x4xbf16>, vector<8x4xbf16>, vector<8x8xf32> -> vector<8x8xf32>
    %cst_19 = arith.constant 5.000000e-01 : f32
    %46 = vector.broadcast %cst_19 : f32 to vector<8x8xf32>
    %47 = arith.mulf %45, %46 : vector<8x8xf32>
    %cst_20 = arith.constant dense<0xFF800000> : vector<8xf32>
    %48 = vector.multi_reduction <maximumf>, %47, %cst_20 [1] : vector<8x8xf32> to vector<8xf32>
    %49 = vector.shape_cast %48 : vector<8xf32> to vector<8x1xf32>
    %50 = vector.broadcast %49 : vector<8x1xf32> to vector<8x8xf32>
    %51 = arith.subf %47, %50 : vector<8x8xf32>
    %52 = math.exp %51 : vector<8x8xf32>
    %cst_21 = arith.constant dense<0.000000e+00> : vector<8xf32>
    %53 = vector.multi_reduction <add>, %52, %cst_21 [1] : vector<8x8xf32> to vector<8xf32>
    %54 = vector.shape_cast %53 : vector<8xf32> to vector<8x1xf32>
    %55 = tpu.reciprocal %54 {approx = true} : vector<8x1xf32> -> vector<8x1xf32>
    %56 = vector.broadcast %55 : vector<8x1xf32> to vector<8x8xf32>
    %57 = arith.mulf %52, %56 : vector<8x8xf32>
    %58 = arith.truncf %57 : vector<8x8xf32> to vector<8x8xbf16>
    %cst_22 = arith.constant dense<0.000000e+00> : vector<8x4xf32>
    %59 = tpu.matmul %58, %44, %cst_22 {dimension_numbers = #tpu.dot_dimension_numbers<[1], [0], [0], [1], [0, 0, 1, 1], [], []>} : vector<8x8xbf16>, vector<8x4xbf16>, vector<8x4xf32> -> vector<8x4xf32>
    %60 = vector.extract_strided_slice %41 {offsets = [0, 4], sizes = [8, 4], strides = [1, 1]} : vector<8x96xbf16> to vector<8x4xbf16>
    %61 = vector.extract_strided_slice %41 {offsets = [0, 36], sizes = [8, 4], strides = [1, 1]} : vector<8x96xbf16> to vector<8x4xbf16>
    %62 = vector.extract_strided_slice %41 {offsets = [0, 68], sizes = [8, 4], strides = [1, 1]} : vector<8x96xbf16> to vector<8x4xbf16>
    %cst_23 = arith.constant dense<0.000000e+00> : vector<8x8xf32>
    %63 = tpu.matmul %60, %61, %cst_23 {dimension_numbers = #tpu.dot_dimension_numbers<[1], [1], [0], [0], [0, 0, 1, 0], [], []>} : vector<8x4xbf16>, vector<8x4xbf16>, vector<8x8xf32> -> vector<8x8xf32>
    %cst_24 = arith.constant 5.000000e-01 : f32
    %64 = vector.broadcast %cst_24 : f32 to vector<8x8xf32>
    %65 = arith.mulf %63, %64 : vector<8x8xf32>
    %cst_25 = arith.constant dense<0xFF800000> : vector<8xf32>
    %66 = vector.multi_reduction <maximumf>, %65, %cst_25 [1] : vector<8x8xf32> to vector<8xf32>
    %67 = vector.shape_cast %66 : vector<8xf32> to vector<8x1xf32>
    %68 = vector.broadcast %67 : vector<8x1xf32> to vector<8x8xf32>
    %69 = arith.subf %65, %68 : vector<8x8xf32>
    %70 = math.exp %69 : vector<8x8xf32>
    %cst_26 = arith.constant dense<0.000000e+00> : vector<8xf32>
    %71 = vector.multi_reduction <add>, %70, %cst_26 [1] : vector<8x8xf32> to vector<8xf32>
    %72 = vector.shape_cast %71 : vector<8xf32> to vector<8x1xf32>
    %73 = tpu.reciprocal %72 {approx = true} : vector<8x1xf32> -> vector<8x1xf32>
    %74 = vector.broadcast %73 : vector<8x1xf32> to vector<8x8xf32>
    %75 = arith.mulf %70, %74 : vector<8x8xf32>
    %76 = arith.truncf %75 : vector<8x8xf32> to vector<8x8xbf16>
    %cst_27 = arith.constant dense<0.000000e+00> : vector<8x4xf32>
    %77 = tpu.matmul %76, %62, %cst_27 {dimension_numbers = #tpu.dot_dimension_numbers<[1], [0], [0], [1], [0, 0, 1, 1], [], []>} : vector<8x8xbf16>, vector<8x4xbf16>, vector<8x4xf32> -> vector<8x4xf32>
    %78 = vector.extract_strided_slice %41 {offsets = [0, 8], sizes = [8, 4], strides = [1, 1]} : vector<8x96xbf16> to vector<8x4xbf16>
    %79 = vector.extract_strided_slice %41 {offsets = [0, 40], sizes = [8, 4], strides = [1, 1]} : vector<8x96xbf16> to vector<8x4xbf16>
    %80 = vector.extract_strided_slice %41 {offsets = [0, 72], sizes = [8, 4], strides = [1, 1]} : vector<8x96xbf16> to vector<8x4xbf16>
    %cst_28 = arith.constant dense<0.000000e+00> : vector<8x8xf32>
    %81 = tpu.matmul %78, %79, %cst_28 {dimension_numbers = #tpu.dot_dimension_numbers<[1], [1], [0], [0], [0, 0, 1, 0], [], []>} : vector<8x4xbf16>, vector<8x4xbf16>, vector<8x8xf32> -> vector<8x8xf32>
    %cst_29 = arith.constant 5.000000e-01 : f32
    %82 = vector.broadcast %cst_29 : f32 to vector<8x8xf32>
    %83 = arith.mulf %81, %82 : vector<8x8xf32>
    %cst_30 = arith.constant dense<0xFF800000> : vector<8xf32>
    %84 = vector.multi_reduction <maximumf>, %83, %cst_30 [1] : vector<8x8xf32> to vector<8xf32>
    %85 = vector.shape_cast %84 : vector<8xf32> to vector<8x1xf32>
    %86 = vector.broadcast %85 : vector<8x1xf32> to vector<8x8xf32>
    %87 = arith.subf %83, %86 : vector<8x8xf32>
    %88 = math.exp %87 : vector<8x8xf32>
    %cst_31 = arith.constant dense<0.000000e+00> : vector<8xf32>
    %89 = vector.multi_reduction <add>, %88, %cst_31 [1] : vector<8x8xf32> to vector<8xf32>
    %90 = vector.shape_cast %89 : vector<8xf32> to vector<8x1xf32>
    %91 = tpu.reciprocal %90 {approx = true} : vector<8x1xf32> -> vector<8x1xf32>
    %92 = vector.broadcast %91 : vector<8x1xf32> to vector<8x8xf32>
    %93 = arith.mulf %88, %92 : vector<8x8xf32>
    %94 = arith.truncf %93 : vector<8x8xf32> to vector<8x8xbf16>
    %cst_32 = arith.constant dense<0.000000e+00> : vector<8x4xf32>
    %95 = tpu.matmul %94, %80, %cst_32 {dimension_numbers = #tpu.dot_dimension_numbers<[1], [0], [0], [1], [0, 0, 1, 1], [], []>} : vector<8x8xbf16>, vector<8x4xbf16>, vector<8x4xf32> -> vector<8x4xf32>
    %96 = vector.extract_strided_slice %41 {offsets = [0, 12], sizes = [8, 4], strides = [1, 1]} : vector<8x96xbf16> to vector<8x4xbf16>
    %97 = vector.extract_strided_slice %41 {offsets = [0, 44], sizes = [8, 4], strides = [1, 1]} : vector<8x96xbf16> to vector<8x4xbf16>
    %98 = vector.extract_strided_slice %41 {offsets = [0, 76], sizes = [8, 4], strides = [1, 1]} : vector<8x96xbf16> to vector<8x4xbf16>
    %cst_33 = arith.constant dense<0.000000e+00> : vector<8x8xf32>
    %99 = tpu.matmul %96, %97, %cst_33 {dimension_numbers = #tpu.dot_dimension_numbers<[1], [1], [0], [0], [0, 0, 1, 0], [], []>} : vector<8x4xbf16>, vector<8x4xbf16>, vector<8x8xf32> -> vector<8x8xf32>
    %cst_34 = arith.constant 5.000000e-01 : f32
    %100 = vector.broadcast %cst_34 : f32 to vector<8x8xf32>
    %101 = arith.mulf %99, %100 : vector<8x8xf32>
    %cst_35 = arith.constant dense<0xFF800000> : vector<8xf32>
    %102 = vector.multi_reduction <maximumf>, %101, %cst_35 [1] : vector<8x8xf32> to vector<8xf32>
    %103 = vector.shape_cast %102 : vector<8xf32> to vector<8x1xf32>
    %104 = vector.broadcast %103 : vector<8x1xf32> to vector<8x8xf32>
    %105 = arith.subf %101, %104 : vector<8x8xf32>
    %106 = math.exp %105 : vector<8x8xf32>
    %cst_36 = arith.constant dense<0.000000e+00> : vector<8xf32>
    %107 = vector.multi_reduction <add>, %106, %cst_36 [1] : vector<8x8xf32> to vector<8xf32>
    %108 = vector.shape_cast %107 : vector<8xf32> to vector<8x1xf32>
    %109 = tpu.reciprocal %108 {approx = true} : vector<8x1xf32> -> vector<8x1xf32>
    %110 = vector.broadcast %109 : vector<8x1xf32> to vector<8x8xf32>
    %111 = arith.mulf %106, %110 : vector<8x8xf32>
    %112 = arith.truncf %111 : vector<8x8xf32> to vector<8x8xbf16>
    %cst_37 = arith.constant dense<0.000000e+00> : vector<8x4xf32>
    %113 = tpu.matmul %112, %98, %cst_37 {dimension_numbers = #tpu.dot_dimension_numbers<[1], [0], [0], [1], [0, 0, 1, 1], [], []>} : vector<8x8xbf16>, vector<8x4xbf16>, vector<8x4xf32> -> vector<8x4xf32>
    %114 = vector.extract_strided_slice %41 {offsets = [0, 16], sizes = [8, 4], strides = [1, 1]} : vector<8x96xbf16> to vector<8x4xbf16>
    %115 = vector.extract_strided_slice %41 {offsets = [0, 48], sizes = [8, 4], strides = [1, 1]} : vector<8x96xbf16> to vector<8x4xbf16>
    %116 = vector.extract_strided_slice %41 {offsets = [0, 80], sizes = [8, 4], strides = [1, 1]} : vector<8x96xbf16> to vector<8x4xbf16>
    %cst_38 = arith.constant dense<0.000000e+00> : vector<8x8xf32>
    %117 = tpu.matmul %114, %115, %cst_38 {dimension_numbers = #tpu.dot_dimension_numbers<[1], [1], [0], [0], [0, 0, 1, 0], [], []>} : vector<8x4xbf16>, vector<8x4xbf16>, vector<8x8xf32> -> vector<8x8xf32>
    %cst_39 = arith.constant 5.000000e-01 : f32
    %118 = vector.broadcast %cst_39 : f32 to vector<8x8xf32>
    %119 = arith.mulf %117, %118 : vector<8x8xf32>
    %cst_40 = arith.constant dense<0xFF800000> : vector<8xf32>
    %120 = vector.multi_reduction <maximumf>, %119, %cst_40 [1] : vector<8x8xf32> to vector<8xf32>
    %121 = vector.shape_cast %120 : vector<8xf32> to vector<8x1xf32>
    %122 = vector.broadcast %121 : vector<8x1xf32> to vector<8x8xf32>
    %123 = arith.subf %119, %122 : vector<8x8xf32>
    %124 = math.exp %123 : vector<8x8xf32>
    %cst_41 = arith.constant dense<0.000000e+00> : vector<8xf32>
    %125 = vector.multi_reduction <add>, %124, %cst_41 [1] : vector<8x8xf32> to vector<8xf32>
    %126 = vector.shape_cast %125 : vector<8xf32> to vector<8x1xf32>
    %127 = tpu.reciprocal %126 {approx = true} : vector<8x1xf32> -> vector<8x1xf32>
    %128 = vector.broadcast %127 : vector<8x1xf32> to vector<8x8xf32>
    %129 = arith.mulf %124, %128 : vector<8x8xf32>
    %130 = arith.truncf %129 : vector<8x8xf32> to vector<8x8xbf16>
    %cst_42 = arith.constant dense<0.000000e+00> : vector<8x4xf32>
    %131 = tpu.matmul %130, %116, %cst_42 {dimension_numbers = #tpu.dot_dimension_numbers<[1], [0], [0], [1], [0, 0, 1, 1], [], []>} : vector<8x8xbf16>, vector<8x4xbf16>, vector<8x4xf32> -> vector<8x4xf32>
    %132 = vector.extract_strided_slice %41 {offsets = [0, 20], sizes = [8, 4], strides = [1, 1]} : vector<8x96xbf16> to vector<8x4xbf16>
    %133 = vector.extract_strided_slice %41 {offsets = [0, 52], sizes = [8, 4], strides = [1, 1]} : vector<8x96xbf16> to vector<8x4xbf16>
    %134 = vector.extract_strided_slice %41 {offsets = [0, 84], sizes = [8, 4], strides = [1, 1]} : vector<8x96xbf16> to vector<8x4xbf16>
    %cst_43 = arith.constant dense<0.000000e+00> : vector<8x8xf32>
    %135 = tpu.matmul %132, %133, %cst_43 {dimension_numbers = #tpu.dot_dimension_numbers<[1], [1], [0], [0], [0, 0, 1, 0], [], []>} : vector<8x4xbf16>, vector<8x4xbf16>, vector<8x8xf32> -> vector<8x8xf32>
    %cst_44 = arith.constant 5.000000e-01 : f32
    %136 = vector.broadcast %cst_44 : f32 to vector<8x8xf32>
    %137 = arith.mulf %135, %136 : vector<8x8xf32>
    %cst_45 = arith.constant dense<0xFF800000> : vector<8xf32>
    %138 = vector.multi_reduction <maximumf>, %137, %cst_45 [1] : vector<8x8xf32> to vector<8xf32>
    %139 = vector.shape_cast %138 : vector<8xf32> to vector<8x1xf32>
    %140 = vector.broadcast %139 : vector<8x1xf32> to vector<8x8xf32>
    %141 = arith.subf %137, %140 : vector<8x8xf32>
    %142 = math.exp %141 : vector<8x8xf32>
    %cst_46 = arith.constant dense<0.000000e+00> : vector<8xf32>
    %143 = vector.multi_reduction <add>, %142, %cst_46 [1] : vector<8x8xf32> to vector<8xf32>
    %144 = vector.shape_cast %143 : vector<8xf32> to vector<8x1xf32>
    %145 = tpu.reciprocal %144 {approx = true} : vector<8x1xf32> -> vector<8x1xf32>
    %146 = vector.broadcast %145 : vector<8x1xf32> to vector<8x8xf32>
    %147 = arith.mulf %142, %146 : vector<8x8xf32>
    %148 = arith.truncf %147 : vector<8x8xf32> to vector<8x8xbf16>
    %cst_47 = arith.constant dense<0.000000e+00> : vector<8x4xf32>
    %149 = tpu.matmul %148, %134, %cst_47 {dimension_numbers = #tpu.dot_dimension_numbers<[1], [0], [0], [1], [0, 0, 1, 1], [], []>} : vector<8x8xbf16>, vector<8x4xbf16>, vector<8x4xf32> -> vector<8x4xf32>
    %150 = vector.extract_strided_slice %41 {offsets = [0, 24], sizes = [8, 4], strides = [1, 1]} : vector<8x96xbf16> to vector<8x4xbf16>
    %151 = vector.extract_strided_slice %41 {offsets = [0, 56], sizes = [8, 4], strides = [1, 1]} : vector<8x96xbf16> to vector<8x4xbf16>
    %152 = vector.extract_strided_slice %41 {offsets = [0, 88], sizes = [8, 4], strides = [1, 1]} : vector<8x96xbf16> to vector<8x4xbf16>
    %cst_48 = arith.constant dense<0.000000e+00> : vector<8x8xf32>
    %153 = tpu.matmul %150, %151, %cst_48 {dimension_numbers = #tpu.dot_dimension_numbers<[1], [1], [0], [0], [0, 0, 1, 0], [], []>} : vector<8x4xbf16>, vector<8x4xbf16>, vector<8x8xf32> -> vector<8x8xf32>
    %cst_49 = arith.constant 5.000000e-01 : f32
    %154 = vector.broadcast %cst_49 : f32 to vector<8x8xf32>
    %155 = arith.mulf %153, %154 : vector<8x8xf32>
    %cst_50 = arith.constant dense<0xFF800000> : vector<8xf32>
    %156 = vector.multi_reduction <maximumf>, %155, %cst_50 [1] : vector<8x8xf32> to vector<8xf32>
    %157 = vector.shape_cast %156 : vector<8xf32> to vector<8x1xf32>
    %158 = vector.broadcast %157 : vector<8x1xf32> to vector<8x8xf32>
    %159 = arith.subf %155, %158 : vector<8x8xf32>
    %160 = math.exp %159 : vector<8x8xf32>
    %cst_51 = arith.constant dense<0.000000e+00> : vector<8xf32>
    %161 = vector.multi_reduction <add>, %160, %cst_51 [1] : vector<8x8xf32> to vector<8xf32>
    %162 = vector.shape_cast %161 : vector<8xf32> to vector<8x1xf32>
    %163 = tpu.reciprocal %162 {approx = true} : vector<8x1xf32> -> vector<8x1xf32>
    %164 = vector.broadcast %163 : vector<8x1xf32> to vector<8x8xf32>
    %165 = arith.mulf %160, %164 : vector<8x8xf32>
    %166 = arith.truncf %165 : vector<8x8xf32> to vector<8x8xbf16>
    %cst_52 = arith.constant dense<0.000000e+00> : vector<8x4xf32>
    %167 = tpu.matmul %166, %152, %cst_52 {dimension_numbers = #tpu.dot_dimension_numbers<[1], [0], [0], [1], [0, 0, 1, 1], [], []>} : vector<8x8xbf16>, vector<8x4xbf16>, vector<8x4xf32> -> vector<8x4xf32>
    %168 = vector.extract_strided_slice %41 {offsets = [0, 28], sizes = [8, 4], strides = [1, 1]} : vector<8x96xbf16> to vector<8x4xbf16>
    %169 = vector.extract_strided_slice %41 {offsets = [0, 60], sizes = [8, 4], strides = [1, 1]} : vector<8x96xbf16> to vector<8x4xbf16>
    %170 = vector.extract_strided_slice %41 {offsets = [0, 92], sizes = [8, 4], strides = [1, 1]} : vector<8x96xbf16> to vector<8x4xbf16>
    %cst_53 = arith.constant dense<0.000000e+00> : vector<8x8xf32>
    %171 = tpu.matmul %168, %169, %cst_53 {dimension_numbers = #tpu.dot_dimension_numbers<[1], [1], [0], [0], [0, 0, 1, 0], [], []>} : vector<8x4xbf16>, vector<8x4xbf16>, vector<8x8xf32> -> vector<8x8xf32>
    %cst_54 = arith.constant 5.000000e-01 : f32
    %172 = vector.broadcast %cst_54 : f32 to vector<8x8xf32>
    %173 = arith.mulf %171, %172 : vector<8x8xf32>
    %cst_55 = arith.constant dense<0xFF800000> : vector<8xf32>
    %174 = vector.multi_reduction <maximumf>, %173, %cst_55 [1] : vector<8x8xf32> to vector<8xf32>
    %175 = vector.shape_cast %174 : vector<8xf32> to vector<8x1xf32>
    %176 = vector.broadcast %175 : vector<8x1xf32> to vector<8x8xf32>
    %177 = arith.subf %173, %176 : vector<8x8xf32>
    %178 = math.exp %177 : vector<8x8xf32>
    %cst_56 = arith.constant dense<0.000000e+00> : vector<8xf32>
    %179 = vector.multi_reduction <add>, %178, %cst_56 [1] : vector<8x8xf32> to vector<8xf32>
    %180 = vector.shape_cast %179 : vector<8xf32> to vector<8x1xf32>
    %181 = tpu.reciprocal %180 {approx = true} : vector<8x1xf32> -> vector<8x1xf32>
    %182 = vector.broadcast %181 : vector<8x1xf32> to vector<8x8xf32>
    %183 = arith.mulf %178, %182 : vector<8x8xf32>
    %184 = arith.truncf %183 : vector<8x8xf32> to vector<8x8xbf16>
    %cst_57 = arith.constant dense<0.000000e+00> : vector<8x4xf32>
    %185 = tpu.matmul %184, %170, %cst_57 {dimension_numbers = #tpu.dot_dimension_numbers<[1], [0], [0], [1], [0, 0, 1, 1], [], []>} : vector<8x8xbf16>, vector<8x4xbf16>, vector<8x4xf32> -> vector<8x4xf32>
    %186 = tpu.concatenate %59, %77, %95, %113, %131, %149, %167, %185 in 1 : vector<8x4xf32>, vector<8x4xf32>, vector<8x4xf32>, vector<8x4xf32>, vector<8x4xf32>, vector<8x4xf32>, vector<8x4xf32>, vector<8x4xf32> -> vector<8x32xf32>
    %187 = arith.truncf %186 : vector<8x32xf32> to vector<8x32xbf16>
    %c0_58 = arith.constant 0 : index
    %c0_59 = arith.constant 0 : index
    %188 = vector.load %arg14[%c0_58, %c0_59] : memref<8x32xf32, #tpu.memory_space<vmem>>, vector<8x32xf32>
    %189 = arith.index_cast %36 : i32 to index
    %c0_60 = arith.constant 0 : index
    %c0_61 = arith.constant 0 : index
    %190 = vector.load %arg5[%189, %c0_60, %c0_61] : memref<1x32x32xbf16, #tpu.memory_space<vmem>>, vector<1x32x32xbf16>
    %191 = vector.shape_cast %190 : vector<1x32x32xbf16> to vector<32x32xbf16>
    %cst_62 = arith.constant dense<0.000000e+00> : vector<8x32xf32>
    %192 = tpu.matmul %187, %191, %cst_62 {dimension_numbers = #tpu.dot_dimension_numbers<[1], [0], [0], [1], [0, 0, 1, 1], [], []>} : vector<8x32xbf16>, vector<32x32xbf16>, vector<8x32xf32> -> vector<8x32xf32>
    %193 = arith.addf %188, %192 : vector<8x32xf32>
    %c0_63 = arith.constant 0 : index
    %c0_64 = arith.constant 0 : index
    %194 = vector.load %arg14[%c0_63, %c0_64] : memref<8x32xf32, #tpu.memory_space<vmem>>, vector<8x32xf32>
    tpu.vector_store %arg14[%c0_63, %c0_64], %193 {strides = array<i32>} : memref<8x32xf32, #tpu.memory_space<vmem>>, vector<8x32xf32>,
    %c1_i32_65 = arith.constant 1 : i32
    %c0_66 = arith.constant 0 : index
    %c0_67 = arith.constant 0 : index
    %195 = vector.load %arg14[%c0_66, %c0_67] : memref<8x32xf32, #tpu.memory_space<vmem>>, vector<8x32xf32>
    %c0_68 = arith.constant 0 : index
    %c0_69 = arith.constant 0 : index
    %196 = vector.load %arg7[%c0_68, %c0_69] : memref<1x32xf32, #tpu.memory_space<vmem>>, vector<1x32xf32>
    %197 = vector.shape_cast %196 : vector<1x32xf32> to vector<32xf32>
    %c0_70 = arith.constant 0 : index
    %c0_71 = arith.constant 0 : index
    %198 = vector.load %arg8[%c0_70, %c0_71] : memref<1x32xf32, #tpu.memory_space<vmem>>, vector<1x32xf32>
    %199 = vector.shape_cast %198 : vector<1x32xf32> to vector<32xf32>
    %cst_72 = arith.constant dense<0.000000e+00> : vector<8xf32>
    %200 = vector.multi_reduction <add>, %195, %cst_72 [1] : vector<8x32xf32> to vector<8xf32>
    %201 = vector.shape_cast %200 : vector<8xf32> to vector<8x1xf32>
    %cst_73 = arith.constant 3.200000e+01 : f32
    %202 = vector.broadcast %cst_73 : f32 to vector<8x1xf32>
    %203 = arith.divf %201, %202 : vector<8x1xf32>
    %204 = vector.broadcast %203 : vector<8x1xf32> to vector<8x32xf32>
    %205 = arith.subf %195, %204 : vector<8x32xf32>
    %206 = arith.mulf %205, %205 : vector<8x32xf32>
    %cst_74 = arith.constant dense<0.000000e+00> : vector<8xf32>
    %207 = vector.multi_reduction <add>, %206, %cst_74 [1] : vector<8x32xf32> to vector<8xf32>
    %208 = vector.shape_cast %207 : vector<8xf32> to vector<8x1xf32>
    %cst_75 = arith.constant 3.200000e+01 : f32
    %209 = vector.broadcast %cst_75 : f32 to vector<8x1xf32>
    %210 = arith.divf %208, %209 : vector<8x1xf32>
    %cst_76 = arith.constant 9.99999997E-7 : f32
    %211 = vector.broadcast %cst_76 : f32 to vector<8x1xf32>
    %212 = arith.addf %210, %211 : vector<8x1xf32>
    %213 = math.rsqrt %212 : vector<8x1xf32>
    %214 = vector.broadcast %213 : vector<8x1xf32> to vector<8x32xf32>
    %215 = arith.mulf %205, %214 : vector<8x32xf32>
    %216 = vector.shape_cast %197 : vector<32xf32> to vector<1x32xf32>
    %217 = vector.broadcast %216 : vector<1x32xf32> to vector<8x32xf32>
    %218 = arith.mulf %215, %217 : vector<8x32xf32>
    %219 = vector.shape_cast %199 : vector<32xf32> to vector<1x32xf32>
    %220 = vector.broadcast %219 : vector<1x32xf32> to vector<8x32xf32>
    %221 = arith.addf %218, %220 : vector<8x32xf32>
    %222 = arith.truncf %221 : vector<8x32xf32> to vector<8x32xbf16>
    %c0_77 = arith.constant 0 : index
    %c0_78 = arith.constant 0 : index
    %223 = vector.load %arg9[%c0_77, %c0_78] : memref<32x128xbf16, #tpu.memory_space<vmem>>, vector<32x128xbf16>
    %cst_79 = arith.constant dense<0.000000e+00> : vector<8x128xf32>
    %224 = tpu.matmul %222, %223, %cst_79 {dimension_numbers = #tpu.dot_dimension_numbers<[1], [0], [0], [1], [0, 0, 1, 1], [], []>} : vector<8x32xbf16>, vector<32x128xbf16>, vector<8x128xf32> -> vector<8x128xf32>
    %c0_80 = arith.constant 0 : index
    %c0_81 = arith.constant 0 : index
    %225 = vector.load %arg10[%c0_80, %c0_81] : memref<1x128xf32, #tpu.memory_space<vmem>>, vector<1x128xf32>
    %226 = vector.shape_cast %225 : vector<1x128xf32> to vector<128xf32>
    %227 = vector.shape_cast %226 : vector<128xf32> to vector<1x128xf32>
    %228 = vector.broadcast %227 : vector<1x128xf32> to vector<8x128xf32>
    %229 = arith.addf %224, %228 : vector<8x128xf32>
    %cst_82 = arith.constant 5.000000e-01 : f32
    %230 = vector.broadcast %cst_82 : f32 to vector<8x128xf32>
    %231 = arith.mulf %230, %229 : vector<8x128xf32>
    %cst_83 = arith.constant 0.707106769 : f32
    %232 = vector.broadcast %cst_83 : f32 to vector<8x128xf32>
    %233 = arith.mulf %229, %232 : vector<8x128xf32>
    %234 = math.absf %233 : vector<8x128xf32>
    %cst_84 = arith.constant 0.327591091 : f32
    %235 = vector.broadcast %cst_84 : f32 to vector<8x128xf32>
    %236 = arith.mulf %235, %234 : vector<8x128xf32>
    %cst_85 = arith.constant 1.000000e+00 : f32
    %237 = vector.broadcast %cst_85 : f32 to vector<8x128xf32>
    %238 = arith.addf %237, %236 : vector<8x128xf32>
    %239 = tpu.reciprocal %238 {approx = true} : vector<8x128xf32> -> vector<8x128xf32>
    %cst_86 = arith.constant 1.06140542 : f32
    %240 = vector.broadcast %cst_86 : f32 to vector<8x128xf32>
    %241 = arith.mulf %240, %239 : vector<8x128xf32>
    %cst_87 = arith.constant -1.45315206 : f32
    %242 = vector.broadcast %cst_87 : f32 to vector<8x128xf32>
    %243 = arith.addf %241, %242 : vector<8x128xf32>
    %244 = arith.mulf %243, %239 : vector<8x128xf32>
    %cst_88 = arith.constant 1.42141378 : f32
    %245 = vector.broadcast %cst_88 : f32 to vector<8x128xf32>
    %246 = arith.addf %244, %245 : vector<8x128xf32>
    %247 = arith.mulf %246, %239 : vector<8x128xf32>
    %cst_89 = arith.constant -0.284496725 : f32
    %248 = vector.broadcast %cst_89 : f32 to vector<8x128xf32>
    %249 = arith.addf %247, %248 : vector<8x128xf32>
    %250 = arith.mulf %249, %239 : vector<8x128xf32>
    %cst_90 = arith.constant 0.254829586 : f32
    %251 = vector.broadcast %cst_90 : f32 to vector<8x128xf32>
    %252 = arith.addf %250, %251 : vector<8x128xf32>
    %253 = arith.mulf %252, %239 : vector<8x128xf32>
    %cst_91 = arith.constant 0.000000e+00 : f32
    %254 = vector.broadcast %cst_91 : f32 to vector<8x128xf32>
    %255 = arith.subf %254, %234 : vector<8x128xf32>
    %256 = arith.mulf %255, %234 : vector<8x128xf32>
    %257 = math.exp %256 : vector<8x128xf32>
    %258 = arith.mulf %253, %257 : vector<8x128xf32>
    %cst_92 = arith.constant 1.000000e+00 : f32
    %259 = vector.broadcast %cst_92 : f32 to vector<8x128xf32>
    %260 = arith.subf %259, %258 : vector<8x128xf32>
    %cst_93 = arith.constant 0.000000e+00 : f32
    %261 = vector.broadcast %cst_93 : f32 to vector<8x128xf32>
    %262 = arith.cmpf oge, %233, %261 : vector<8x128xf32>
    %cst_94 = arith.constant 0.000000e+00 : f32
    %263 = vector.broadcast %cst_94 : f32 to vector<8x128xf32>
    %264 = arith.subf %263, %260 : vector<8x128xf32>
    %265 = arith.select %262, %260, %264 : vector<8x128xi1>, vector<8x128xf32>
    %cst_95 = arith.constant 1.000000e+00 : f32
    %266 = vector.broadcast %cst_95 : f32 to vector<8x128xf32>
    %267 = arith.addf %266, %265 : vector<8x128xf32>
    %268 = arith.mulf %231, %267 : vector<8x128xf32>
    %269 = arith.truncf %268 : vector<8x128xf32> to vector<8x128xbf16>
    %c0_96 = arith.constant 0 : index
    %c0_97 = arith.constant 0 : index
    %270 = vector.load %arg11[%c0_96, %c0_97] : memref<128x32xbf16, #tpu.memory_space<vmem>>, vector<128x32xbf16>
    %cst_98 = arith.constant dense<0.000000e+00> : vector<8x32xf32>
    %271 = tpu.matmul %269, %270, %cst_98 {dimension_numbers = #tpu.dot_dimension_numbers<[1], [0], [0], [1], [0, 0, 1, 1], [], []>} : vector<8x128xbf16>, vector<128x32xbf16>, vector<8x32xf32> -> vector<8x32xf32>
    %c0_99 = arith.constant 0 : index
    %c0_100 = arith.constant 0 : index
    %272 = vector.load %arg12[%c0_99, %c0_100] : memref<1x32xf32, #tpu.memory_space<vmem>>, vector<1x32xf32>
    %273 = vector.shape_cast %272 : vector<1x32xf32> to vector<32xf32>
    %274 = vector.shape_cast %273 : vector<32xf32> to vector<1x32xf32>
    %275 = vector.broadcast %274 : vector<1x32xf32> to vector<8x32xf32>
    %276 = arith.addf %271, %275 : vector<8x32xf32>
    %277 = arith.addf %195, %276 : vector<8x32xf32>
    %c0_101 = arith.constant 0 : index
    %c0_102 = arith.constant 0 : index
    %c0_103 = arith.constant 0 : index
    %278 = vector.load %arg13[%c0_101, %c0_102, %c0_103] : memref<1x8x32xf32, #tpu.memory_space<vmem>>, vector<1x8x32xf32>
    %279 = vector.shape_cast %278 : vector<1x8x32xf32> to vector<8x32xf32>
    %280 = vector.shape_cast %277 : vector<8x32xf32> to vector<1x8x32xf32>
    tpu.vector_store %arg13[%c0_101, %c0_102, %c0_103], %280 {strides = array<i32>} : memref<1x8x32xf32, #tpu.memory_space<vmem>>, vector<1x8x32xf32>,
    return
  }
  func.func @transform_0(%arg0: i32) -> (i32, i32, i32) {
    %c0_i32 = arith.constant 0 : i32
    %c0_i32_0 = arith.constant 0 : i32
    %c0_i32_1 = arith.constant 0 : i32
    return %arg0, %c0_i32, %c0_i32_0 : i32, i32, i32
  }
  func.func @transform_1(%arg0: i32) -> (i32, i32) {
    %c0_i32 = arith.constant 0 : i32
    %c0_i32_0 = arith.constant 0 : i32
    %c0_i32_1 = arith.constant 0 : i32
    return %c0_i32, %c0_i32_0 : i32, i32
  }
  func.func @transform_2(%arg0: i32) -> (i32, i32) {
    %c0_i32 = arith.constant 0 : i32
    %c0_i32_0 = arith.constant 0 : i32
    %c0_i32_1 = arith.constant 0 : i32
    return %c0_i32, %c0_i32_0 : i32, i32
  }
  func.func @transform_3(%arg0: i32) -> (i32, i32, i32) {
    %c0_i32 = arith.constant 0 : i32
    %c0_i32_0 = arith.constant 0 : i32
    %c0_i32_1 = arith.constant 0 : i32
    %c0_i32_2 = arith.constant 0 : i32
    return %c0_i32, %c0_i32_0, %c0_i32_1 : i32, i32, i32
  }
  func.func @transform_4(%arg0: i32) -> (i32, i32, i32) {
    %c0_i32 = arith.constant 0 : i32
    %c0_i32_0 = arith.constant 0 : i32
    %c0_i32_1 = arith.constant 0 : i32
    %c0_i32_2 = arith.constant 0 : i32
    return %c0_i32, %c0_i32_0, %c0_i32_1 : i32, i32, i32
  }
  func.func @transform_5(%arg0: i32) -> (i32, i32) {
    %c0_i32 = arith.constant 0 : i32
    %c0_i32_0 = arith.constant 0 : i32
    %c0_i32_1 = arith.constant 0 : i32
    return %c0_i32, %c0_i32_0 : i32, i32
  }
  func.func @transform_6(%arg0: i32) -> (i32, i32) {
    %c0_i32 = arith.constant 0 : i32
    %c0_i32_0 = arith.constant 0 : i32
    %c0_i32_1 = arith.constant 0 : i32
    return %c0_i32, %c0_i32_0 : i32, i32
  }
  func.func @transform_7(%arg0: i32) -> (i32, i32) {
    %c0_i32 = arith.constant 0 : i32
    %c0_i32_0 = arith.constant 0 : i32
    %c0_i32_1 = arith.constant 0 : i32
    return %c0_i32, %c0_i32_0 : i32, i32
  }
  func.func @transform_8(%arg0: i32) -> (i32, i32) {
    %c0_i32 = arith.constant 0 : i32
    %c0_i32_0 = arith.constant 0 : i32
    %c0_i32_1 = arith.constant 0 : i32
    return %c0_i32, %c0_i32_0 : i32, i32
  }
  func.func @transform_9(%arg0: i32) -> (i32, i32) {
    %c0_i32 = arith.constant 0 : i32
    %c0_i32_0 = arith.constant 0 : i32
    %c0_i32_1 = arith.constant 0 : i32
    return %c0_i32, %c0_i32_0 : i32, i32
  }
  func.func @transform_10(%arg0: i32) -> (i32, i32) {
    %c0_i32 = arith.constant 0 : i32
    %c0_i32_0 = arith.constant 0 : i32
    %c0_i32_1 = arith.constant 0 : i32
    return %c0_i32, %c0_i32_0 : i32, i32
  }
  func.func @transform_11(%arg0: i32) -> (i32, i32) {
    %c0_i32 = arith.constant 0 : i32
    %c0_i32_0 = arith.constant 0 : i32
    %c0_i32_1 = arith.constant 0 : i32
    return %c0_i32, %c0_i32_0 : i32, i32
  }
  func.func @transform_12(%arg0: i32) -> (i32, i32, i32) {
    %c0_i32 = arith.constant 0 : i32
    %c0_i32_0 = arith.constant 0 : i32
    %c0_i32_1 = arith.constant 0 : i32
    return %arg0, %c0_i32, %c0_i32_0 : i32, i32, i32
  }
}

</mosaic_0001>

<llo_original>
// kernel: tpu_custom_call.1
$region0: #{tpu_custom_call.1}
  #allocation0 [shape = 'u32[]', space=smem, size = 0x4, offset = 0x4, fixed_abs, tag = 'smem constant byte address 0x4 - core index']
  #allocation1 [shape = 'u32[72,128]{1,0:T(1,128)}', space=vmem, size = 0x9000, scoped, tag = 'internal scratch']
  #allocation2 [shape = 'f32[8,32]{1,0:T(8,128)}', space=vmem, size = 0x1000, scoped, tag = 'scratch operand']
  %s0 = inlined_call_operand.vmem [shape: f32[2,8,32], index: 0, kind: input, shape index: {}]
  %s1 = inlined_call_operand.vmem [shape: f32[1,32], index: 1, kind: input, shape index: {}]
  %s2 = inlined_call_operand.vmem [shape: f32[1,32], index: 2, kind: input, shape index: {}]
  %s3 = inlined_call_operand.vmem [shape: bf16[1,32,96], index: 3, kind: input, shape index: {}]
  %s4 = inlined_call_operand.vmem [shape: bf16[1,32,32], index: 4, kind: input, shape index: {}]
  %s5 = inlined_call_operand.vmem [shape: f32[1,32], index: 5, kind: input, shape index: {}]
  %s6 = inlined_call_operand.vmem [shape: f32[1,32], index: 6, kind: input, shape index: {}]
  %s7 = inlined_call_operand.vmem [shape: f32[1,32], index: 7, kind: input, shape index: {}]
  %s8 = inlined_call_operand.vmem [shape: bf16[32,128], index: 8, kind: input, shape index: {}]
  %s9 = inlined_call_operand.vmem [shape: f32[1,128], index: 9, kind: input, shape index: {}]
  %s10 = inlined_call_operand.vmem [shape: bf16[128,32], index: 10, kind: input, shape index: {}]
  %s11 = inlined_call_operand.vmem [shape: f32[1,32], index: 11, kind: input, shape index: {}]
  %s12 = inlined_call_operand.hbm [shape: f32[2,8,32], index: 12, kind: output, shape index: {}]
  %s13 = sld [smem:[#allocation0]]
  $region81: #{tpu_custom_call.1} parent=0
    _
  %s15 = ssub.s32 1, %s13
  %s16 = scalar_select 0, %s15, %s13
  $region1: #{tpu_custom_call.1} parent=0
    #allocation3 [shape = 'u8[8192]{0}', space=vmem, size = 0x2000, scoped, tag = 'output window, operand 0']
    #allocation4 [shape = 's32[2]{0}', space=sflag, size = 0x8, scoped, tag = 'scoped memory for tpu_custom_call.1']
    %17 = vsyncpa [#allocation4], 0
    %s18 = scalar_lea.sflag [#allocation4], 1
    %19 = vsyncpa %s18, 0
    loop: start=0, step=1, limit=4
    $region2: #{tpu_custom_call.1} parent=1 // loop_pre_header
      _
    $region3: #{tpu_custom_call.1} parent=1 // loop_header
      %s21 = sphi 0, %s25
      %p22 = scmp.ge.s32.totalorder %s21, 4
      %s31 = sphi 0, %s33
      %s34 = sphi 0, %s31
      %s35 = sphi 0, %s34
      %s51 = sphi 0, %s35
      %s55 = sphi 0, %s55
      %s57 = sphi 0, %s55
      %s58 = sphi 0, %s57
      %s72 = sphi 0, %s58
      %s76 = sphi 0, %s76
      %s78 = sphi 0, %s76
      %s79 = sphi 0, %s78
      %s93 = sphi 0, %s79
      %s97 = sphi 0, %s97
      %s99 = sphi 0, %s97
      %s100 = sphi 0, %s99
      %s114 = sphi 0, %s100
      %s118 = sphi 0, %s118
      %s120 = sphi 0, %s118
      %s121 = sphi 0, %s120
      %s135 = sphi 0, %s121
      %s139 = sphi 0, %s139
      %s141 = sphi 0, %s139
      %s142 = sphi 0, %s141
      %s156 = sphi 0, %s142
      %s160 = sphi 0, %s160
      %s162 = sphi 0, %s160
      %s163 = sphi 0, %s162
      %s177 = sphi 0, %s163
      %s181 = sphi 0, %s181
      %s183 = sphi 0, %s181
      %s184 = sphi 0, %s183
      %s198 = sphi 0, %s184
      %s202 = sphi 0, %s202
      %s204 = sphi 0, %s202
      %s205 = sphi 0, %s204
      %s219 = sphi 0, %s205
      %s223 = sphi 0, %s223
      %s225 = sphi 0, %s223
      %s226 = sphi 0, %s225
      %s240 = sphi 0, %s226
      %s244 = sphi 0, %s244
      %s246 = sphi 0, %s244
      %s247 = sphi 0, %s246
      %s261 = sphi 0, %s247
      %s265 = sphi 0, %s265
      %s267 = sphi 0, %s265
      %s268 = sphi 0, %s267
      %s282 = sphi 0, %s268
      %s288 = sphi 0, %s290
      %s291 = sphi 0, %s288
      %s292 = sphi 0, %s291
      %s308 = sphi 0, %s292
    $region4: #{tpu_custom_call.1} parent=1 // loop_header_branch
      %24 = sbr.rel (%p22) target = $region8
    $region5: #{tpu_custom_call.1} parent=1 // loop_body
      %s26 = ssub.s32 %s21, 1
      %s27 = ssub.s32 %s21, 2
      %s28 = sadd.s32 %s21, 1
      %s29 = ssub.s32 %s21, %s28
      %p30 = scmp.eq.s32.totalorder %s29, 0
      %s32 = sadd.s32 %s31, 1
      %s33 = scalar_select %p30, %s31, %s32
      %p36 = pneg %p30
      %p37 = scmp.eq.s32.totalorder %s21, 1
      %p38 = por %p36, %p37
      %p39 = scmp.ne.s32.totalorder %s31, %s34
      %p40 = scmp.eq.s32.totalorder %s21, 0
      %p41 = por %p39, %p40
      %p42 = scmp.ne.s32.totalorder %s31, %s34
      %p43 = scmp.eq.s32.totalorder %s26, 1
      %p44 = por %p42, %p43
      %p45 = scmp.ne.s32.totalorder %s34, %s35
      %p46 = scmp.eq.s32.totalorder %s26, 0
      %p47 = por %p45, %p46
      %p48 = scmp.ne.s32.totalorder %s34, %s35
      %p49 = scmp.eq.s32.totalorder %s27, 1
      %p50 = por %p48, %p49
      %p52 = scmp.ne.s32.totalorder %s35, %s51
      %p53 = scmp.eq.s32.totalorder %s27, 0
      %p54 = por %p52, %p53
      %s56 = sadd.s32 %s55, 1
      %p59 = scmp.eq.s32.totalorder %s21, 1
      %p60 = scmp.ne.s32.totalorder %s55, %s57
      %p61 = scmp.eq.s32.totalorder %s21, 0
      %p62 = por %p60, %p61
      %p63 = scmp.ne.s32.totalorder %s55, %s57
      %p64 = scmp.eq.s32.totalorder %s26, 1
      %p65 = por %p63, %p64
      %p66 = scmp.ne.s32.totalorder %s57, %s58
      %p67 = scmp.eq.s32.totalorder %s26, 0
      %p68 = por %p66, %p67
      %p69 = scmp.ne.s32.totalorder %s57, %s58
      %p70 = scmp.eq.s32.totalorder %s27, 1
      %p71 = por %p69, %p70
      %p73 = scmp.ne.s32.totalorder %s58, %s72
      %p74 = scmp.eq.s32.totalorder %s27, 0
      %p75 = por %p73, %p74
      %s77 = sadd.s32 %s76, 1
      %p80 = scmp.eq.s32.totalorder %s21, 1
      %p81 = scmp.ne.s32.totalorder %s76, %s78
      %p82 = scmp.eq.s32.totalorder %s21, 0
      %p83 = por %p81, %p82
      %p84 = scmp.ne.s32.totalorder %s76, %s78
      %p85 = scmp.eq.s32.totalorder %s26, 1
      %p86 = por %p84, %p85
      %p87 = scmp.ne.s32.totalorder %s78, %s79
      %p88 = scmp.eq.s32.totalorder %s26, 0
      %p89 = por %p87, %p88
      %p90 = scmp.ne.s32.totalorder %s78, %s79
      %p91 = scmp.eq.s32.totalorder %s27, 1
      %p92 = por %p90, %p91
      %p94 = scmp.ne.s32.totalorder %s79, %s93
      %p95 = scmp.eq.s32.totalorder %s27, 0
      %p96 = por %p94, %p95
      %s98 = sadd.s32 %s97, 1
      %p101 = scmp.eq.s32.totalorder %s21, 1
      %p102 = scmp.ne.s32.totalorder %s97, %s99
      %p103 = scmp.eq.s32.totalorder %s21, 0
      %p104 = por %p102, %p103
      %p105 = scmp.ne.s32.totalorder %s97, %s99
      %p106 = scmp.eq.s32.totalorder %s26, 1
      %p107 = por %p105, %p106
      %p108 = scmp.ne.s32.totalorder %s99, %s100
      %p109 = scmp.eq.s32.totalorder %s26, 0
      %p110 = por %p108, %p109
      %p111 = scmp.ne.s32.totalorder %s99, %s100
      %p112 = scmp.eq.s32.totalorder %s27, 1
      %p113 = por %p111, %p112
      %p115 = scmp.ne.s32.totalorder %s100, %s114
      %p116 = scmp.eq.s32.totalorder %s27, 0
      %p117 = por %p115, %p116
      %s119 = sadd.s32 %s118, 1
      %p122 = scmp.eq.s32.totalorder %s21, 1
      %p123 = scmp.ne.s32.totalorder %s118, %s120
      %p124 = scmp.eq.s32.totalorder %s21, 0
      %p125 = por %p123, %p124
      %p126 = scmp.ne.s32.totalorder %s118, %s120
      %p127 = scmp.eq.s32.totalorder %s26, 1
      %p128 = por %p126, %p127
      %p129 = scmp.ne.s32.totalorder %s120, %s121
      %p130 = scmp.eq.s32.totalorder %s26, 0
      %p131 = por %p129, %p130
      %p132 = scmp.ne.s32.totalorder %s120, %s121
      %p133 = scmp.eq.s32.totalorder %s27, 1
      %p134 = por %p132, %p133
      %p136 = scmp.ne.s32.totalorder %s121, %s135
      %p137 = scmp.eq.s32.totalorder %s27, 0
      %p138 = por %p136, %p137
      %s140 = sadd.s32 %s139, 1
      %p143 = scmp.eq.s32.totalorder %s21, 1
      %p144 = scmp.ne.s32.totalorder %s139, %s141
      %p145 = scmp.eq.s32.totalorder %s21, 0
      %p146 = por %p144, %p145
      %p147 = scmp.ne.s32.totalorder %s139, %s141
      %p148 = scmp.eq.s32.totalorder %s26, 1
      %p149 = por %p147, %p148
      %p150 = scmp.ne.s32.totalorder %s141, %s142
      %p151 = scmp.eq.s32.totalorder %s26, 0
      %p152 = por %p150, %p151
      %p153 = scmp.ne.s32.totalorder %s141, %s142
      %p154 = scmp.eq.s32.totalorder %s27, 1
      %p155 = por %p153, %p154
      %p157 = scmp.ne.s32.totalorder %s142, %s156
      %p158 = scmp.eq.s32.totalorder %s27, 0
      %p159 = por %p157, %p158
      %s161 = sadd.s32 %s160, 1
      %p164 = scmp.eq.s32.totalorder %s21, 1
      %p165 = scmp.ne.s32.totalorder %s160, %s162
      %p166 = scmp.eq.s32.totalorder %s21, 0
      %p167 = por %p165, %p166
      %p168 = scmp.ne.s32.totalorder %s160, %s162
      %p169 = scmp.eq.s32.totalorder %s26, 1
      %p170 = por %p168, %p169
      %p171 = scmp.ne.s32.totalorder %s162, %s163
      %p172 = scmp.eq.s32.totalorder %s26, 0
      %p173 = por %p171, %p172
      %p174 = scmp.ne.s32.totalorder %s162, %s163
      %p175 = scmp.eq.s32.totalorder %s27, 1
      %p176 = por %p174, %p175
      %p178 = scmp.ne.s32.totalorder %s163, %s177
      %p179 = scmp.eq.s32.totalorder %s27, 0
      %p180 = por %p178, %p179
      %s182 = sadd.s32 %s181, 1
      %p185 = scmp.eq.s32.totalorder %s21, 1
      %p186 = scmp.ne.s32.totalorder %s181, %s183
      %p187 = scmp.eq.s32.totalorder %s21, 0
      %p188 = por %p186, %p187
      %p189 = scmp.ne.s32.totalorder %s181, %s183
      %p190 = scmp.eq.s32.totalorder %s26, 1
      %p191 = por %p189, %p190
      %p192 = scmp.ne.s32.totalorder %s183, %s184
      %p193 = scmp.eq.s32.totalorder %s26, 0
      %p194 = por %p192, %p193
      %p195 = scmp.ne.s32.totalorder %s183, %s184
      %p196 = scmp.eq.s32.totalorder %s27, 1
      %p197 = por %p195, %p196
      %p199 = scmp.ne.s32.totalorder %s184, %s198
      %p200 = scmp.eq.s32.totalorder %s27, 0
      %p201 = por %p199, %p200
      %s203 = sadd.s32 %s202, 1
      %p206 = scmp.eq.s32.totalorder %s21, 1
      %p207 = scmp.ne.s32.totalorder %s202, %s204
      %p208 = scmp.eq.s32.totalorder %s21, 0
      %p209 = por %p207, %p208
      %p210 = scmp.ne.s32.totalorder %s202, %s204
      %p211 = scmp.eq.s32.totalorder %s26, 1
      %p212 = por %p210, %p211
      %p213 = scmp.ne.s32.totalorder %s204, %s205
      %p214 = scmp.eq.s32.totalorder %s26, 0
      %p215 = por %p213, %p214
      %p216 = scmp.ne.s32.totalorder %s204, %s205
      %p217 = scmp.eq.s32.totalorder %s27, 1
      %p218 = por %p216, %p217
      %p220 = scmp.ne.s32.totalorder %s205, %s219
      %p221 = scmp.eq.s32.totalorder %s27, 0
      %p222 = por %p220, %p221
      %s224 = sadd.s32 %s223, 1
      %p227 = scmp.eq.s32.totalorder %s21, 1
      %p228 = scmp.ne.s32.totalorder %s223, %s225
      %p229 = scmp.eq.s32.totalorder %s21, 0
      %p230 = por %p228, %p229
      %p231 = scmp.ne.s32.totalorder %s223, %s225
      %p232 = scmp.eq.s32.totalorder %s26, 1
      %p233 = por %p231, %p232
      %p234 = scmp.ne.s32.totalorder %s225, %s226
      %p235 = scmp.eq.s32.totalorder %s26, 0
      %p236 = por %p234, %p235
      %p237 = scmp.ne.s32.totalorder %s225, %s226
      %p238 = scmp.eq.s32.totalorder %s27, 1
      %p239 = por %p237, %p238
      %p241 = scmp.ne.s32.totalorder %s226, %s240
      %p242 = scmp.eq.s32.totalorder %s27, 0
      %p243 = por %p241, %p242
      %s245 = sadd.s32 %s244, 1
      %p248 = scmp.eq.s32.totalorder %s21, 1
      %p249 = scmp.ne.s32.totalorder %s244, %s246
      %p250 = scmp.eq.s32.totalorder %s21, 0
      %p251 = por %p249, %p250
      %p252 = scmp.ne.s32.totalorder %s244, %s246
      %p253 = scmp.eq.s32.totalorder %s26, 1
      %p254 = por %p252, %p253
      %p255 = scmp.ne.s32.totalorder %s246, %s247
      %p256 = scmp.eq.s32.totalorder %s26, 0
      %p257 = por %p255, %p256
      %p258 = scmp.ne.s32.totalorder %s246, %s247
      %p259 = scmp.eq.s32.totalorder %s27, 1
      %p260 = por %p258, %p259
      %p262 = scmp.ne.s32.totalorder %s247, %s261
      %p263 = scmp.eq.s32.totalorder %s27, 0
      %p264 = por %p262, %p263
      %s266 = sadd.s32 %s265, 1
      %p269 = scmp.eq.s32.totalorder %s21, 1
      %p270 = scmp.ne.s32.totalorder %s265, %s267
      %p271 = scmp.eq.s32.totalorder %s21, 0
      %p272 = por %p270, %p271
      %p273 = scmp.ne.s32.totalorder %s265, %s267
      %p274 = scmp.eq.s32.totalorder %s26, 1
      %p275 = por %p273, %p274
      %p276 = scmp.ne.s32.totalorder %s267, %s268
      %p277 = scmp.eq.s32.totalorder %s26, 0
      %p278 = por %p276, %p277
      %p279 = scmp.ne.s32.totalorder %s267, %s268
      %p280 = scmp.eq.s32.totalorder %s27, 1
      %p281 = por %p279, %p280
      %p283 = scmp.ne.s32.totalorder %s268, %s282
      %p284 = scmp.eq.s32.totalorder %s27, 0
      %p285 = por %p283, %p284
      %s286 = ssub.s32 %s21, %s28
      %p287 = scmp.eq.s32.totalorder %s286, 0
      %s289 = sadd.s32 %s288, 1
      %s290 = scalar_select %p287, %s288, %s289
      %p293 = pneg %p287
      %p294 = scmp.eq.s32.totalorder %s21, 1
      %p295 = por %p293, %p294
      %p296 = scmp.ne.s32.totalorder %s288, %s291
      %p297 = scmp.eq.s32.totalorder %s21, 0
      %p298 = por %p296, %p297
      %p299 = scmp.ne.s32.totalorder %s288, %s291
      %p300 = scmp.eq.s32.totalorder %s26, 1
      %p301 = por %p299, %p300
      %p302 = scmp.ne.s32.totalorder %s291, %s292
      %p303 = scmp.eq.s32.totalorder %s26, 0
      %p304 = por %p302, %p303
      %p305 = scmp.ne.s32.totalorder %s291, %s292
      %p306 = scmp.eq.s32.totalorder %s27, 1
      %p307 = por %p305, %p306
      %p309 = scmp.ne.s32.totalorder %s292, %s308
      %p310 = scmp.eq.s32.totalorder %s27, 0
      %p311 = por %p309, %p310
      %p312 = scmp.le.s32.totalorder 1, %s21
      %p313 = scmp.lt.s32.totalorder %s21, 3
      %p314 = pnand %p312, %p313
      %p315 = pneg %p314
      // Predicated region
      $region9: #{tpu_custom_call.1} parent=5 // pred_check
        _
      $region10: #{tpu_custom_call.1} parent=5 // pred_check_branch
        %317 = sbr.rel (%p314) target = $region12
      $region11: #{tpu_custom_call.1} parent=5 // pred_region
        %s318 = ssub.s32 %s21, 1
        // Predicated region
        $region13: #{tpu_custom_call.1} parent=11 // pred_check
          %p319 = pneg %p68
        $region14: #{tpu_custom_call.1} parent=11 // pred_check_branch
          %321 = sbr.rel (%p319) target = $region16
        $region15: #{tpu_custom_call.1} parent=11 // pred_region
          _
        $region16: #{tpu_custom_call.1} parent=11 // pred_fallthru
          _
        // Predicated region
        $region17: #{tpu_custom_call.1} parent=11 // pred_check
          %p322 = pneg %p89
        $region18: #{tpu_custom_call.1} parent=11 // pred_check_branch
          %324 = sbr.rel (%p322) target = $region20
        $region19: #{tpu_custom_call.1} parent=11 // pred_region
          _
        $region20: #{tpu_custom_call.1} parent=11 // pred_fallthru
          _
        // Predicated region
        $region21: #{tpu_custom_call.1} parent=11 // pred_check
          %p325 = pneg %p110
        $region22: #{tpu_custom_call.1} parent=11 // pred_check_branch
          %327 = sbr.rel (%p325) target = $region24
        $region23: #{tpu_custom_call.1} parent=11 // pred_region
          _
        $region24: #{tpu_custom_call.1} parent=11 // pred_fallthru
          _
        // Predicated region
        $region25: #{tpu_custom_call.1} parent=11 // pred_check
          %p328 = pneg %p131
        $region26: #{tpu_custom_call.1} parent=11 // pred_check_branch
          %330 = sbr.rel (%p328) target = $region28
        $region27: #{tpu_custom_call.1} parent=11 // pred_region
          _
        $region28: #{tpu_custom_call.1} parent=11 // pred_fallthru
          _
        // Predicated region
        $region29: #{tpu_custom_call.1} parent=11 // pred_check
          %p331 = pneg %p152
        $region30: #{tpu_custom_call.1} parent=11 // pred_check_branch
          %333 = sbr.rel (%p331) target = $region32
        $region31: #{tpu_custom_call.1} parent=11 // pred_region
          _
        $region32: #{tpu_custom_call.1} parent=11 // pred_fallthru
          _
        // Predicated region
        $region33: #{tpu_custom_call.1} parent=11 // pred_check
          %p334 = pneg %p173
        $region34: #{tpu_custom_call.1} parent=11 // pred_check_branch
          %336 = sbr.rel (%p334) target = $region36
        $region35: #{tpu_custom_call.1} parent=11 // pred_region
          _
        $region36: #{tpu_custom_call.1} parent=11 // pred_fallthru
          _
        // Predicated region
        $region37: #{tpu_custom_call.1} parent=11 // pred_check
          %p337 = pneg %p194
        $region38: #{tpu_custom_call.1} parent=11 // pred_check_branch
          %339 = sbr.rel (%p337) target = $region40
        $region39: #{tpu_custom_call.1} parent=11 // pred_region
          _
        $region40: #{tpu_custom_call.1} parent=11 // pred_fallthru
          _
        // Predicated region
        $region41: #{tpu_custom_call.1} parent=11 // pred_check
          %p340 = pneg %p215
        $region42: #{tpu_custom_call.1} parent=11 // pred_check_branch
          %342 = sbr.rel (%p340) target = $region44
        $region43: #{tpu_custom_call.1} parent=11 // pred_region
          _
        $region44: #{tpu_custom_call.1} parent=11 // pred_fallthru
          _
        // Predicated region
        $region45: #{tpu_custom_call.1} parent=11 // pred_check
          %p343 = pneg %p236
        $region46: #{tpu_custom_call.1} parent=11 // pred_check_branch
          %345 = sbr.rel (%p343) target = $region48
        $region47: #{tpu_custom_call.1} parent=11 // pred_region
          _
        $region48: #{tpu_custom_call.1} parent=11 // pred_fallthru
          _
        // Predicated region
        $region49: #{tpu_custom_call.1} parent=11 // pred_check
          %p346 = pneg %p257
        $region50: #{tpu_custom_call.1} parent=11 // pred_check_branch
          %348 = sbr.rel (%p346) target = $region52
        $region51: #{tpu_custom_call.1} parent=11 // pred_region
          _
        $region52: #{tpu_custom_call.1} parent=11 // pred_fallthru
          _
        // Predicated region
        $region53: #{tpu_custom_call.1} parent=11 // pred_check
          %p349 = pneg %p278
        $region54: #{tpu_custom_call.1} parent=11 // pred_check_branch
          %351 = sbr.rel (%p349) target = $region56
        $region55: #{tpu_custom_call.1} parent=11 // pred_region
          _
        $region56: #{tpu_custom_call.1} parent=11 // pred_fallthru
          _
      $region12: #{tpu_custom_call.1} parent=5 // pred_fallthru
        _
      %p352 = scmp.lt.s32.totalorder %s21, 2
      // Predicated region
      $region57: #{tpu_custom_call.1} parent=5 // pred_check
        %p353 = pneg %p352
      $region58: #{tpu_custom_call.1} parent=5 // pred_check_branch
        %355 = sbr.rel (%p353) target = $region60
      $region59: #{tpu_custom_call.1} parent=5 // pred_region
        // Predicated region
        $region61: #{tpu_custom_call.1} parent=59 // pred_check
          %p356 = pneg %p41
        $region62: #{tpu_custom_call.1} parent=59 // pred_check_branch
          %358 = sbr.rel (%p356) target = $region64
        $region63: #{tpu_custom_call.1} parent=59 // pred_region
          %p359 = scmp.lt.s32.totalorder %s21, 1
          %s360 = scalar_select %p359, %s21, 1
          %s361 = smul.addr %s360, 8
          %s362 = scalar_lea.vmem %s0, %s361
        $region64: #{tpu_custom_call.1} parent=59 // pred_fallthru
          _
      $region60: #{tpu_custom_call.1} parent=5 // pred_fallthru
        _
      %p363 = scmp.le.s32.totalorder 1, %s21
      %p364 = scmp.lt.s32.totalorder %s21, 3
      %p365 = pnand %p363, %p364
      %p366 = pneg %p365
      // Predicated region
      $region65: #{tpu_custom_call.1} parent=5 // pred_check
        _
      $region66: #{tpu_custom_call.1} parent=5 // pred_check_branch
        %368 = sbr.rel (%p365) target = $region68
      $region67: #{tpu_custom_call.1} parent=5 // pred_region
        %s369 = ssub.s32 %s21, 1
        %p370 = scmp.lt.s32.totalorder %s26, 1
        %s371 = scalar_select %p370, %s26, 1
        %s372 = smul.addr %s371, 8
        %s373 = scalar_lea.vmem %s0, %s372
        %p374 = pneg %p47
        %p375 = pneg %p44
        %p376 = pneg %p68
        %p377 = pneg %p65
        %p378 = pneg %p89
        %p379 = pneg %p86
        %p380 = pneg %p110
        %p381 = pneg %p107
        %p382 = pneg %p131
        %p383 = pneg %p128
        %p384 = pneg %p152
        %p385 = pneg %p149
        %p386 = pneg %p173
        %p387 = pneg %p170
        %p388 = pneg %p194
        %p389 = pneg %p191
        %p390 = pneg %p215
        %p391 = pneg %p212
        %p392 = pneg %p236
        %p393 = pneg %p233
        %p394 = pneg %p257
        %p395 = pneg %p254
        %p396 = pneg %p278
        %p397 = pneg %p275
        %p398 = pneg %p304
        %p399 = pneg %p301
        %s400 = sand.u32 %s291, 1
        %s401 = scalar_lea.sflag [#allocation4], %s400
        %s402 = sand.u32 %s291, 1
        %s403 = smul.addr %s402, 8
        %s404 = scalar_lea.vmem [#allocation3], %s403
        %p405 = scmp.lt.s32.totalorder %s26, 1
        %s406 = scalar_select %p405, %s26, 1
        %s407 = smul.addr %s406, 8
        %s408 = scalar_lea.vmem %s0, %s407
        %v410 = vld [vmem:[%s408] sm:$0xff]
        %v411 = vld [vmem:[%s1] sm:$0x1]
        %v412 = vld [vmem:[%s2] sm:$0x1]
        %vm413 = vcmask 261120
        %v414 = vsel %vm413, %v410, 0.0
        %415 = vadd.xlane.f32.xlu0 %v414
        %v416 = vpop.xlane.xlu0 %415
        %v417 = vrcp.pop 32.0
        %v418 = vmul.f32 32.0, %v417
        %v419 = vsub.f32 1.0, %v418
        %v420 = vmul.f32 %v417, %v419
        %v421 = vadd.f32 %v417, %v420
        %vm422 = vweird.f32 %v417
        %v423 = vsel %vm422, %v417, %v421
        %v424 = vmul.f32 %v416, %v423
        %v425 = vsub.f32 %v410, %v424
        %v426 = vmul.f32 %v425, %v425
        %v427 = vsel %vm413, %v426, 0.0
        %428 = vadd.xlane.f32.xlu0 %v427
        %v429 = vpop.xlane.xlu0 %428
        %v430 = vmul.f32 %v429, %v423
        %v431 = vadd.f32 %v430, 1e-06
        %v432 = vrsqrt.pop %v431
        %v433 = vmul.f32 %v432, %v431
        %v434 = vmul.f32 %v433, %v432
        %v435 = vmul.f32 0.5, %v434
        %v436 = vsub.f32 1.5, %v435
        %v437 = vmul.f32 %v432, %v436
        %vm438 = vweird.f32 %v431
        %vm439 = vweird.f32 %v432
        %vm440 = vmor %vm438, %vm439
        %v441 = vsel %vm440, %v432, %v437
        %v442 = vmul.f32 %v425, %v441
        %v444 = vperm.slane %v411, 0
        %v446 = vmul.f32 %v442, %v444
        %v448 = vperm.slane %v412, 0
        %v450 = vadd.f32 %v446, %v448
        %v451 = vpack.c.bf16 %v450, %v450
        %v452 = vld [vmem:[%s5] sm:$0x1]
        %v454 = vperm.slane %v452, 0
        %v456 = vadd.f32 %v410, %v454
        %457 = vst.msk [vmem:[#allocation2] sm:$0xff] %vm413, %v456
        %v458 = vld [vmem:[%s3] sm:$0xf]
        %v459 = vld [vmem:[%s3 + $0x4] sm:$0xf]
        %v460 = vld [vmem:[%s3 + $0x8] sm:$0xf]
        %v461 = vld [vmem:[%s3 + $0xc] sm:$0xf]
        %v466 = vunpack.c.l.b16 %v458
        %v467 = vunpack.c.l.b16 %v459
        %v468 = vunpack.c.l.b16 %v460
        %v469 = vunpack.c.l.b16 %v461
        %v470 = vpack.c.b16 %v467, %v466
        %v471 = vpack.c.b16 %v469, %v468
        %v475 = vsel %vm413, %v451, 0
        %477 = vmatpush.bf16.msra.mxu0 0
        %478 = vmatpush.bf16.msra.mxu0 0
        %479 = vmatpush.bf16.msra.mxu0 0
        %480 = vmatpush.bf16.msra.mxu0 0
        %481 = vmatpush.bf16.msra.mxu0 0
        %482 = vmatpush.bf16.msra.mxu0 0
        %483 = vmatpush.bf16.msra.mxu0 %v471
        %484 = vmatpush.bf16.msra.mxu0 %v470
        %485 = vmatmul.bf16.gmra.mxu0 %v475
        %v486 = vpop.f32.mrf.mxu0
        %v487 = vadd.f32 0.0, %v486
        %v488 = vpop.f32.mrf.mxu0
        %489 = vdwg.mxu0
        %v490 = vpack.c.bf16 %v487, %v487
        %v492 = vunpack.c.l.b16 %v490
        %v493 = vpack.c.b16 %v492, %v492
        %494 = vrot.lane.b32.xlu0 %v493, 96
        %v495 = vpop.permute.xlu0 %494
        %vm496 = vcmask 31744
        %v498 = vsel %vm496, %v490, 0
        %v501 = vsel %vm496, %v495, 0
        %503 = vmatpush.bf16.xpose.msra.mxu0 0
        %504 = vmatpush.bf16.xpose.msra.mxu0 0
        %505 = vmatpush.bf16.xpose.msra.mxu0 0
        %506 = vmatpush.bf16.xpose.msra.mxu0 0
        %507 = vmatpush.bf16.xpose.msra.mxu0 0
        %508 = vmatpush.bf16.xpose.msra.mxu0 0
        %509 = vmatpush.bf16.xpose.msra.mxu0 0
        %510 = vmatpush.bf16.xpose.msra.mxu0 %v501
        %511 = vmatmul.bf16.gmra.mxu0 %v498
        %v512 = vpop.f32.mrf.mxu0
        %v513 = vadd.f32 0.0, %v512
        %v514 = vpop.f32.mrf.mxu0
        %515 = vdwg.mxu0
        %v516 = vmul.f32 %v513, 0.5
        %vm517 = vcmask 64512
        %v518 = vsel %vm517, %v516, -inf
        %519 = vmax.xlane.f32.xlu0 %v518
        %v520 = vpop.xlane.xlu0 %519
        %v521 = vsub.f32 %v516, %v520
        %v522 = vmul.f32 %v521, 1.442695
        %v523 = vpow.pop %v522
        %v524 = vsel %vm517, %v523, 0.0
        %525 = vadd.xlane.f32.xlu0 %v524
        %v526 = vpop.xlane.xlu0 %525
        %v527 = vrcp.pop %v526
        %v528 = vmul.f32 %v523, %v527
        %v529 = vpack.c.bf16 %v528, %v528
        %530 = vrot.lane.b32.xlu0 %v493, 64
        %v531 = vpop.permute.xlu0 %530
        %v533 = vsel %vm517, %v529, 0
        %vm535 = vcmask 1043456
        %v537 = vsel %vm535, %v531, 0
        %539 = vmatpush.bf16.msra.mxu0 0
        %540 = vmatpush.bf16.msra.mxu0 0
        %541 = vmatpush.bf16.msra.mxu0 0
        %542 = vmatpush.bf16.msra.mxu0 0
        %543 = vmatpush.bf16.msra.mxu0 0
        %544 = vmatpush.bf16.msra.mxu0 0
        %545 = vmatpush.bf16.msra.mxu0 0
        %546 = vmatpush.bf16.msra.mxu0 %v537
        %547 = vmatmul.bf16.gmra.mxu0 %v533
        %v548 = vpop.f32.mrf.mxu0
        %v549 = vadd.f32 0.0, %v548
        %v550 = vpop.f32.mrf.mxu0
        %551 = vdwg.mxu0
        %552 = vrot.lane.b32.xlu0 %v493, 124
        %v553 = vpop.permute.xlu0 %552
        %554 = vrot.lane.b32.xlu0 %v493, 92
        %v555 = vpop.permute.xlu0 %554
        %v557 = vsel %vm496, %v553, 0
        %v560 = vsel %vm496, %v555, 0
        %562 = vmatpush.bf16.xpose.msra.mxu0 0
        %563 = vmatpush.bf16.xpose.msra.mxu0 0
        %564 = vmatpush.bf16.xpose.msra.mxu0 0
        %565 = vmatpush.bf16.xpose.msra.mxu0 0
        %566 = vmatpush.bf16.xpose.msra.mxu0 0
        %567 = vmatpush.bf16.xpose.msra.mxu0 0
        %568 = vmatpush.bf16.xpose.msra.mxu0 0
        %569 = vmatpush.bf16.xpose.msra.mxu0 %v560
        %570 = vmatmul.bf16.gmra.mxu0 %v557
        %v571 = vpop.f32.mrf.mxu0
        %v572 = vadd.f32 0.0, %v571
        %v573 = vpop.f32.mrf.mxu0
        %574 = vdwg.mxu0
        %v575 = vmul.f32 %v572, 0.5
        %v576 = vsel %vm517, %v575, -inf
        %577 = vmax.xlane.f32.xlu0 %v576
        %v578 = vpop.xlane.xlu0 %577
        %v579 = vsub.f32 %v575, %v578
        %v580 = vmul.f32 %v579, 1.442695
        %v581 = vpow.pop %v580
        %v582 = vsel %vm517, %v581, 0.0
        %583 = vadd.xlane.f32.xlu0 %v582
        %v584 = vpop.xlane.xlu0 %583
        %v585 = vrcp.pop %v584
        %v586 = vmul.f32 %v581, %v585
        %v587 = vpack.c.bf16 %v586, %v586
        %588 = vrot.lane.b32.xlu0 %v493, 60
        %v589 = vpop.permute.xlu0 %588
        %v591 = vsel %vm517, %v587, 0
        %v594 = vsel %vm535, %v589, 0
        %596 = vmatpush.bf16.msra.mxu0 0
        %597 = vmatpush.bf16.msra.mxu0 0
        %598 = vmatpush.bf16.msra.mxu0 0
        %599 = vmatpush.bf16.msra.mxu0 0
        %600 = vmatpush.bf16.msra.mxu0 0
        %601 = vmatpush.bf16.msra.mxu0 0
        %602 = vmatpush.bf16.msra.mxu0 0
        %603 = vmatpush.bf16.msra.mxu0 %v594
        %604 = vmatmul.bf16.gmra.mxu0 %v591
        %v605 = vpop.f32.mrf.mxu0
        %v606 = vadd.f32 0.0, %v605
        %v607 = vpop.f32.mrf.mxu0
        %608 = vdwg.mxu0
        %609 = vrot.lane.b32.xlu0 %v493, 120
        %v610 = vpop.permute.xlu0 %609
        %611 = vrot.lane.b32.xlu0 %v493, 88
        %v612 = vpop.permute.xlu0 %611
        %v614 = vsel %vm496, %v610, 0
        %v617 = vsel %vm496, %v612, 0
        %619 = vmatpush.bf16.xpose.msra.mxu0 0
        %620 = vmatpush.bf16.xpose.msra.mxu0 0
        %621 = vmatpush.bf16.xpose.msra.mxu0 0
        %622 = vmatpush.bf16.xpose.msra.mxu0 0
        %623 = vmatpush.bf16.xpose.msra.mxu0 0
        %624 = vmatpush.bf16.xpose.msra.mxu0 0
        %625 = vmatpush.bf16.xpose.msra.mxu0 0
        %626 = vmatpush.bf16.xpose.msra.mxu0 %v617
        %627 = vmatmul.bf16.gmra.mxu0 %v614
        %v628 = vpop.f32.mrf.mxu0
        %v629 = vadd.f32 0.0, %v628
        %v630 = vpop.f32.mrf.mxu0
        %631 = vdwg.mxu0
        %v632 = vmul.f32 %v629, 0.5
        %v633 = vsel %vm517, %v632, -inf
        %634 = vmax.xlane.f32.xlu0 %v633
        %v635 = vpop.xlane.xlu0 %634
        %v636 = vsub.f32 %v632, %v635
        %v637 = vmul.f32 %v636, 1.442695
        %v638 = vpow.pop %v637
        %v639 = vsel %vm517, %v638, 0.0
        %640 = vadd.xlane.f32.xlu0 %v639
        %v641 = vpop.xlane.xlu0 %640
        %v642 = vrcp.pop %v641
        %v643 = vmul.f32 %v638, %v642
        %v644 = vpack.c.bf16 %v643, %v643
        %645 = vrot.lane.b32.xlu0 %v493, 56
        %v646 = vpop.permute.xlu0 %645
        %v648 = vsel %vm517, %v644, 0
        %v651 = vsel %vm535, %v646, 0
        %653 = vmatpush.bf16.msra.mxu0 0
        %654 = vmatpush.bf16.msra.mxu0 0
        %655 = vmatpush.bf16.msra.mxu0 0
        %656 = vmatpush.bf16.msra.mxu0 0
        %657 = vmatpush.bf16.msra.mxu0 0
        %658 = vmatpush.bf16.msra.mxu0 0
        %659 = vmatpush.bf16.msra.mxu0 0
        %660 = vmatpush.bf16.msra.mxu0 %v651
        %661 = vmatmul.bf16.gmra.mxu0 %v648
        %v662 = vpop.f32.mrf.mxu0
        %v663 = vadd.f32 0.0, %v662
        %v664 = vpop.f32.mrf.mxu0
        %665 = vdwg.mxu0
        %666 = vrot.lane.b32.xlu0 %v493, 116
        %v667 = vpop.permute.xlu0 %666
        %668 = vrot.lane.b32.xlu0 %v493, 84
        %v669 = vpop.permute.xlu0 %668
        %v671 = vsel %vm496, %v667, 0
        %v674 = vsel %vm496, %v669, 0
        %676 = vmatpush.bf16.xpose.msra.mxu0 0
        %677 = vmatpush.bf16.xpose.msra.mxu0 0
        %678 = vmatpush.bf16.xpose.msra.mxu0 0
        %679 = vmatpush.bf16.xpose.msra.mxu0 0
        %680 = vmatpush.bf16.xpose.msra.mxu0 0
        %681 = vmatpush.bf16.xpose.msra.mxu0 0
        %682 = vmatpush.bf16.xpose.msra.mxu0 0
        %683 = vmatpush.bf16.xpose.msra.mxu0 %v674
        %684 = vmatmul.bf16.gmra.mxu0 %v671
        %v685 = vpop.f32.mrf.mxu0
        %v686 = vadd.f32 0.0, %v685
        %v687 = vpop.f32.mrf.mxu0
        %688 = vdwg.mxu0
        %v689 = vmul.f32 %v686, 0.5
        %v690 = vsel %vm517, %v689, -inf
        %691 = vmax.xlane.f32.xlu0 %v690
        %v692 = vpop.xlane.xlu0 %691
        %v693 = vsub.f32 %v689, %v692
        %v694 = vmul.f32 %v693, 1.442695
        %v695 = vpow.pop %v694
        %v696 = vsel %vm517, %v695, 0.0
        %697 = vadd.xlane.f32.xlu0 %v696
        %v698 = vpop.xlane.xlu0 %697
        %v699 = vrcp.pop %v698
        %v700 = vmul.f32 %v695, %v699
        %v701 = vpack.c.bf16 %v700, %v700
        %702 = vrot.lane.b32.xlu0 %v493, 52
        %v703 = vpop.permute.xlu0 %702
        %v705 = vsel %vm517, %v701, 0
        %v708 = vsel %vm535, %v703, 0
        %710 = vmatpush.bf16.msra.mxu0 0
        %711 = vmatpush.bf16.msra.mxu0 0
        %712 = vmatpush.bf16.msra.mxu0 0
        %713 = vmatpush.bf16.msra.mxu0 0
        %714 = vmatpush.bf16.msra.mxu0 0
        %715 = vmatpush.bf16.msra.mxu0 0
        %716 = vmatpush.bf16.msra.mxu0 0
        %717 = vmatpush.bf16.msra.mxu0 %v708
        %718 = vmatmul.bf16.gmra.mxu0 %v705
        %v719 = vpop.f32.mrf.mxu0
        %v720 = vadd.f32 0.0, %v719
        %v721 = vpop.f32.mrf.mxu0
        %722 = vdwg.mxu0
        %723 = vrot.lane.b32.xlu0 %v493, 112
        %v724 = vpop.permute.xlu0 %723
        %725 = vrot.lane.b32.xlu0 %v493, 80
        %v726 = vpop.permute.xlu0 %725
        %v728 = vsel %vm496, %v724, 0
        %v731 = vsel %vm496, %v726, 0
        %733 = vmatpush.bf16.xpose.msra.mxu0 0
        %734 = vmatpush.bf16.xpose.msra.mxu0 0
        %735 = vmatpush.bf16.xpose.msra.mxu0 0
        %736 = vmatpush.bf16.xpose.msra.mxu0 0
        %737 = vmatpush.bf16.xpose.msra.mxu0 0
        %738 = vmatpush.bf16.xpose.msra.mxu0 0
        %739 = vmatpush.bf16.xpose.msra.mxu0 0
        %740 = vmatpush.bf16.xpose.msra.mxu0 %v731
        %741 = vmatmul.bf16.gmra.mxu0 %v728
        %v742 = vpop.f32.mrf.mxu0
        %v743 = vadd.f32 0.0, %v742
        %v744 = vpop.f32.mrf.mxu0
        %745 = vdwg.mxu0
        %v746 = vmul.f32 %v743, 0.5
        %v747 = vsel %vm517, %v746, -inf
        %748 = vmax.xlane.f32.xlu0 %v747
        %v749 = vpop.xlane.xlu0 %748
        %v750 = vsub.f32 %v746, %v749
        %v751 = vmul.f32 %v750, 1.442695
        %v752 = vpow.pop %v751
        %v753 = vsel %vm517, %v752, 0.0
        %754 = vadd.xlane.f32.xlu0 %v753
        %v755 = vpop.xlane.xlu0 %754
        %v756 = vrcp.pop %v755
        %v757 = vmul.f32 %v752, %v756
        %v758 = vpack.c.bf16 %v757, %v757
        %759 = vrot.lane.b32.xlu0 %v493, 48
        %v760 = vpop.permute.xlu0 %759
        %v762 = vsel %vm517, %v758, 0
        %v765 = vsel %vm535, %v760, 0
        %767 = vmatpush.bf16.msra.mxu0 0
        %768 = vmatpush.bf16.msra.mxu0 0
        %769 = vmatpush.bf16.msra.mxu0 0
        %770 = vmatpush.bf16.msra.mxu0 0
        %771 = vmatpush.bf16.msra.mxu0 0
        %772 = vmatpush.bf16.msra.mxu0 0
        %773 = vmatpush.bf16.msra.mxu0 0
        %774 = vmatpush.bf16.msra.mxu0 %v765
        %775 = vmatmul.bf16.gmra.mxu0 %v762
        %v776 = vpop.f32.mrf.mxu0
        %v777 = vadd.f32 0.0, %v776
        %v778 = vpop.f32.mrf.mxu0
        %779 = vdwg.mxu0
        %780 = vrot.lane.b32.xlu0 %v493, 108
        %v781 = vpop.permute.xlu0 %780
        %782 = vrot.lane.b32.xlu0 %v493, 76
        %v783 = vpop.permute.xlu0 %782
        %v785 = vsel %vm496, %v781, 0
        %v788 = vsel %vm496, %v783, 0
        %790 = vmatpush.bf16.xpose.msra.mxu0 0
        %791 = vmatpush.bf16.xpose.msra.mxu0 0
        %792 = vmatpush.bf16.xpose.msra.mxu0 0
        %793 = vmatpush.bf16.xpose.msra.mxu0 0
        %794 = vmatpush.bf16.xpose.msra.mxu0 0
        %795 = vmatpush.bf16.xpose.msra.mxu0 0
        %796 = vmatpush.bf16.xpose.msra.mxu0 0
        %797 = vmatpush.bf16.xpose.msra.mxu0 %v788
        %798 = vmatmul.bf16.gmra.mxu0 %v785
        %v799 = vpop.f32.mrf.mxu0
        %v800 = vadd.f32 0.0, %v799
        %v801 = vpop.f32.mrf.mxu0
        %802 = vdwg.mxu0
        %v803 = vmul.f32 %v800, 0.5
        %v804 = vsel %vm517, %v803, -inf
        %805 = vmax.xlane.f32.xlu0 %v804
        %v806 = vpop.xlane.xlu0 %805
        %v807 = vsub.f32 %v803, %v806
        %v808 = vmul.f32 %v807, 1.442695
        %v809 = vpow.pop %v808
        %v810 = vsel %vm517, %v809, 0.0
        %811 = vadd.xlane.f32.xlu0 %v810
        %v812 = vpop.xlane.xlu0 %811
        %v813 = vrcp.pop %v812
        %v814 = vmul.f32 %v809, %v813
        %v815 = vpack.c.bf16 %v814, %v814
        %816 = vrot.lane.b32.xlu0 %v493, 44
        %v817 = vpop.permute.xlu0 %816
        %v819 = vsel %vm517, %v815, 0
        %v822 = vsel %vm535, %v817, 0
        %824 = vmatpush.bf16.msra.mxu0 0
        %825 = vmatpush.bf16.msra.mxu0 0
        %826 = vmatpush.bf16.msra.mxu0 0
        %827 = vmatpush.bf16.msra.mxu0 0
        %828 = vmatpush.bf16.msra.mxu0 0
        %829 = vmatpush.bf16.msra.mxu0 0
        %830 = vmatpush.bf16.msra.mxu0 0
        %831 = vmatpush.bf16.msra.mxu0 %v822
        %832 = vmatmul.bf16.gmra.mxu0 %v819
        %v833 = vpop.f32.mrf.mxu0
        %v834 = vadd.f32 0.0, %v833
        %v835 = vpop.f32.mrf.mxu0
        %836 = vdwg.mxu0
        %837 = vrot.lane.b32.xlu0 %v493, 104
        %v838 = vpop.permute.xlu0 %837
        %839 = vrot.lane.b32.xlu0 %v493, 72
        %v840 = vpop.permute.xlu0 %839
        %v842 = vsel %vm496, %v838, 0
        %v845 = vsel %vm496, %v840, 0
        %847 = vmatpush.bf16.xpose.msra.mxu0 0
        %848 = vmatpush.bf16.xpose.msra.mxu0 0
        %849 = vmatpush.bf16.xpose.msra.mxu0 0
        %850 = vmatpush.bf16.xpose.msra.mxu0 0
        %851 = vmatpush.bf16.xpose.msra.mxu0 0
        %852 = vmatpush.bf16.xpose.msra.mxu0 0
        %853 = vmatpush.bf16.xpose.msra.mxu0 0
        %854 = vmatpush.bf16.xpose.msra.mxu0 %v845
        %855 = vmatmul.bf16.gmra.mxu0 %v842
        %v856 = vpop.f32.mrf.mxu0
        %v857 = vadd.f32 0.0, %v856
        %v858 = vpop.f32.mrf.mxu0
        %859 = vdwg.mxu0
        %v860 = vmul.f32 %v857, 0.5
        %v861 = vsel %vm517, %v860, -inf
        %862 = vmax.xlane.f32.xlu0 %v861
        %v863 = vpop.xlane.xlu0 %862
        %v864 = vsub.f32 %v860, %v863
        %v865 = vmul.f32 %v864, 1.442695
        %v866 = vpow.pop %v865
        %v867 = vsel %vm517, %v866, 0.0
        %868 = vadd.xlane.f32.xlu0 %v867
        %v869 = vpop.xlane.xlu0 %868
        %v870 = vrcp.pop %v869
        %v871 = vmul.f32 %v866, %v870
        %v872 = vpack.c.bf16 %v871, %v871
        %873 = vrot.lane.b32.xlu0 %v493, 40
        %v874 = vpop.permute.xlu0 %873
        %v876 = vsel %vm517, %v872, 0
        %v879 = vsel %vm535, %v874, 0
        %881 = vmatpush.bf16.msra.mxu0 0
        %882 = vmatpush.bf16.msra.mxu0 0
        %883 = vmatpush.bf16.msra.mxu0 0
        %884 = vmatpush.bf16.msra.mxu0 0
        %885 = vmatpush.bf16.msra.mxu0 0
        %886 = vmatpush.bf16.msra.mxu0 0
        %887 = vmatpush.bf16.msra.mxu0 0
        %888 = vmatpush.bf16.msra.mxu0 %v879
        %889 = vmatmul.bf16.gmra.mxu0 %v876
        %v890 = vpop.f32.mrf.mxu0
        %v891 = vadd.f32 0.0, %v890
        %v892 = vpop.f32.mrf.mxu0
        %893 = vdwg.mxu0
        %894 = vrot.lane.b32.xlu0 %v493, 100
        %v895 = vpop.permute.xlu0 %894
        %896 = vrot.lane.b32.xlu0 %v493, 68
        %v897 = vpop.permute.xlu0 %896
        %v899 = vsel %vm496, %v895, 0
        %v902 = vsel %vm496, %v897, 0
        %904 = vmatpush.bf16.xpose.msra.mxu0 0
        %905 = vmatpush.bf16.xpose.msra.mxu0 0
        %906 = vmatpush.bf16.xpose.msra.mxu0 0
        %907 = vmatpush.bf16.xpose.msra.mxu0 0
        %908 = vmatpush.bf16.xpose.msra.mxu0 0
        %909 = vmatpush.bf16.xpose.msra.mxu0 0
        %910 = vmatpush.bf16.xpose.msra.mxu0 0
        %911 = vmatpush.bf16.xpose.msra.mxu0 %v902
        %912 = vmatmul.bf16.gmra.mxu0 %v899
        %v913 = vpop.f32.mrf.mxu0
        %v914 = vadd.f32 0.0, %v913
        %v915 = vpop.f32.mrf.mxu0
        %916 = vdwg.mxu0
        %v917 = vmul.f32 %v914, 0.5
        %v918 = vsel %vm517, %v917, -inf
        %919 = vmax.xlane.f32.xlu0 %v918
        %v920 = vpop.xlane.xlu0 %919
        %v921 = vsub.f32 %v917, %v920
        %v922 = vmul.f32 %v921, 1.442695
        %v923 = vpow.pop %v922
        %v924 = vsel %vm517, %v923, 0.0
        %925 = vadd.xlane.f32.xlu0 %v924
        %v926 = vpop.xlane.xlu0 %925
        %v927 = vrcp.pop %v926
        %v928 = vmul.f32 %v923, %v927
        %v929 = vpack.c.bf16 %v928, %v928
        %930 = vrot.lane.b32.xlu0 %v493, 36
        %v931 = vpop.permute.xlu0 %930
        %v933 = vsel %vm517, %v929, 0
        %v936 = vsel %vm535, %v931, 0
        %938 = vmatpush.bf16.msra.mxu0 0
        %939 = vmatpush.bf16.msra.mxu0 0
        %940 = vmatpush.bf16.msra.mxu0 0
        %941 = vmatpush.bf16.msra.mxu0 0
        %942 = vmatpush.bf16.msra.mxu0 0
        %943 = vmatpush.bf16.msra.mxu0 0
        %944 = vmatpush.bf16.msra.mxu0 0
        %945 = vmatpush.bf16.msra.mxu0 %v936
        %946 = vmatmul.bf16.gmra.mxu0 %v933
        %v947 = vpop.f32.mrf.mxu0
        %v948 = vadd.f32 0.0, %v947
        %v949 = vpop.f32.mrf.mxu0
        %950 = vdwg.mxu0
        %952 = vrot.lane.b32.xlu0 %v606, 4
        %v953 = vpop.permute.xlu0 %952
        %956 = vrot.lane.b32.xlu0 %v663, 8
        %v957 = vpop.permute.xlu0 %956
        %960 = vrot.lane.b32.xlu0 %v720, 12
        %v961 = vpop.permute.xlu0 %960
        %964 = vrot.lane.b32.xlu0 %v777, 16
        %v965 = vpop.permute.xlu0 %964
        %968 = vrot.lane.b32.xlu0 %v834, 20
        %v969 = vpop.permute.xlu0 %968
        %972 = vrot.lane.b32.xlu0 %v891, 24
        %v973 = vpop.permute.xlu0 %972
        %976 = vrot.lane.b32.xlu0 %v948, 28
        %v977 = vpop.permute.xlu0 %976
        %v979 = vsel %vm496, %v549, %v953
        %v980 = vsel %vm517, %v979, %v957
        %vm981 = vcmask 97280
        %v982 = vsel %vm981, %v980, %v961
        %vm983 = vcmask 130048
        %v984 = vsel %vm983, %v982, %v965
        %vm985 = vcmask 162816
        %v986 = vsel %vm985, %v984, %v969
        %vm987 = vcmask 195584
        %v988 = vsel %vm987, %v986, %v973
        %vm989 = vcmask 228352
        %v990 = vsel %vm989, %v988, %v977
        %v991 = vpack.c.bf16 %v990, %v990
        %v992 = vld [vmem:[#allocation2] sm:$0xff]
        %v993 = vld [vmem:[%s4] sm:$0xf]
        %v994 = vld [vmem:[%s4 + $0x4] sm:$0xf]
        %v995 = vld [vmem:[%s4 + $0x8] sm:$0xf]
        %v996 = vld [vmem:[%s4 + $0xc] sm:$0xf]
        %v1001 = vunpack.c.l.b16 %v993
        %v1002 = vunpack.c.l.b16 %v994
        %v1003 = vunpack.c.l.b16 %v995
        %v1004 = vunpack.c.l.b16 %v996
        %v1005 = vpack.c.b16 %v1002, %v1001
        %v1006 = vpack.c.b16 %v1004, %v1003
        %v1010 = vsel %vm413, %v991, 0
        %1012 = vmatpush.bf16.msra.mxu0 0
        %1013 = vmatpush.bf16.msra.mxu0 0
        %1014 = vmatpush.bf16.msra.mxu0 0
        %1015 = vmatpush.bf16.msra.mxu0 0
        %1016 = vmatpush.bf16.msra.mxu0 0
        %1017 = vmatpush.bf16.msra.mxu0 0
        %1018 = vmatpush.bf16.msra.mxu0 %v1006
        %1019 = vmatpush.bf16.msra.mxu0 %v1005
        %1020 = vmatmul.bf16.gmra.mxu0 %v1010
        %v1021 = vpop.f32.mrf.mxu0
        %v1022 = vadd.f32 0.0, %v1021
        %v1023 = vpop.f32.mrf.mxu0
        %1024 = vdwg.mxu0
        %v1025 = vadd.f32 %v992, %v1022
        %1026 = vst.msk [vmem:[#allocation2] sm:$0xff] %vm413, %v1025
        %v1027 = vld [vmem:[#allocation2] sm:$0xff]
        %v1028 = vld [vmem:[%s6] sm:$0x1]
        %v1029 = vld [vmem:[%s7] sm:$0x1]
        %v1030 = vsel %vm413, %v1027, 0.0
        %1031 = vadd.xlane.f32.xlu0 %v1030
        %v1032 = vpop.xlane.xlu0 %1031
        %v1033 = vmul.f32 %v1032, %v423
        %v1034 = vsub.f32 %v1027, %v1033
        %v1035 = vmul.f32 %v1034, %v1034
        %v1036 = vsel %vm413, %v1035, 0.0
        %1037 = vadd.xlane.f32.xlu0 %v1036
        %v1038 = vpop.xlane.xlu0 %1037
        %v1039 = vmul.f32 %v1038, %v423
        %v1040 = vadd.f32 %v1039, 1e-06
        %v1041 = vrsqrt.pop %v1040
        %v1042 = vmul.f32 %v1041, %v1040
        %v1043 = vmul.f32 %v1042, %v1041
        %v1044 = vmul.f32 0.5, %v1043
        %v1045 = vsub.f32 1.5, %v1044
        %v1046 = vmul.f32 %v1041, %v1045
        %vm1047 = vweird.f32 %v1040
        %vm1048 = vweird.f32 %v1041
        %vm1049 = vmor %vm1047, %vm1048
        %v1050 = vsel %vm1049, %v1041, %v1046
        %v1051 = vmul.f32 %v1034, %v1050
        %v1053 = vperm.slane %v1028, 0
        %v1055 = vmul.f32 %v1051, %v1053
        %v1057 = vperm.slane %v1029, 0
        %v1059 = vadd.f32 %v1055, %v1057
        %v1060 = vpack.c.bf16 %v1059, %v1059
        %v1061 = vld [vmem:[%s8] sm:$0xf]
        %v1062 = vld [vmem:[%s8 + $0x4] sm:$0xf]
        %v1063 = vld [vmem:[%s8 + $0x8] sm:$0xf]
        %v1064 = vld [vmem:[%s8 + $0xc] sm:$0xf]
        %v1065 = vld [vmem:[%s9] sm:$0x1]
        %v1067 = vperm.slane %v1065, 0
        %v1073 = vunpack.c.l.b16 %v1061
        %v1074 = vunpack.c.l.b16 %v1062
        %v1075 = vunpack.c.l.b16 %v1063
        %v1076 = vunpack.c.l.b16 %v1064
        %v1077 = vpack.c.b16 %v1074, %v1073
        %v1078 = vpack.c.b16 %v1076, %v1075
        %v1082 = vsel %vm413, %v1060, 0
        %1084 = vmatpush.bf16.msra.mxu0 0
        %1085 = vmatpush.bf16.msra.mxu0 0
        %1086 = vmatpush.bf16.msra.mxu0 0
        %1087 = vmatpush.bf16.msra.mxu0 0
        %1088 = vmatpush.bf16.msra.mxu0 0
        %1089 = vmatpush.bf16.msra.mxu0 0
        %1090 = vmatpush.bf16.msra.mxu0 %v1078
        %1091 = vmatpush.bf16.msra.mxu0 %v1077
        %1092 = vmatmul.bf16.gmra.mxu0 %v1082
        %v1093 = vpop.f32.mrf.mxu0
        %v1094 = vadd.f32 %v1067, %v1093
        %v1095 = vpop.f32.mrf.mxu0
        %1096 = vdwg.mxu0
        %v1097 = vmul.f32 %v1094, 0.5
        %v1098 = vmul.f32 %v1094, 0.70710677
        %v1099 = vand.u32 2147483647, %v1098
        %v1100 = vmul.f32 %v1099, 0.3275911
        %v1101 = vadd.f32 %v1100, 1.0
        %v1102 = vrcp.pop %v1101
        %v1103 = vmul.f32 %v1102, 1.0614054
        %v1104 = vadd.f32 %v1103, -1.4531521
        %v1105 = vmul.f32 %v1104, %v1102
        %v1106 = vadd.f32 %v1105, 1.4214138
        %v1107 = vmul.f32 %v1106, %v1102
        %v1108 = vadd.f32 %v1107, -0.28449672
        %v1109 = vmul.f32 %v1108, %v1102
        %v1110 = vadd.f32 %v1109, 0.2548296
        %v1111 = vmul.f32 %v1110, %v1102
        %v1112 = vsub.f32 0.0, %v1099
        %v1113 = vmul.f32 %v1112, %v1099
        %v1114 = vmul.f32 %v1113, 1.442695
        %v1115 = vpow.pop %v1114
        %v1116 = vmul.f32 %v1111, %v1115
        %v1117 = vsub.f32 1.0, %v1116
        %vm1118 = vcmp.ge.f32.partialorder %v1098, 0.0
        %v1119 = vsub.f32 0.0, %v1117
        %v1120 = vsel %vm1118, %v1117, %v1119
        %v1121 = vadd.f32 %v1120, 1.0
        %v1122 = vmul.f32 %v1097, %v1121
        %v1123 = vpack.c.bf16 %v1122, %v1122
        %v1124 = vld [vmem:[%s10] sm:$0xf]
        %v1125 = vld [vmem:[%s10 + $0x4] sm:$0xf]
        %v1126 = vld [vmem:[%s10 + $0x8] sm:$0xf]
        %v1127 = vld [vmem:[%s10 + $0xc] sm:$0xf]
        %v1128 = vld [vmem:[%s10 + $0x10] sm:$0xf]
        %v1129 = vld [vmem:[%s10 + $0x14] sm:$0xf]
        %v1130 = vld [vmem:[%s10 + $0x18] sm:$0xf]
        %v1131 = vld [vmem:[%s10 + $0x1c] sm:$0xf]
        %v1132 = vld [vmem:[%s10 + $0x20] sm:$0xf]
        %v1133 = vld [vmem:[%s10 + $0x24] sm:$0xf]
        %v1134 = vld [vmem:[%s10 + $0x28] sm:$0xf]
        %v1135 = vld [vmem:[%s10 + $0x2c] sm:$0xf]
        %v1136 = vld [vmem:[%s10 + $0x30] sm:$0xf]
        %v1137 = vld [vmem:[%s10 + $0x34] sm:$0xf]
        %v1138 = vld [vmem:[%s10 + $0x38] sm:$0xf]
        %v1139 = vld [vmem:[%s10 + $0x3c] sm:$0xf]
        %v1140 = vld [vmem:[%s11] sm:$0x1]
        %v1142 = vperm.slane %v1140, 0
        %v1160 = vunpack.c.l.b16 %v1124
        %v1161 = vunpack.c.l.b16 %v1125
        %v1162 = vunpack.c.l.b16 %v1126
        %v1163 = vunpack.c.l.b16 %v1127
        %v1164 = vunpack.c.l.b16 %v1128
        %v1165 = vunpack.c.l.b16 %v1129
        %v1166 = vunpack.c.l.b16 %v1130
        %v1167 = vunpack.c.l.b16 %v1131
        %v1168 = vunpack.c.l.b16 %v1132
        %v1169 = vunpack.c.l.b16 %v1133
        %v1170 = vunpack.c.l.b16 %v1134
        %v1171 = vunpack.c.l.b16 %v1135
        %v1172 = vunpack.c.l.b16 %v1136
        %v1173 = vunpack.c.l.b16 %v1137
        %v1174 = vunpack.c.l.b16 %v1138
        %v1175 = vunpack.c.l.b16 %v1139
        %v1176 = vpack.c.b16 %v1161, %v1160
        %v1177 = vpack.c.b16 %v1163, %v1162
        %v1178 = vpack.c.b16 %v1165, %v1164
        %v1179 = vpack.c.b16 %v1167, %v1166
        %v1180 = vpack.c.b16 %v1169, %v1168
        %v1181 = vpack.c.b16 %v1171, %v1170
        %v1182 = vpack.c.b16 %v1173, %v1172
        %v1183 = vpack.c.b16 %v1175, %v1174
        %1192 = vmatpush.bf16.msra.mxu0 %v1183
        %1193 = vmatpush.bf16.msra.mxu0 %v1182
        %1194 = vmatpush.bf16.msra.mxu0 %v1181
        %1195 = vmatpush.bf16.msra.mxu0 %v1180
        %1196 = vmatpush.bf16.msra.mxu0 %v1179
        %1197 = vmatpush.bf16.msra.mxu0 %v1178
        %1198 = vmatpush.bf16.msra.mxu0 %v1177
        %1199 = vmatpush.bf16.msra.mxu0 %v1176
        %1200 = vmatmul.bf16.gmra.mxu0 %v1123
        %v1201 = vpop.f32.mrf.mxu0
        %v1202 = vadd.f32 %v1142, %v1201
        %v1203 = vpop.f32.mrf.mxu0
        %1204 = vdwg.mxu0
        %v1205 = vadd.f32 %v1027, %v1202
        %1206 = vst.msk [vmem:[%s404] sm:$0xff] %vm413, %v1205
        %s1207 = sand.u32 %s291, 1
        %s1208 = scalar_lea.sflag [#allocation4], %s1207
        %s1209 = sand.u32 %s291, 1
        %s1210 = smul.addr %s1209, 8
        %s1211 = scalar_lea.vmem [#allocation3], %s1210
        // Predicated region
        $region69: #{tpu_custom_call.1} parent=67 // pred_check
          %p1212 = pneg %p301
        $region70: #{tpu_custom_call.1} parent=67 // pred_check_branch
          %1214 = sbr.rel (%p1212) target = $region72
        $region71: #{tpu_custom_call.1} parent=67 // pred_region
          %1216 = vsyncadd %s1208, 0
          %s1217 = smul.addr %s26, 8
          %s1218 = scalar_lea.hbm %s12, %s1217
          %s1220 = sshll.u32 %s1211, 4
          %s1221 = int_to_ptr.vmem [resolvable:$true] %s1220
          %s1222 = sshll.u32 %s1218, 4
          %s1223 = int_to_ptr.hbm [resolvable:$true] %s1222
          %1225 = dma.vmem_to_hbm [thread:$0]  %s1221, 128, %s1223, %s1208
        $region72: #{tpu_custom_call.1} parent=67 // pred_fallthru
          _
      $region68: #{tpu_custom_call.1} parent=5 // pred_fallthru
        _
      %p1226 = scmp.le.s32.totalorder 2, %s21
      // Predicated region
      $region73: #{tpu_custom_call.1} parent=5 // pred_check
        %p1227 = pneg %p1226
      $region74: #{tpu_custom_call.1} parent=5 // pred_check_branch
        %1229 = sbr.rel (%p1227) target = $region76
      $region75: #{tpu_custom_call.1} parent=5 // pred_region
        %s1230 = ssub.s32 %s21, 2
        // Predicated region
        $region77: #{tpu_custom_call.1} parent=75 // pred_check
          %p1231 = pneg %p307
        $region78: #{tpu_custom_call.1} parent=75 // pred_check_branch
          %1233 = sbr.rel (%p1231) target = $region80
        $region79: #{tpu_custom_call.1} parent=75 // pred_region
          %s1234 = sand.u32 %s292, 1
          %s1235 = scalar_lea.sflag [#allocation4], %s1234
          %s1236 = sand.u32 %s292, 1
          %s1237 = smul.addr %s1236, 8
          %s1238 = scalar_lea.vmem [#allocation3], %s1237
          %1240 = dma.done %s1235, 128
        $region80: #{tpu_custom_call.1} parent=75 // pred_fallthru
          _
      $region76: #{tpu_custom_call.1} parent=5 // pred_fallthru
        _
    $region6: #{tpu_custom_call.1} parent=1 // loop_footer
      %s25 = sadd.s32 1, %s21
    $region7: #{tpu_custom_call.1} parent=1 // loop_footer_branch
      %20 = sbr.rel target = $region3
    $region8: #{tpu_custom_call.1} parent=1 // loop_exit
      _
    %1241 = vsyncpa [#allocation4], 1
    %s1242 = scalar_lea.sflag [#allocation4], 1
    %1243 = vsyncpa %s1242, 1

// kernel: tpu_custom_call.1
$region0: #{tpu_custom_call.1}
  #allocation0 [shape = 'u32[]', space=smem, size = 0x4, offset = 0x4, fixed_abs, tag = 'smem constant byte address 0x4 - core index']
  #allocation1 [shape = 'u32[72,128]{1,0:T(1,128)}', space=vmem, size = 0x9000, scoped, tag = 'internal scratch']
  #allocation2 [shape = 'f32[8,32]{1,0:T(8,128)}', space=vmem, size = 0x1000, scoped, tag = 'scratch operand']
  %s0 = inlined_call_operand.vmem [shape: f32[2,8,32], index: 0, kind: input, shape index: {}]
  %s1 = inlined_call_operand.vmem [shape: f32[1,32], index: 1, kind: input, shape index: {}]
  %s2 = inlined_call_operand.vmem [shape: f32[1,32], index: 2, kind: input, shape index: {}]
  %s3 = inlined_call_operand.vmem [shape: bf16[1,32,96], index: 3, kind: input, shape index: {}]
  %s4 = inlined_call_operand.vmem [shape: bf16[1,32,32], index: 4, kind: input, shape index: {}]
  %s5 = inlined_call_operand.vmem [shape: f32[1,32], index: 5, kind: input, shape index: {}]
  %s6 = inlined_call_operand.vmem [shape: f32[1,32], index: 6, kind: input, shape index: {}]
  %s7 = inlined_call_operand.vmem [shape: f32[1,32], index: 7, kind: input, shape index: {}]
  %s8 = inlined_call_operand.vmem [shape: bf16[32,128], index: 8, kind: input, shape index: {}]
  %s9 = inlined_call_operand.vmem [shape: f32[1,128], index: 9, kind: input, shape index: {}]
  %s10 = inlined_call_operand.vmem [shape: bf16[128,32], index: 10, kind: input, shape index: {}]
  %s11 = inlined_call_operand.vmem [shape: f32[1,32], index: 11, kind: input, shape index: {}]
  %s12 = inlined_call_operand.hbm [shape: f32[2,8,32], index: 12, kind: output, shape index: {}]
  %s13 = sld [smem:[#allocation0]]
  $region81: #{tpu_custom_call.1} parent=0
    _
  %s15 = ssub.s32 1, %s13
  %s16 = scalar_select 0, %s15, %s13
  $region1: #{tpu_custom_call.1} parent=0
    #allocation3 [shape = 'u8[8192]{0}', space=vmem, size = 0x2000, scoped, tag = 'output window, operand 0']
    #allocation4 [shape = 's32[2]{0}', space=sflag, size = 0x8, scoped, tag = 'scoped memory for tpu_custom_call.1']
    %17 = vsyncpa [#allocation4], 0
    %s18 = scalar_lea.sflag [#allocation4], 1
    %19 = vsyncpa %s18, 0
    loop: start=0, step=1, limit=4
    $region2: #{tpu_custom_call.1} parent=1 // loop_pre_header
      _
    $region3: #{tpu_custom_call.1} parent=1 // loop_header
      %s21 = sphi 0, %s25
      %p22 = scmp.ge.s32.totalorder %s21, 4
      %s31 = sphi 0, %s33
      %s34 = sphi 0, %s31
      %s35 = sphi 0, %s34
      %s51 = sphi 0, %s35
      %s55 = sphi 0, %s55
      %s57 = sphi 0, %s55
      %s58 = sphi 0, %s57
      %s72 = sphi 0, %s58
      %s76 = sphi 0, %s76
      %s78 = sphi 0, %s76
      %s79 = sphi 0, %s78
      %s93 = sphi 0, %s79
      %s97 = sphi 0, %s97
      %s99 = sphi 0, %s97
      %s100 = sphi 0, %s99
      %s114 = sphi 0, %s100
      %s118 = sphi 0, %s118
      %s120 = sphi 0, %s118
      %s121 = sphi 0, %s120
      %s135 = sphi 0, %s121
      %s139 = sphi 0, %s139
      %s141 = sphi 0, %s139
      %s142 = sphi 0, %s141
      %s156 = sphi 0, %s142
      %s160 = sphi 0, %s160
      %s162 = sphi 0, %s160
      %s163 = sphi 0, %s162
      %s177 = sphi 0, %s163
      %s181 = sphi 0, %s181
      %s183 = sphi 0, %s181
      %s184 = sphi 0, %s183
      %s198 = sphi 0, %s184
      %s202 = sphi 0, %s202
      %s204 = sphi 0, %s202
      %s205 = sphi 0, %s204
      %s219 = sphi 0, %s205
      %s223 = sphi 0, %s223
      %s225 = sphi 0, %s223
      %s226 = sphi 0, %s225
      %s240 = sphi 0, %s226
      %s244 = sphi 0, %s244
      %s246 = sphi 0, %s244
      %s247 = sphi 0, %s246
      %s261 = sphi 0, %s247
      %s265 = sphi 0, %s265
      %s267 = sphi 0, %s265
      %s268 = sphi 0, %s267
      %s282 = sphi 0, %s268
      %s288 = sphi 0, %s290
      %s291 = sphi 0, %s288
      %s292 = sphi 0, %s291
      %s308 = sphi 0, %s292
    $region4: #{tpu_custom_call.1} parent=1 // loop_header_branch
      %24 = sbr.rel (%p22) target = $region8
    $region5: #{tpu_custom_call.1} parent=1 // loop_body
      %s26 = ssub.s32 %s21, 1
      %s27 = ssub.s32 %s21, 2
      %s28 = sadd.s32 %s21, 1
      %s29 = ssub.s32 %s21, %s28
      %p30 = scmp.eq.s32.totalorder %s29, 0
      %s32 = sadd.s32 %s31, 1
      %s33 = scalar_select %p30, %s31, %s32
      %p36 = pneg %p30
      %p37 = scmp.eq.s32.totalorder %s21, 1
      %p38 = por %p36, %p37
      %p39 = scmp.ne.s32.totalorder %s31, %s34
      %p40 = scmp.eq.s32.totalorder %s21, 0
      %p41 = por %p39, %p40
      %p42 = scmp.ne.s32.totalorder %s31, %s34
      %p43 = scmp.eq.s32.totalorder %s26, 1
      %p44 = por %p42, %p43
      %p45 = scmp.ne.s32.totalorder %s34, %s35
      %p46 = scmp.eq.s32.totalorder %s26, 0
      %p47 = por %p45, %p46
      %p48 = scmp.ne.s32.totalorder %s34, %s35
      %p49 = scmp.eq.s32.totalorder %s27, 1
      %p50 = por %p48, %p49
      %p52 = scmp.ne.s32.totalorder %s35, %s51
      %p53 = scmp.eq.s32.totalorder %s27, 0
      %p54 = por %p52, %p53
      %s56 = sadd.s32 %s55, 1
      %p59 = scmp.eq.s32.totalorder %s21, 1
      %p60 = scmp.ne.s32.totalorder %s55, %s57
      %p61 = scmp.eq.s32.totalorder %s21, 0
      %p62 = por %p60, %p61
      %p63 = scmp.ne.s32.totalorder %s55, %s57
      %p64 = scmp.eq.s32.totalorder %s26, 1
      %p65 = por %p63, %p64
      %p66 = scmp.ne.s32.totalorder %s57, %s58
      %p67 = scmp.eq.s32.totalorder %s26, 0
      %p68 = por %p66, %p67
      %p69 = scmp.ne.s32.totalorder %s57, %s58
      %p70 = scmp.eq.s32.totalorder %s27, 1
      %p71 = por %p69, %p70
      %p73 = scmp.ne.s32.totalorder %s58, %s72
      %p74 = scmp.eq.s32.totalorder %s27, 0
      %p75 = por %p73, %p74
      %s77 = sadd.s32 %s76, 1
      %p80 = scmp.eq.s32.totalorder %s21, 1
      %p81 = scmp.ne.s32.totalorder %s76, %s78
      %p82 = scmp.eq.s32.totalorder %s21, 0
      %p83 = por %p81, %p82
      %p84 = scmp.ne.s32.totalorder %s76, %s78
      %p85 = scmp.eq.s32.totalorder %s26, 1
      %p86 = por %p84, %p85
      %p87 = scmp.ne.s32.totalorder %s78, %s79
      %p88 = scmp.eq.s32.totalorder %s26, 0
      %p89 = por %p87, %p88
      %p90 = scmp.ne.s32.totalorder %s78, %s79
      %p91 = scmp.eq.s32.totalorder %s27, 1
      %p92 = por %p90, %p91
      %p94 = scmp.ne.s32.totalorder %s79, %s93
      %p95 = scmp.eq.s32.totalorder %s27, 0
      %p96 = por %p94, %p95
      %s98 = sadd.s32 %s97, 1
      %p101 = scmp.eq.s32.totalorder %s21, 1
      %p102 = scmp.ne.s32.totalorder %s97, %s99
      %p103 = scmp.eq.s32.totalorder %s21, 0
      %p104 = por %p102, %p103
      %p105 = scmp.ne.s32.totalorder %s97, %s99
      %p106 = scmp.eq.s32.totalorder %s26, 1
      %p107 = por %p105, %p106
      %p108 = scmp.ne.s32.totalorder %s99, %s100
      %p109 = scmp.eq.s32.totalorder %s26, 0
      %p110 = por %p108, %p109
      %p111 = scmp.ne.s32.totalorder %s99, %s100
      %p112 = scmp.eq.s32.totalorder %s27, 1
      %p113 = por %p111, %p112
      %p115 = scmp.ne.s32.totalorder %s100, %s114
      %p116 = scmp.eq.s32.totalorder %s27, 0
      %p117 = por %p115, %p116
      %s119 = sadd.s32 %s118, 1
      %p122 = scmp.eq.s32.totalorder %s21, 1
      %p123 = scmp.ne.s32.totalorder %s118, %s120
      %p124 = scmp.eq.s32.totalorder %s21, 0
      %p125 = por %p123, %p124
      %p126 = scmp.ne.s32.totalorder %s118, %s120
      %p127 = scmp.eq.s32.totalorder %s26, 1
      %p128 = por %p126, %p127
      %p129 = scmp.ne.s32.totalorder %s120, %s121
      %p130 = scmp.eq.s32.totalorder %s26, 0
      %p131 = por %p129, %p130
      %p132 = scmp.ne.s32.totalorder %s120, %s121
      %p133 = scmp.eq.s32.totalorder %s27, 1
      %p134 = por %p132, %p133
      %p136 = scmp.ne.s32.totalorder %s121, %s135
      %p137 = scmp.eq.s32.totalorder %s27, 0
      %p138 = por %p136, %p137
      %s140 = sadd.s32 %s139, 1
      %p143 = scmp.eq.s32.totalorder %s21, 1
      %p144 = scmp.ne.s32.totalorder %s139, %s141
      %p145 = scmp.eq.s32.totalorder %s21, 0
      %p146 = por %p144, %p145
      %p147 = scmp.ne.s32.totalorder %s139, %s141
      %p148 = scmp.eq.s32.totalorder %s26, 1
      %p149 = por %p147, %p148
      %p150 = scmp.ne.s32.totalorder %s141, %s142
      %p151 = scmp.eq.s32.totalorder %s26, 0
      %p152 = por %p150, %p151
      %p153 = scmp.ne.s32.totalorder %s141, %s142
      %p154 = scmp.eq.s32.totalorder %s27, 1
      %p155 = por %p153, %p154
      %p157 = scmp.ne.s32.totalorder %s142, %s156
      %p158 = scmp.eq.s32.totalorder %s27, 0
      %p159 = por %p157, %p158
      %s161 = sadd.s32 %s160, 1
      %p164 = scmp.eq.s32.totalorder %s21, 1
      %p165 = scmp.ne.s32.totalorder %s160, %s162
      %p166 = scmp.eq.s32.totalorder %s21, 0
      %p167 = por %p165, %p166
      %p168 = scmp.ne.s32.totalorder %s160, %s162
      %p169 = scmp.eq.s32.totalorder %s26, 1
      %p170 = por %p168, %p169
      %p171 = scmp.ne.s32.totalorder %s162, %s163
      %p172 = scmp.eq.s32.totalorder %s26, 0
      %p173 = por %p171, %p172
      %p174 = scmp.ne.s32.totalorder %s162, %s163
      %p175 = scmp.eq.s32.totalorder %s27, 1
      %p176 = por %p174, %p175
      %p178 = scmp.ne.s32.totalorder %s163, %s177
      %p179 = scmp.eq.s32.totalorder %s27, 0
      %p180 = por %p178, %p179
      %s182 = sadd.s32 %s181, 1
      %p185 = scmp.eq.s32.totalorder %s21, 1
      %p186 = scmp.ne.s32.totalorder %s181, %s183
      %p187 = scmp.eq.s32.totalorder %s21, 0
      %p188 = por %p186, %p187
      %p189 = scmp.ne.s32.totalorder %s181, %s183
      %p190 = scmp.eq.s32.totalorder %s26, 1
      %p191 = por %p189, %p190
      %p192 = scmp.ne.s32.totalorder %s183, %s184
      %p193 = scmp.eq.s32.totalorder %s26, 0
      %p194 = por %p192, %p193
      %p195 = scmp.ne.s32.totalorder %s183, %s184
      %p196 = scmp.eq.s32.totalorder %s27, 1
      %p197 = por %p195, %p196
      %p199 = scmp.ne.s32.totalorder %s184, %s198
      %p200 = scmp.eq.s32.totalorder %s27, 0
      %p201 = por %p199, %p200
      %s203 = sadd.s32 %s202, 1
      %p206 = scmp.eq.s32.totalorder %s21, 1
      %p207 = scmp.ne.s32.totalorder %s202, %s204
      %p208 = scmp.eq.s32.totalorder %s21, 0
      %p209 = por %p207, %p208
      %p210 = scmp.ne.s32.totalorder %s202, %s204
      %p211 = scmp.eq.s32.totalorder %s26, 1
      %p212 = por %p210, %p211
      %p213 = scmp.ne.s32.totalorder %s204, %s205
      %p214 = scmp.eq.s32.totalorder %s26, 0
      %p215 = por %p213, %p214
      %p216 = scmp.ne.s32.totalorder %s204, %s205
      %p217 = scmp.eq.s32.totalorder %s27, 1
      %p218 = por %p216, %p217
      %p220 = scmp.ne.s32.totalorder %s205, %s219
      %p221 = scmp.eq.s32.totalorder %s27, 0
      %p222 = por %p220, %p221
      %s224 = sadd.s32 %s223, 1
      %p227 = scmp.eq.s32.totalorder %s21, 1
      %p228 = scmp.ne.s32.totalorder %s223, %s225
      %p229 = scmp.eq.s32.totalorder %s21, 0
      %p230 = por %p228, %p229
      %p231 = scmp.ne.s32.totalorder %s223, %s225
      %p232 = scmp.eq.s32.totalorder %s26, 1
      %p233 = por %p231, %p232
      %p234 = scmp.ne.s32.totalorder %s225, %s226
      %p235 = scmp.eq.s32.totalorder %s26, 0
      %p236 = por %p234, %p235
      %p237 = scmp.ne.s32.totalorder %s225, %s226
      %p238 = scmp.eq.s32.totalorder %s27, 1
      %p239 = por %p237, %p238
      %p241 = scmp.ne.s32.totalorder %s226, %s240
      %p242 = scmp.eq.s32.totalorder %s27, 0
      %p243 = por %p241, %p242
      %s245 = sadd.s32 %s244, 1
      %p248 = scmp.eq.s32.totalorder %s21, 1
      %p249 = scmp.ne.s32.totalorder %s244, %s246
      %p250 = scmp.eq.s32.totalorder %s21, 0
      %p251 = por %p249, %p250
      %p252 = scmp.ne.s32.totalorder %s244, %s246
      %p253 = scmp.eq.s32.totalorder %s26, 1
      %p254 = por %p252, %p253
      %p255 = scmp.ne.s32.totalorder %s246, %s247
      %p256 = scmp.eq.s32.totalorder %s26, 0
      %p257 = por %p255, %p256
      %p258 = scmp.ne.s32.totalorder %s246, %s247
      %p259 = scmp.eq.s32.totalorder %s27, 1
      %p260 = por %p258, %p259
      %p262 = scmp.ne.s32.totalorder %s247, %s261
      %p263 = scmp.eq.s32.totalorder %s27, 0
      %p264 = por %p262, %p263
      %s266 = sadd.s32 %s265, 1
      %p269 = scmp.eq.s32.totalorder %s21, 1
      %p270 = scmp.ne.s32.totalorder %s265, %s267
      %p271 = scmp.eq.s32.totalorder %s21, 0
      %p272 = por %p270, %p271
      %p273 = scmp.ne.s32.totalorder %s265, %s267
      %p274 = scmp.eq.s32.totalorder %s26, 1
      %p275 = por %p273, %p274
      %p276 = scmp.ne.s32.totalorder %s267, %s268
      %p277 = scmp.eq.s32.totalorder %s26, 0
      %p278 = por %p276, %p277
      %p279 = scmp.ne.s32.totalorder %s267, %s268
      %p280 = scmp.eq.s32.totalorder %s27, 1
      %p281 = por %p279, %p280
      %p283 = scmp.ne.s32.totalorder %s268, %s282
      %p284 = scmp.eq.s32.totalorder %s27, 0
      %p285 = por %p283, %p284
      %s286 = ssub.s32 %s21, %s28
      %p287 = scmp.eq.s32.totalorder %s286, 0
      %s289 = sadd.s32 %s288, 1
      %s290 = scalar_select %p287, %s288, %s289
      %p293 = pneg %p287
      %p294 = scmp.eq.s32.totalorder %s21, 1
      %p295 = por %p293, %p294
      %p296 = scmp.ne.s32.totalorder %s288, %s291
      %p297 = scmp.eq.s32.totalorder %s21, 0
      %p298 = por %p296, %p297
      %p299 = scmp.ne.s32.totalorder %s288, %s291
      %p300 = scmp.eq.s32.totalorder %s26, 1
      %p301 = por %p299, %p300
      %p302 = scmp.ne.s32.totalorder %s291, %s292
      %p303 = scmp.eq.s32.totalorder %s26, 0
      %p304 = por %p302, %p303
      %p305 = scmp.ne.s32.totalorder %s291, %s292
      %p306 = scmp.eq.s32.totalorder %s27, 1
      %p307 = por %p305, %p306
      %p309 = scmp.ne.s32.totalorder %s292, %s308
      %p310 = scmp.eq.s32.totalorder %s27, 0
      %p311 = por %p309, %p310
      %p312 = scmp.le.s32.totalorder 1, %s21
      %p313 = scmp.lt.s32.totalorder %s21, 3
      %p314 = pnand %p312, %p313
      %p315 = pneg %p314
      // Predicated region
      $region9: #{tpu_custom_call.1} parent=5 // pred_check
        _
      $region10: #{tpu_custom_call.1} parent=5 // pred_check_branch
        %317 = sbr.rel (%p314) target = $region12
      $region11: #{tpu_custom_call.1} parent=5 // pred_region
        %s318 = ssub.s32 %s21, 1
        // Predicated region
        $region13: #{tpu_custom_call.1} parent=11 // pred_check
          %p319 = pneg %p68
        $region14: #{tpu_custom_call.1} parent=11 // pred_check_branch
          %321 = sbr.rel (%p319) target = $region16
        $region15: #{tpu_custom_call.1} parent=11 // pred_region
          _
        $region16: #{tpu_custom_call.1} parent=11 // pred_fallthru
          _
        // Predicated region
        $region17: #{tpu_custom_call.1} parent=11 // pred_check
          %p322 = pneg %p89
        $region18: #{tpu_custom_call.1} parent=11 // pred_check_branch
          %324 = sbr.rel (%p322) target = $region20
        $region19: #{tpu_custom_call.1} parent=11 // pred_region
          _
        $region20: #{tpu_custom_call.1} parent=11 // pred_fallthru
          _
        // Predicated region
        $region21: #{tpu_custom_call.1} parent=11 // pred_check
          %p325 = pneg %p110
        $region22: #{tpu_custom_call.1} parent=11 // pred_check_branch
          %327 = sbr.rel (%p325) target = $region24
        $region23: #{tpu_custom_call.1} parent=11 // pred_region
          _
        $region24: #{tpu_custom_call.1} parent=11 // pred_fallthru
          _
        // Predicated region
        $region25: #{tpu_custom_call.1} parent=11 // pred_check
          %p328 = pneg %p131
        $region26: #{tpu_custom_call.1} parent=11 // pred_check_branch
          %330 = sbr.rel (%p328) target = $region28
        $region27: #{tpu_custom_call.1} parent=11 // pred_region
          _
        $region28: #{tpu_custom_call.1} parent=11 // pred_fallthru
          _
        // Predicated region
        $region29: #{tpu_custom_call.1} parent=11 // pred_check
          %p331 = pneg %p152
        $region30: #{tpu_custom_call.1} parent=11 // pred_check_branch
          %333 = sbr.rel (%p331) target = $region32
        $region31: #{tpu_custom_call.1} parent=11 // pred_region
          _
        $region32: #{tpu_custom_call.1} parent=11 // pred_fallthru
          _
        // Predicated region
        $region33: #{tpu_custom_call.1} parent=11 // pred_check
          %p334 = pneg %p173
        $region34: #{tpu_custom_call.1} parent=11 // pred_check_branch
          %336 = sbr.rel (%p334) target = $region36
        $region35: #{tpu_custom_call.1} parent=11 // pred_region
          _
        $region36: #{tpu_custom_call.1} parent=11 // pred_fallthru
          _
        // Predicated region
        $region37: #{tpu_custom_call.1} parent=11 // pred_check
          %p337 = pneg %p194
        $region38: #{tpu_custom_call.1} parent=11 // pred_check_branch
          %339 = sbr.rel (%p337) target = $region40
        $region39: #{tpu_custom_call.1} parent=11 // pred_region
          _
        $region40: #{tpu_custom_call.1} parent=11 // pred_fallthru
          _
        // Predicated region
        $region41: #{tpu_custom_call.1} parent=11 // pred_check
          %p340 = pneg %p215
        $region42: #{tpu_custom_call.1} parent=11 // pred_check_branch
          %342 = sbr.rel (%p340) target = $region44
        $region43: #{tpu_custom_call.1} parent=11 // pred_region
          _
        $region44: #{tpu_custom_call.1} parent=11 // pred_fallthru
          _
        // Predicated region
        $region45: #{tpu_custom_call.1} parent=11 // pred_check
          %p343 = pneg %p236
        $region46: #{tpu_custom_call.1} parent=11 // pred_check_branch
          %345 = sbr.rel (%p343) target = $region48
        $region47: #{tpu_custom_call.1} parent=11 // pred_region
          _
        $region48: #{tpu_custom_call.1} parent=11 // pred_fallthru
          _
        // Predicated region
        $region49: #{tpu_custom_call.1} parent=11 // pred_check
          %p346 = pneg %p257
        $region50: #{tpu_custom_call.1} parent=11 // pred_check_branch
          %348 = sbr.rel (%p346) target = $region52
        $region51: #{tpu_custom_call.1} parent=11 // pred_region
          _
        $region52: #{tpu_custom_call.1} parent=11 // pred_fallthru
          _
        // Predicated region
        $region53: #{tpu_custom_call.1} parent=11 // pred_check
          %p349 = pneg %p278
        $region54: #{tpu_custom_call.1} parent=11 // pred_check_branch
          %351 = sbr.rel (%p349) target = $region56
        $region55: #{tpu_custom_call.1} parent=11 // pred_region
          _
        $region56: #{tpu_custom_call.1} parent=11 // pred_fallthru
          _
      $region12: #{tpu_custom_call.1} parent=5 // pred_fallthru
        _
      %p352 = scmp.lt.s32.totalorder %s21, 2
      // Predicated region
      $region57: #{tpu_custom_call.1} parent=5 // pred_check
        %p353 = pneg %p352
      $region58: #{tpu_custom_call.1} parent=5 // pred_check_branch
        %355 = sbr.rel (%p353) target = $region60
      $region59: #{tpu_custom_call.1} parent=5 // pred_region
        // Predicated region
        $region61: #{tpu_custom_call.1} parent=59 // pred_check
          %p356 = pneg %p41
        $region62: #{tpu_custom_call.1} parent=59 // pred_check_branch
          %358 = sbr.rel (%p356) target = $region64
        $region63: #{tpu_custom_call.1} parent=59 // pred_region
          %p359 = scmp.lt.s32.totalorder %s21, 1
          %s360 = scalar_select %p359, %s21, 1
          %s361 = smul.addr %s360, 8
          %s362 = scalar_lea.vmem %s0, %s361
        $region64: #{tpu_custom_call.1} parent=59 // pred_fallthru
          _
      $region60: #{tpu_custom_call.1} parent=5 // pred_fallthru
        _
      %p363 = scmp.le.s32.totalorder 1, %s21
      %p364 = scmp.lt.s32.totalorder %s21, 3
      %p365 = pnand %p363, %p364
      %p366 = pneg %p365
      // Predicated region
      $region65: #{tpu_custom_call.1} parent=5 // pred_check
        _
      $region66: #{tpu_custom_call.1} parent=5 // pred_check_branch
        %368 = sbr.rel (%p365) target = $region68
      $region67: #{tpu_custom_call.1} parent=5 // pred_region
        %s369 = ssub.s32 %s21, 1
        %p370 = scmp.lt.s32.totalorder %s26, 1
        %s371 = scalar_select %p370, %s26, 1
        %s372 = smul.addr %s371, 8
        %s373 = scalar_lea.vmem %s0, %s372
        %p374 = pneg %p47
        %p375 = pneg %p44
        %p376 = pneg %p68
        %p377 = pneg %p65
        %p378 = pneg %p89
        %p379 = pneg %p86
        %p380 = pneg %p110
        %p381 = pneg %p107
        %p382 = pneg %p131
        %p383 = pneg %p128
        %p384 = pneg %p152
        %p385 = pneg %p149
        %p386 = pneg %p173
        %p387 = pneg %p170
        %p388 = pneg %p194
        %p389 = pneg %p191
        %p390 = pneg %p215
        %p391 = pneg %p212
        %p392 = pneg %p236
        %p393 = pneg %p233
        %p394 = pneg %p257
        %p395 = pneg %p254
        %p396 = pneg %p278
        %p397 = pneg %p275
        %p398 = pneg %p304
        %p399 = pneg %p301
        %s400 = sand.u32 %s291, 1
        %s401 = scalar_lea.sflag [#allocation4], %s400
        %s402 = sand.u32 %s291, 1
        %s403 = smul.addr %s402, 8
        %s404 = scalar_lea.vmem [#allocation3], %s403
        %p405 = scmp.lt.s32.totalorder %s26, 1
        %s406 = scalar_select %p405, %s26, 1
        %s407 = smul.addr %s406, 8
        %s408 = scalar_lea.vmem %s0, %s407
        %v410 = vld [vmem:[%s408] sm:$0xff]
        %v411 = vld [vmem:[%s1] sm:$0x1]
        %v412 = vld [vmem:[%s2] sm:$0x1]
        %vm413 = vcmask 261120
        %v414 = vsel %vm413, %v410, 0.0
        %415 = vadd.xlane.f32.xlu0 %v414
        %v416 = vpop.xlane.xlu0 %415
        %v417 = vrcp.pop 32.0
        %v418 = vmul.f32 32.0, %v417
        %v419 = vsub.f32 1.0, %v418
        %v420 = vmul.f32 %v417, %v419
        %v421 = vadd.f32 %v417, %v420
        %vm422 = vweird.f32 %v417
        %v423 = vsel %vm422, %v417, %v421
        %v424 = vmul.f32 %v416, %v423
        %v425 = vsub.f32 %v410, %v424
        %v426 = vmul.f32 %v425, %v425
        %v427 = vsel %vm413, %v426, 0.0
        %428 = vadd.xlane.f32.xlu0 %v427
        %v429 = vpop.xlane.xlu0 %428
        %v430 = vmul.f32 %v429, %v423
        %v431 = vadd.f32 %v430, 1e-06
        %v432 = vrsqrt.pop %v431
        %v433 = vmul.f32 %v432, %v431
        %v434 = vmul.f32 %v433, %v432
        %v435 = vmul.f32 0.5, %v434
        %v436 = vsub.f32 1.5, %v435
        %v437 = vmul.f32 %v432, %v436
        %vm438 = vweird.f32 %v431
        %vm439 = vweird.f32 %v432
        %vm440 = vmor %vm438, %vm439
        %v441 = vsel %vm440, %v432, %v437
        %v442 = vmul.f32 %v425, %v441
        %v444 = vperm.slane %v411, 0
        %v446 = vmul.f32 %v442, %v444
        %v448 = vperm.slane %v412, 0
        %v450 = vadd.f32 %v446, %v448
        %v451 = vpack.c.bf16 %v450, %v450
        %v452 = vld [vmem:[%s5] sm:$0x1]
        %v454 = vperm.slane %v452, 0
        %v456 = vadd.f32 %v410, %v454
        %457 = vst.msk [vmem:[#allocation2] sm:$0xff] %vm413, %v456
        %v458 = vld [vmem:[%s3] sm:$0xf]
        %v459 = vld [vmem:[%s3 + $0x4] sm:$0xf]
        %v460 = vld [vmem:[%s3 + $0x8] sm:$0xf]
        %v461 = vld [vmem:[%s3 + $0xc] sm:$0xf]
        %v466 = vunpack.c.l.b16 %v458
        %v467 = vunpack.c.l.b16 %v459
        %v468 = vunpack.c.l.b16 %v460
        %v469 = vunpack.c.l.b16 %v461
        %v470 = vpack.c.b16 %v467, %v466
        %v471 = vpack.c.b16 %v469, %v468
        %v475 = vsel %vm413, %v451, 0
        %477 = vmatpush.bf16.msra.mxu0 0
        %478 = vmatpush.bf16.msra.mxu0 0
        %479 = vmatpush.bf16.msra.mxu0 0
        %480 = vmatpush.bf16.msra.mxu0 0
        %481 = vmatpush.bf16.msra.mxu0 0
        %482 = vmatpush.bf16.msra.mxu0 0
        %483 = vmatpush.bf16.msra.mxu0 %v471
        %484 = vmatpush.bf16.msra.mxu0 %v470
        %485 = vmatmul.bf16.gmra.mxu0 %v475
        %v486 = vpop.f32.mrf.mxu0
        %v487 = vadd.f32 0.0, %v486
        %v488 = vpop.f32.mrf.mxu0
        %489 = vdwg.mxu0
        %v490 = vpack.c.bf16 %v487, %v487
        %v492 = vunpack.c.l.b16 %v490
        %v493 = vpack.c.b16 %v492, %v492
        %494 = vrot.lane.b32.xlu0 %v493, 96
        %v495 = vpop.permute.xlu0 %494
        %vm496 = vcmask 31744
        %v498 = vsel %vm496, %v490, 0
        %v501 = vsel %vm496, %v495, 0
        %503 = vmatpush.bf16.xpose.msra.mxu0 0
        %504 = vmatpush.bf16.xpose.msra.mxu0 0
        %505 = vmatpush.bf16.xpose.msra.mxu0 0
        %506 = vmatpush.bf16.xpose.msra.mxu0 0
        %507 = vmatpush.bf16.xpose.msra.mxu0 0
        %508 = vmatpush.bf16.xpose.msra.mxu0 0
        %509 = vmatpush.bf16.xpose.msra.mxu0 0
        %510 = vmatpush.bf16.xpose.msra.mxu0 %v501
        %511 = vmatmul.bf16.gmra.mxu0 %v498
        %v512 = vpop.f32.mrf.mxu0
        %v513 = vadd.f32 0.0, %v512
        %v514 = vpop.f32.mrf.mxu0
        %515 = vdwg.mxu0
        %v516 = vmul.f32 %v513, 0.5
        %vm517 = vcmask 64512
        %v518 = vsel %vm517, %v516, -inf
        %519 = vmax.xlane.f32.xlu0 %v518
        %v520 = vpop.xlane.xlu0 %519
        %v521 = vsub.f32 %v516, %v520
        %v522 = vmul.f32 %v521, 1.442695
        %v523 = vpow.pop %v522
        %v524 = vsel %vm517, %v523, 0.0
        %525 = vadd.xlane.f32.xlu0 %v524
        %v526 = vpop.xlane.xlu0 %525
        %v527 = vrcp.pop %v526
        %v528 = vmul.f32 %v523, %v527
        %v529 = vpack.c.bf16 %v528, %v528
        %530 = vrot.lane.b32.xlu0 %v493, 64
        %v531 = vpop.permute.xlu0 %530
        %v533 = vsel %vm517, %v529, 0
        %vm535 = vcmask 1043456
        %v537 = vsel %vm535, %v531, 0
        %539 = vmatpush.bf16.msra.mxu0 0
        %540 = vmatpush.bf16.msra.mxu0 0
        %541 = vmatpush.bf16.msra.mxu0 0
        %542 = vmatpush.bf16.msra.mxu0 0
        %543 = vmatpush.bf16.msra.mxu0 0
        %544 = vmatpush.bf16.msra.mxu0 0
        %545 = vmatpush.bf16.msra.mxu0 0
        %546 = vmatpush.bf16.msra.mxu0 %v537
        %547 = vmatmul.bf16.gmra.mxu0 %v533
        %v548 = vpop.f32.mrf.mxu0
        %v549 = vadd.f32 0.0, %v548
        %v550 = vpop.f32.mrf.mxu0
        %551 = vdwg.mxu0
        %552 = vrot.lane.b32.xlu0 %v493, 124
        %v553 = vpop.permute.xlu0 %552
        %554 = vrot.lane.b32.xlu0 %v493, 92
        %v555 = vpop.permute.xlu0 %554
        %v557 = vsel %vm496, %v553, 0
        %v560 = vsel %vm496, %v555, 0
        %562 = vmatpush.bf16.xpose.msra.mxu0 0
        %563 = vmatpush.bf16.xpose.msra.mxu0 0
        %564 = vmatpush.bf16.xpose.msra.mxu0 0
        %565 = vmatpush.bf16.xpose.msra.mxu0 0
        %566 = vmatpush.bf16.xpose.msra.mxu0 0
        %567 = vmatpush.bf16.xpose.msra.mxu0 0
        %568 = vmatpush.bf16.xpose.msra.mxu0 0
        %569 = vmatpush.bf16.xpose.msra.mxu0 %v560
        %570 = vmatmul.bf16.gmra.mxu0 %v557
        %v571 = vpop.f32.mrf.mxu0
        %v572 = vadd.f32 0.0, %v571
        %v573 = vpop.f32.mrf.mxu0
        %574 = vdwg.mxu0
        %v575 = vmul.f32 %v572, 0.5
        %v576 = vsel %vm517, %v575, -inf
        %577 = vmax.xlane.f32.xlu0 %v576
        %v578 = vpop.xlane.xlu0 %577
        %v579 = vsub.f32 %v575, %v578
        %v580 = vmul.f32 %v579, 1.442695
        %v581 = vpow.pop %v580
        %v582 = vsel %vm517, %v581, 0.0
        %583 = vadd.xlane.f32.xlu0 %v582
        %v584 = vpop.xlane.xlu0 %583
        %v585 = vrcp.pop %v584
        %v586 = vmul.f32 %v581, %v585
        %v587 = vpack.c.bf16 %v586, %v586
        %588 = vrot.lane.b32.xlu0 %v493, 60
        %v589 = vpop.permute.xlu0 %588
        %v591 = vsel %vm517, %v587, 0
        %v594 = vsel %vm535, %v589, 0
        %596 = vmatpush.bf16.msra.mxu0 0
        %597 = vmatpush.bf16.msra.mxu0 0
        %598 = vmatpush.bf16.msra.mxu0 0
        %599 = vmatpush.bf16.msra.mxu0 0
        %600 = vmatpush.bf16.msra.mxu0 0
        %601 = vmatpush.bf16.msra.mxu0 0
        %602 = vmatpush.bf16.msra.mxu0 0
        %603 = vmatpush.bf16.msra.mxu0 %v594
        %604 = vmatmul.bf16.gmra.mxu0 %v591
        %v605 = vpop.f32.mrf.mxu0
        %v606 = vadd.f32 0.0, %v605
        %v607 = vpop.f32.mrf.mxu0
        %608 = vdwg.mxu0
        %609 = vrot.lane.b32.xlu0 %v493, 120
        %v610 = vpop.permute.xlu0 %609
        %611 = vrot.lane.b32.xlu0 %v493, 88
        %v612 = vpop.permute.xlu0 %611
        %v614 = vsel %vm496, %v610, 0
        %v617 = vsel %vm496, %v612, 0
        %619 = vmatpush.bf16.xpose.msra.mxu0 0
        %620 = vmatpush.bf16.xpose.msra.mxu0 0
        %621 = vmatpush.bf16.xpose.msra.mxu0 0
        %622 = vmatpush.bf16.xpose.msra.mxu0 0
        %623 = vmatpush.bf16.xpose.msra.mxu0 0
        %624 = vmatpush.bf16.xpose.msra.mxu0 0
        %625 = vmatpush.bf16.xpose.msra.mxu0 0
        %626 = vmatpush.bf16.xpose.msra.mxu0 %v617
        %627 = vmatmul.bf16.gmra.mxu0 %v614
        %v628 = vpop.f32.mrf.mxu0
        %v629 = vadd.f32 0.0, %v628
        %v630 = vpop.f32.mrf.mxu0
        %631 = vdwg.mxu0
        %v632 = vmul.f32 %v629, 0.5
        %v633 = vsel %vm517, %v632, -inf
        %634 = vmax.xlane.f32.xlu0 %v633
        %v635 = vpop.xlane.xlu0 %634
        %v636 = vsub.f32 %v632, %v635
        %v637 = vmul.f32 %v636, 1.442695
        %v638 = vpow.pop %v637
        %v639 = vsel %vm517, %v638, 0.0
        %640 = vadd.xlane.f32.xlu0 %v639
        %v641 = vpop.xlane.xlu0 %640
        %v642 = vrcp.pop %v641
        %v643 = vmul.f32 %v638, %v642
        %v644 = vpack.c.bf16 %v643, %v643
        %645 = vrot.lane.b32.xlu0 %v493, 56
        %v646 = vpop.permute.xlu0 %645
        %v648 = vsel %vm517, %v644, 0
        %v651 = vsel %vm535, %v646, 0
        %653 = vmatpush.bf16.msra.mxu0 0
        %654 = vmatpush.bf16.msra.mxu0 0
        %655 = vmatpush.bf16.msra.mxu0 0
        %656 = vmatpush.bf16.msra.mxu0 0
        %657 = vmatpush.bf16.msra.mxu0 0
        %658 = vmatpush.bf16.msra.mxu0 0
        %659 = vmatpush.bf16.msra.mxu0 0
        %660 = vmatpush.bf16.msra.mxu0 %v651
        %661 = vmatmul.bf16.gmra.mxu0 %v648
        %v662 = vpop.f32.mrf.mxu0
        %v663 = vadd.f32 0.0, %v662
        %v664 = vpop.f32.mrf.mxu0
        %665 = vdwg.mxu0
        %666 = vrot.lane.b32.xlu0 %v493, 116
        %v667 = vpop.permute.xlu0 %666
        %668 = vrot.lane.b32.xlu0 %v493, 84
        %v669 = vpop.permute.xlu0 %668
        %v671 = vsel %vm496, %v667, 0
        %v674 = vsel %vm496, %v669, 0
        %676 = vmatpush.bf16.xpose.msra.mxu0 0
        %677 = vmatpush.bf16.xpose.msra.mxu0 0
        %678 = vmatpush.bf16.xpose.msra.mxu0 0
        %679 = vmatpush.bf16.xpose.msra.mxu0 0
        %680 = vmatpush.bf16.xpose.msra.mxu0 0
        %681 = vmatpush.bf16.xpose.msra.mxu0 0
        %682 = vmatpush.bf16.xpose.msra.mxu0 0
        %683 = vmatpush.bf16.xpose.msra.mxu0 %v674
        %684 = vmatmul.bf16.gmra.mxu0 %v671
        %v685 = vpop.f32.mrf.mxu0
        %v686 = vadd.f32 0.0, %v685
        %v687 = vpop.f32.mrf.mxu0
        %688 = vdwg.mxu0
        %v689 = vmul.f32 %v686, 0.5
        %v690 = vsel %vm517, %v689, -inf
        %691 = vmax.xlane.f32.xlu0 %v690
        %v692 = vpop.xlane.xlu0 %691
        %v693 = vsub.f32 %v689, %v692
        %v694 = vmul.f32 %v693, 1.442695
        %v695 = vpow.pop %v694
        %v696 = vsel %vm517, %v695, 0.0
        %697 = vadd.xlane.f32.xlu0 %v696
        %v698 = vpop.xlane.xlu0 %697
        %v699 = vrcp.pop %v698
        %v700 = vmul.f32 %v695, %v699
        %v701 = vpack.c.bf16 %v700, %v700
        %702 = vrot.lane.b32.xlu0 %v493, 52
        %v703 = vpop.permute.xlu0 %702
        %v705 = vsel %vm517, %v701, 0
        %v708 = vsel %vm535, %v703, 0
        %710 = vmatpush.bf16.msra.mxu0 0
        %711 = vmatpush.bf16.msra.mxu0 0
        %712 = vmatpush.bf16.msra.mxu0 0
        %713 = vmatpush.bf16.msra.mxu0 0
        %714 = vmatpush.bf16.msra.mxu0 0
        %715 = vmatpush.bf16.msra.mxu0 0
        %716 = vmatpush.bf16.msra.mxu0 0
        %717 = vmatpush.bf16.msra.mxu0 %v708
        %718 = vmatmul.bf16.gmra.mxu0 %v705
        %v719 = vpop.f32.mrf.mxu0
        %v720 = vadd.f32 0.0, %v719
        %v721 = vpop.f32.mrf.mxu0
        %722 = vdwg.mxu0
        %723 = vrot.lane.b32.xlu0 %v493, 112
        %v724 = vpop.permute.xlu0 %723
        %725 = vrot.lane.b32.xlu0 %v493, 80
        %v726 = vpop.permute.xlu0 %725
        %v728 = vsel %vm496, %v724, 0
        %v731 = vsel %vm496, %v726, 0
        %733 = vmatpush.bf16.xpose.msra.mxu0 0
        %734 = vmatpush.bf16.xpose.msra.mxu0 0
        %735 = vmatpush.bf16.xpose.msra.mxu0 0
        %736 = vmatpush.bf16.xpose.msra.mxu0 0
        %737 = vmatpush.bf16.xpose.msra.mxu0 0
        %738 = vmatpush.bf16.xpose.msra.mxu0 0
        %739 = vmatpush.bf16.xpose.msra.mxu0 0
        %740 = vmatpush.bf16.xpose.msra.mxu0 %v731
        %741 = vmatmul.bf16.gmra.mxu0 %v728
        %v742 = vpop.f32.mrf.mxu0
        %v743 = vadd.f32 0.0, %v742
        %v744 = vpop.f32.mrf.mxu0
        %745 = vdwg.mxu0
        %v746 = vmul.f32 %v743, 0.5
        %v747 = vsel %vm517, %v746, -inf
        %748 = vmax.xlane.f32.xlu0 %v747
        %v749 = vpop.xlane.xlu0 %748
        %v750 = vsub.f32 %v746, %v749
        %v751 = vmul.f32 %v750, 1.442695
        %v752 = vpow.pop %v751
        %v753 = vsel %vm517, %v752, 0.0
        %754 = vadd.xlane.f32.xlu0 %v753
        %v755 = vpop.xlane.xlu0 %754
        %v756 = vrcp.pop %v755
        %v757 = vmul.f32 %v752, %v756
        %v758 = vpack.c.bf16 %v757, %v757
        %759 = vrot.lane.b32.xlu0 %v493, 48
        %v760 = vpop.permute.xlu0 %759
        %v762 = vsel %vm517, %v758, 0
        %v765 = vsel %vm535, %v760, 0
        %767 = vmatpush.bf16.msra.mxu0 0
        %768 = vmatpush.bf16.msra.mxu0 0
        %769 = vmatpush.bf16.msra.mxu0 0
        %770 = vmatpush.bf16.msra.mxu0 0
        %771 = vmatpush.bf16.msra.mxu0 0
        %772 = vmatpush.bf16.msra.mxu0 0
        %773 = vmatpush.bf16.msra.mxu0 0
        %774 = vmatpush.bf16.msra.mxu0 %v765
        %775 = vmatmul.bf16.gmra.mxu0 %v762
        %v776 = vpop.f32.mrf.mxu0
        %v777 = vadd.f32 0.0, %v776
        %v778 = vpop.f32.mrf.mxu0
        %779 = vdwg.mxu0
        %780 = vrot.lane.b32.xlu0 %v493, 108
        %v781 = vpop.permute.xlu0 %780
        %782 = vrot.lane.b32.xlu0 %v493, 76
        %v783 = vpop.permute.xlu0 %782
        %v785 = vsel %vm496, %v781, 0
        %v788 = vsel %vm496, %v783, 0
        %790 = vmatpush.bf16.xpose.msra.mxu0 0
        %791 = vmatpush.bf16.xpose.msra.mxu0 0
        %792 = vmatpush.bf16.xpose.msra.mxu0 0
        %793 = vmatpush.bf16.xpose.msra.mxu0 0
        %794 = vmatpush.bf16.xpose.msra.mxu0 0
        %795 = vmatpush.bf16.xpose.msra.mxu0 0
        %796 = vmatpush.bf16.xpose.msra.mxu0 0
        %797 = vmatpush.bf16.xpose.msra.mxu0 %v788
        %798 = vmatmul.bf16.gmra.mxu0 %v785
        %v799 = vpop.f32.mrf.mxu0
        %v800 = vadd.f32 0.0, %v799
        %v801 = vpop.f32.mrf.mxu0
        %802 = vdwg.mxu0
        %v803 = vmul.f32 %v800, 0.5
        %v804 = vsel %vm517, %v803, -inf
        %805 = vmax.xlane.f32.xlu0 %v804
        %v806 = vpop.xlane.xlu0 %805
        %v807 = vsub.f32 %v803, %v806
        %v808 = vmul.f32 %v807, 1.442695
        %v809 = vpow.pop %v808
        %v810 = vsel %vm517, %v809, 0.0
        %811 = vadd.xlane.f32.xlu0 %v810
        %v812 = vpop.xlane.xlu0 %811
        %v813 = vrcp.pop %v812
        %v814 = vmul.f32 %v809, %v813
        %v815 = vpack.c.bf16 %v814, %v814
        %816 = vrot.lane.b32.xlu0 %v493, 44
        %v817 = vpop.permute.xlu0 %816
        %v819 = vsel %vm517, %v815, 0
        %v822 = vsel %vm535, %v817, 0
        %824 = vmatpush.bf16.msra.mxu0 0
        %825 = vmatpush.bf16.msra.mxu0 0
        %826 = vmatpush.bf16.msra.mxu0 0
        %827 = vmatpush.bf16.msra.mxu0 0
        %828 = vmatpush.bf16.msra.mxu0 0
        %829 = vmatpush.bf16.msra.mxu0 0
        %830 = vmatpush.bf16.msra.mxu0 0
        %831 = vmatpush.bf16.msra.mxu0 %v822
        %832 = vmatmul.bf16.gmra.mxu0 %v819
        %v833 = vpop.f32.mrf.mxu0
        %v834 = vadd.f32 0.0, %v833
        %v835 = vpop.f32.mrf.mxu0
        %836 = vdwg.mxu0
        %837 = vrot.lane.b32.xlu0 %v493, 104
        %v838 = vpop.permute.xlu0 %837
        %839 = vrot.lane.b32.xlu0 %v493, 72
        %v840 = vpop.permute.xlu0 %839
        %v842 = vsel %vm496, %v838, 0
        %v845 = vsel %vm496, %v840, 0
        %847 = vmatpush.bf16.xpose.msra.mxu0 0
        %848 = vmatpush.bf16.xpose.msra.mxu0 0
        %849 = vmatpush.bf16.xpose.msra.mxu0 0
        %850 = vmatpush.bf16.xpose.msra.mxu0 0
        %851 = vmatpush.bf16.xpose.msra.mxu0 0
        %852 = vmatpush.bf16.xpose.msra.mxu0 0
        %853 = vmatpush.bf16.xpose.msra.mxu0 0
        %854 = vmatpush.bf16.xpose.msra.mxu0 %v845
        %855 = vmatmul.bf16.gmra.mxu0 %v842
        %v856 = vpop.f32.mrf.mxu0
        %v857 = vadd.f32 0.0, %v856
        %v858 = vpop.f32.mrf.mxu0
        %859 = vdwg.mxu0
        %v860 = vmul.f32 %v857, 0.5
        %v861 = vsel %vm517, %v860, -inf
        %862 = vmax.xlane.f32.xlu0 %v861
        %v863 = vpop.xlane.xlu0 %862
        %v864 = vsub.f32 %v860, %v863
        %v865 = vmul.f32 %v864, 1.442695
        %v866 = vpow.pop %v865
        %v867 = vsel %vm517, %v866, 0.0
        %868 = vadd.xlane.f32.xlu0 %v867
        %v869 = vpop.xlane.xlu0 %868
        %v870 = vrcp.pop %v869
        %v871 = vmul.f32 %v866, %v870
        %v872 = vpack.c.bf16 %v871, %v871
        %873 = vrot.lane.b32.xlu0 %v493, 40
        %v874 = vpop.permute.xlu0 %873
        %v876 = vsel %vm517, %v872, 0
        %v879 = vsel %vm535, %v874, 0
        %881 = vmatpush.bf16.msra.mxu0 0
        %882 = vmatpush.bf16.msra.mxu0 0
        %883 = vmatpush.bf16.msra.mxu0 0
        %884 = vmatpush.bf16.msra.mxu0 0
        %885 = vmatpush.bf16.msra.mxu0 0
        %886 = vmatpush.bf16.msra.mxu0 0
        %887 = vmatpush.bf16.msra.mxu0 0
        %888 = vmatpush.bf16.msra.mxu0 %v879
        %889 = vmatmul.bf16.gmra.mxu0 %v876
        %v890 = vpop.f32.mrf.mxu0
        %v891 = vadd.f32 0.0, %v890
        %v892 = vpop.f32.mrf.mxu0
        %893 = vdwg.mxu0
        %894 = vrot.lane.b32.xlu0 %v493, 100
        %v895 = vpop.permute.xlu0 %894
        %896 = vrot.lane.b32.xlu0 %v493, 68
        %v897 = vpop.permute.xlu0 %896
        %v899 = vsel %vm496, %v895, 0
        %v902 = vsel %vm496, %v897, 0
        %904 = vmatpush.bf16.xpose.msra.mxu0 0
        %905 = vmatpush.bf16.xpose.msra.mxu0 0
        %906 = vmatpush.bf16.xpose.msra.mxu0 0
        %907 = vmatpush.bf16.xpose.msra.mxu0 0
        %908 = vmatpush.bf16.xpose.msra.mxu0 0
        %909 = vmatpush.bf16.xpose.msra.mxu0 0
        %910 = vmatpush.bf16.xpose.msra.mxu0 0
        %911 = vmatpush.bf16.xpose.msra.mxu0 %v902
        %912 = vmatmul.bf16.gmra.mxu0 %v899
        %v913 = vpop.f32.mrf.mxu0
        %v914 = vadd.f32 0.0, %v913
        %v915 = vpop.f32.mrf.mxu0
        %916 = vdwg.mxu0
        %v917 = vmul.f32 %v914, 0.5
        %v918 = vsel %vm517, %v917, -inf
        %919 = vmax.xlane.f32.xlu0 %v918
        %v920 = vpop.xlane.xlu0 %919
        %v921 = vsub.f32 %v917, %v920
        %v922 = vmul.f32 %v921, 1.442695
        %v923 = vpow.pop %v922
        %v924 = vsel %vm517, %v923, 0.0
        %925 = vadd.xlane.f32.xlu0 %v924
        %v926 = vpop.xlane.xlu0 %925
        %v927 = vrcp.pop %v926
        %v928 = vmul.f32 %v923, %v927
        %v929 = vpack.c.bf16 %v928, %v928
        %930 = vrot.lane.b32.xlu0 %v493, 36
        %v931 = vpop.permute.xlu0 %930
        %v933 = vsel %vm517, %v929, 0
        %v936 = vsel %vm535, %v931, 0
        %938 = vmatpush.bf16.msra.mxu0 0
        %939 = vmatpush.bf16.msra.mxu0 0
        %940 = vmatpush.bf16.msra.mxu0 0
        %941 = vmatpush.bf16.msra.mxu0 0
        %942 = vmatpush.bf16.msra.mxu0 0
        %943 = vmatpush.bf16.msra.mxu0 0
        %944 = vmatpush.bf16.msra.mxu0 0
        %945 = vmatpush.bf16.msra.mxu0 %v936
        %946 = vmatmul.bf16.gmra.mxu0 %v933
        %v947 = vpop.f32.mrf.mxu0
        %v948 = vadd.f32 0.0, %v947
        %v949 = vpop.f32.mrf.mxu0
        %950 = vdwg.mxu0
        %952 = vrot.lane.b32.xlu0 %v606, 4
        %v953 = vpop.permute.xlu0 %952
        %956 = vrot.lane.b32.xlu0 %v663, 8
        %v957 = vpop.permute.xlu0 %956
        %960 = vrot.lane.b32.xlu0 %v720, 12
        %v961 = vpop.permute.xlu0 %960
        %964 = vrot.lane.b32.xlu0 %v777, 16
        %v965 = vpop.permute.xlu0 %964
        %968 = vrot.lane.b32.xlu0 %v834, 20
        %v969 = vpop.permute.xlu0 %968
        %972 = vrot.lane.b32.xlu0 %v891, 24
        %v973 = vpop.permute.xlu0 %972
        %976 = vrot.lane.b32.xlu0 %v948, 28
        %v977 = vpop.permute.xlu0 %976
        %v979 = vsel %vm496, %v549, %v953
        %v980 = vsel %vm517, %v979, %v957
        %vm981 = vcmask 97280
        %v982 = vsel %vm981, %v980, %v961
        %vm983 = vcmask 130048
        %v984 = vsel %vm983, %v982, %v965
        %vm985 = vcmask 162816
        %v986 = vsel %vm985, %v984, %v969
        %vm987 = vcmask 195584
        %v988 = vsel %vm987, %v986, %v973
        %vm989 = vcmask 228352
        %v990 = vsel %vm989, %v988, %v977
        %v991 = vpack.c.bf16 %v990, %v990
        %v992 = vld [vmem:[#allocation2] sm:$0xff]
        %v993 = vld [vmem:[%s4] sm:$0xf]
        %v994 = vld [vmem:[%s4 + $0x4] sm:$0xf]
        %v995 = vld [vmem:[%s4 + $0x8] sm:$0xf]
        %v996 = vld [vmem:[%s4 + $0xc] sm:$0xf]
        %v1001 = vunpack.c.l.b16 %v993
        %v1002 = vunpack.c.l.b16 %v994
        %v1003 = vunpack.c.l.b16 %v995
        %v1004 = vunpack.c.l.b16 %v996
        %v1005 = vpack.c.b16 %v1002, %v1001
        %v1006 = vpack.c.b16 %v1004, %v1003
        %v1010 = vsel %vm413, %v991, 0
        %1012 = vmatpush.bf16.msra.mxu0 0
        %1013 = vmatpush.bf16.msra.mxu0 0
        %1014 = vmatpush.bf16.msra.mxu0 0
        %1015 = vmatpush.bf16.msra.mxu0 0
        %1016 = vmatpush.bf16.msra.mxu0 0
        %1017 = vmatpush.bf16.msra.mxu0 0
        %1018 = vmatpush.bf16.msra.mxu0 %v1006
        %1019 = vmatpush.bf16.msra.mxu0 %v1005
        %1020 = vmatmul.bf16.gmra.mxu0 %v1010
        %v1021 = vpop.f32.mrf.mxu0
        %v1022 = vadd.f32 0.0, %v1021
        %v1023 = vpop.f32.mrf.mxu0
        %1024 = vdwg.mxu0
        %v1025 = vadd.f32 %v992, %v1022
        %1026 = vst.msk [vmem:[#allocation2] sm:$0xff] %vm413, %v1025
        %v1027 = vld [vmem:[#allocation2] sm:$0xff]
        %v1028 = vld [vmem:[%s6] sm:$0x1]
        %v1029 = vld [vmem:[%s7] sm:$0x1]
        %v1030 = vsel %vm413, %v1027, 0.0
        %1031 = vadd.xlane.f32.xlu0 %v1030
        %v1032 = vpop.xlane.xlu0 %1031
        %v1033 = vmul.f32 %v1032, %v423
        %v1034 = vsub.f32 %v1027, %v1033
        %v1035 = vmul.f32 %v1034, %v1034
        %v1036 = vsel %vm413, %v1035, 0.0
        %1037 = vadd.xlane.f32.xlu0 %v1036
        %v1038 = vpop.xlane.xlu0 %1037
        %v1039 = vmul.f32 %v1038, %v423
        %v1040 = vadd.f32 %v1039, 1e-06
        %v1041 = vrsqrt.pop %v1040
        %v1042 = vmul.f32 %v1041, %v1040
        %v1043 = vmul.f32 %v1042, %v1041
        %v1044 = vmul.f32 0.5, %v1043
        %v1045 = vsub.f32 1.5, %v1044
        %v1046 = vmul.f32 %v1041, %v1045
        %vm1047 = vweird.f32 %v1040
        %vm1048 = vweird.f32 %v1041
        %vm1049 = vmor %vm1047, %vm1048
        %v1050 = vsel %vm1049, %v1041, %v1046
        %v1051 = vmul.f32 %v1034, %v1050
        %v1053 = vperm.slane %v1028, 0
        %v1055 = vmul.f32 %v1051, %v1053
        %v1057 = vperm.slane %v1029, 0
        %v1059 = vadd.f32 %v1055, %v1057
        %v1060 = vpack.c.bf16 %v1059, %v1059
        %v1061 = vld [vmem:[%s8] sm:$0xf]
        %v1062 = vld [vmem:[%s8 + $0x4] sm:$0xf]
        %v1063 = vld [vmem:[%s8 + $0x8] sm:$0xf]
        %v1064 = vld [vmem:[%s8 + $0xc] sm:$0xf]
        %v1065 = vld [vmem:[%s9] sm:$0x1]
        %v1067 = vperm.slane %v1065, 0
        %v1073 = vunpack.c.l.b16 %v1061
        %v1074 = vunpack.c.l.b16 %v1062
        %v1075 = vunpack.c.l.b16 %v1063
        %v1076 = vunpack.c.l.b16 %v1064
        %v1077 = vpack.c.b16 %v1074, %v1073
        %v1078 = vpack.c.b16 %v1076, %v1075
        %v1082 = vsel %vm413, %v1060, 0
        %1084 = vmatpush.bf16.msra.mxu0 0
        %1085 = vmatpush.bf16.msra.mxu0 0
        %1086 = vmatpush.bf16.msra.mxu0 0
        %1087 = vmatpush.bf16.msra.mxu0 0
        %1088 = vmatpush.bf16.msra.mxu0 0
        %1089 = vmatpush.bf16.msra.mxu0 0
        %1090 = vmatpush.bf16.msra.mxu0 %v1078
        %1091 = vmatpush.bf16.msra.mxu0 %v1077
        %1092 = vmatmul.bf16.gmra.mxu0 %v1082
        %v1093 = vpop.f32.mrf.mxu0
        %v1094 = vadd.f32 %v1067, %v1093
        %v1095 = vpop.f32.mrf.mxu0
        %1096 = vdwg.mxu0
        %v1097 = vmul.f32 %v1094, 0.5
        %v1098 = vmul.f32 %v1094, 0.70710677
        %v1099 = vand.u32 2147483647, %v1098
        %v1100 = vmul.f32 %v1099, 0.3275911
        %v1101 = vadd.f32 %v1100, 1.0
        %v1102 = vrcp.pop %v1101
        %v1103 = vmul.f32 %v1102, 1.0614054
        %v1104 = vadd.f32 %v1103, -1.4531521
        %v1105 = vmul.f32 %v1104, %v1102
        %v1106 = vadd.f32 %v1105, 1.4214138
        %v1107 = vmul.f32 %v1106, %v1102
        %v1108 = vadd.f32 %v1107, -0.28449672
        %v1109 = vmul.f32 %v1108, %v1102
        %v1110 = vadd.f32 %v1109, 0.2548296
        %v1111 = vmul.f32 %v1110, %v1102
        %v1112 = vsub.f32 0.0, %v1099
        %v1113 = vmul.f32 %v1112, %v1099
        %v1114 = vmul.f32 %v1113, 1.442695
        %v1115 = vpow.pop %v1114
        %v1116 = vmul.f32 %v1111, %v1115
        %v1117 = vsub.f32 1.0, %v1116
        %vm1118 = vcmp.ge.f32.partialorder %v1098, 0.0
        %v1119 = vsub.f32 0.0, %v1117
        %v1120 = vsel %vm1118, %v1117, %v1119
        %v1121 = vadd.f32 %v1120, 1.0
        %v1122 = vmul.f32 %v1097, %v1121
        %v1123 = vpack.c.bf16 %v1122, %v1122
        %v1124 = vld [vmem:[%s10] sm:$0xf]
        %v1125 = vld [vmem:[%s10 + $0x4] sm:$0xf]
        %v1126 = vld [vmem:[%s10 + $0x8] sm:$0xf]
        %v1127 = vld [vmem:[%s10 + $0xc] sm:$0xf]
        %v1128 = vld [vmem:[%s10 + $0x10] sm:$0xf]
        %v1129 = vld [vmem:[%s10 + $0x14] sm:$0xf]
        %v1130 = vld [vmem:[%s10 + $0x18] sm:$0xf]
        %v1131 = vld [vmem:[%s10 + $0x1c] sm:$0xf]
        %v1132 = vld [vmem:[%s10 + $0x20] sm:$0xf]
        %v1133 = vld [vmem:[%s10 + $0x24] sm:$0xf]
        %v1134 = vld [vmem:[%s10 + $0x28] sm:$0xf]
        %v1135 = vld [vmem:[%s10 + $0x2c] sm:$0xf]
        %v1136 = vld [vmem:[%s10 + $0x30] sm:$0xf]
        %v1137 = vld [vmem:[%s10 + $0x34] sm:$0xf]
        %v1138 = vld [vmem:[%s10 + $0x38] sm:$0xf]
        %v1139 = vld [vmem:[%s10 + $0x3c] sm:$0xf]
        %v1140 = vld [vmem:[%s11] sm:$0x1]
        %v1142 = vperm.slane %v1140, 0
        %v1160 = vunpack.c.l.b16 %v1124
        %v1161 = vunpack.c.l.b16 %v1125
        %v1162 = vunpack.c.l.b16 %v1126
        %v1163 = vunpack.c.l.b16 %v1127
        %v1164 = vunpack.c.l.b16 %v1128
        %v1165 = vunpack.c.l.b16 %v1129
        %v1166 = vunpack.c.l.b16 %v1130
        %v1167 = vunpack.c.l.b16 %v1131
        %v1168 = vunpack.c.l.b16 %v1132
        %v1169 = vunpack.c.l.b16 %v1133
        %v1170 = vunpack.c.l.b16 %v1134
        %v1171 = vunpack.c.l.b16 %v1135
        %v1172 = vunpack.c.l.b16 %v1136
        %v1173 = vunpack.c.l.b16 %v1137
        %v1174 = vunpack.c.l.b16 %v1138
        %v1175 = vunpack.c.l.b16 %v1139
        %v1176 = vpack.c.b16 %v1161, %v1160
        %v1177 = vpack.c.b16 %v1163, %v1162
        %v1178 = vpack.c.b16 %v1165, %v1164
        %v1179 = vpack.c.b16 %v1167, %v1166
        %v1180 = vpack.c.b16 %v1169, %v1168
        %v1181 = vpack.c.b16 %v1171, %v1170
        %v1182 = vpack.c.b16 %v1173, %v1172
        %v1183 = vpack.c.b16 %v1175, %v1174
        %1192 = vmatpush.bf16.msra.mxu0 %v1183
        %1193 = vmatpush.bf16.msra.mxu0 %v1182
        %1194 = vmatpush.bf16.msra.mxu0 %v1181
        %1195 = vmatpush.bf16.msra.mxu0 %v1180
        %1196 = vmatpush.bf16.msra.mxu0 %v1179
        %1197 = vmatpush.bf16.msra.mxu0 %v1178
        %1198 = vmatpush.bf16.msra.mxu0 %v1177
        %1199 = vmatpush.bf16.msra.mxu0 %v1176
        %1200 = vmatmul.bf16.gmra.mxu0 %v1123
        %v1201 = vpop.f32.mrf.mxu0
        %v1202 = vadd.f32 %v1142, %v1201
        %v1203 = vpop.f32.mrf.mxu0
        %1204 = vdwg.mxu0
        %v1205 = vadd.f32 %v1027, %v1202
        %1206 = vst.msk [vmem:[%s404] sm:$0xff] %vm413, %v1205
        %s1207 = sand.u32 %s291, 1
        %s1208 = scalar_lea.sflag [#allocation4], %s1207
        %s1209 = sand.u32 %s291, 1
        %s1210 = smul.addr %s1209, 8
        %s1211 = scalar_lea.vmem [#allocation3], %s1210
        // Predicated region
        $region69: #{tpu_custom_call.1} parent=67 // pred_check
          %p1212 = pneg %p301
        $region70: #{tpu_custom_call.1} parent=67 // pred_check_branch
          %1214 = sbr.rel (%p1212) target = $region72
        $region71: #{tpu_custom_call.1} parent=67 // pred_region
          %1216 = vsyncadd %s1208, 0
          %s1217 = smul.addr %s26, 8
          %s1218 = scalar_lea.hbm %s12, %s1217
          %s1220 = sshll.u32 %s1211, 4
          %s1221 = int_to_ptr.vmem [resolvable:$true] %s1220
          %s1222 = sshll.u32 %s1218, 4
          %s1223 = int_to_ptr.hbm [resolvable:$true] %s1222
          %1225 = dma.vmem_to_hbm [thread:$0]  %s1221, 128, %s1223, %s1208
        $region72: #{tpu_custom_call.1} parent=67 // pred_fallthru
          _
      $region68: #{tpu_custom_call.1} parent=5 // pred_fallthru
        _
      %p1226 = scmp.le.s32.totalorder 2, %s21
      // Predicated region
      $region73: #{tpu_custom_call.1} parent=5 // pred_check
        %p1227 = pneg %p1226
      $region74: #{tpu_custom_call.1} parent=5 // pred_check_branch
        %1229 = sbr.rel (%p1227) target = $region76
      $region75: #{tpu_custom_call.1} parent=5 // pred_region
        %s1230 = ssub.s32 %s21, 2
        // Predicated region
        $region77: #{tpu_custom_call.1} parent=75 // pred_check
          %p1231 = pneg %p307
        $region78: #{tpu_custom_call.1} parent=75 // pred_check_branch
          %1233 = sbr.rel (%p1231) target = $region80
        $region79: #{tpu_custom_call.1} parent=75 // pred_region
          %s1234 = sand.u32 %s292, 1
          %s1235 = scalar_lea.sflag [#allocation4], %s1234
          %s1236 = sand.u32 %s292, 1
          %s1237 = smul.addr %s1236, 8
          %s1238 = scalar_lea.vmem [#allocation3], %s1237
          %1240 = dma.done %s1235, 128
        $region80: #{tpu_custom_call.1} parent=75 // pred_fallthru
          _
      $region76: #{tpu_custom_call.1} parent=5 // pred_fallthru
        _
    $region6: #{tpu_custom_call.1} parent=1 // loop_footer
      %s25 = sadd.s32 1, %s21
    $region7: #{tpu_custom_call.1} parent=1 // loop_footer_branch
      %20 = sbr.rel target = $region3
    $region8: #{tpu_custom_call.1} parent=1 // loop_exit
      _
    %1241 = vsyncpa [#allocation4], 1
    %s1242 = scalar_lea.sflag [#allocation4], 1
    %1243 = vsyncpa %s1242, 1

</llo_original>
